<compile_context>
chip_gen: v5e
topology: v5e:2x2
jax: 0.10.0
libtpu: 0.0.40
codegen_flags: <defaults>
</compile_context>

<pallas_src>
import jax
import jax.numpy as jnp
from jax.experimental import pallas as pl
from jax.experimental.pallas import tpu as pltpu


def _round_up(n, m):
    return (n + m - 1) // m * m


def gru_kernel(xproj_ref, h0_ref, uzr_ref, uh_ref, out_ref, hn_ref):
    """One grid step = one chunk of timesteps, all layers (batched).

    xproj_ref: (T_CHUNK, L, Bp, 3*Hp)  hoisted x-projections (+biases), gates z|r|h
    h0_ref   : (L, Bp, Hp)             initial hidden state
    uzr_ref  : (L, Hp, 2*Hp)           [Uz.T | Ur.T] fused recurrent weights
    uh_ref   : (L, Hp, Hp)             Uh.T
    out_ref  : (T_CHUNK, Bp, Hp)       per-timestep output (last layer's h)
    hn_ref   : (L, Bp, Hp)             grid-invariant block -> VMEM-resident carry
    """
    num_layers = hn_ref.shape[0]
    t_chunk = out_ref.shape[0]
    hp = uh_ref.shape[-1]
    mm_dtype = uh_ref.dtype  # matmul operand dtype (f32, or bf16 if requested)

    # First grid step: seed the resident carry from h_0.
    @pl.when(pl.program_id(0) == 0)
    def _():
        hn_ref[...] = h0_ref[...]

    # Pull the carried state (all layers) into vregs once per chunk.
    h = hn_ref[...]                                    # (L, Bp, Hp) f32

    for i in range(t_chunk):                           # static unroll over the chunk
        gx = xproj_ref[i]                              # (L, Bp, 3*Hp), biases folded in

        # Fused z/r gates for all layers at once:
        # batched (L, Bp, Hp) @ (L, Hp, 2*Hp) + one wide sigmoid.
        zr = jax.nn.sigmoid(
            gx[:, :, : 2 * hp]
            + jnp.einsum('lbh,lho->lbo', h.astype(mm_dtype), uzr_ref[...],
                         preferred_element_type=jnp.float32))
        z = zr[:, :, :hp]
        r = zr[:, :, hp:]

        # Candidate state: (r * h_prev) @ Uh.T (matches `r * h @ U.T` precedence).
        hh = jnp.tanh(
            gx[:, :, 2 * hp:]
            + jnp.einsum('lbh,lho->lbo', (r * h).astype(mm_dtype), uh_ref[...],
                         preferred_element_type=jnp.float32))

        h = (1.0 - z) * h + z * hh
        out_ref[i] = h[num_layers - 1]                 # last layer's state

    # Write the carry back once per chunk (yields h_n after the last chunk).
    hn_ref[...] = h


def gru_forward(x, h0, params, *, mxu_dtype=jnp.float32):
    """x: (seq, batch, input_size) f32; h0: (num_layers, batch, hidden) f32."""
    seq, batch, input_size = x.shape
    num_layers, _, hidden = h0.shape
    f32 = jnp.float32
    highest = jax.lax.Precision.HIGHEST

    bp = _round_up(batch, 8)        # sublane-aligned batch
    hp = _round_up(hidden, 128)     # lane-aligned hidden

    # ---- Hoisted input projections: one big GEMM over every timestep/layer. ----
    # Gate layout along the last dim: [0:hp]->z, [hp:2hp]->r, [2hp:3hp]->h.
    w_full = jnp.zeros((num_layers, input_size, 3 * hp), f32)
    w_full = w_full.at[:, :, 0:hidden].set(jnp.transpose(params['Wz'], (0, 2, 1)))
    w_full = w_full.at[:, :, hp:hp + hidden].set(jnp.transpose(params['Wr'], (0, 2, 1)))
    w_full = w_full.at[:, :, 2 * hp:2 * hp + hidden].set(jnp.transpose(params['Wh'], (0, 2, 1)))
    b_full = jnp.zeros((num_layers, 3 * hp), f32)
    b_full = b_full.at[:, 0:hidden].set(params['bz'])
    b_full = b_full.at[:, hp:hp + hidden].set(params['br'])
    b_full = b_full.at[:, 2 * hp:2 * hp + hidden].set(params['bh'])

    xproj = jnp.einsum('tbi,lio->tlbo', x, w_full, precision=highest)
    xproj = xproj + b_full[None, :, None, :]
    xproj = jnp.pad(xproj, ((0, 0), (0, 0), (0, bp - batch), (0, 0)))  # (seq,L,Bp,3Hp)

    # ---- Fused, padded, pre-transposed recurrent weights (zero-padded lanes
    # keep the padded hidden columns / batch rows exactly zero through the
    # recurrence). ----
    uzr = jnp.zeros((num_layers, hp, 2 * hp), f32)
    uzr = uzr.at[:, :hidden, 0:hidden].set(jnp.transpose(params['Uz'], (0, 2, 1)))
    uzr = uzr.at[:, :hidden, hp:hp + hidden].set(jnp.transpose(params['Ur'], (0, 2, 1)))
    uh = jnp.zeros((num_layers, hp, hp), f32)
    uh = uh.at[:, :hidden, :hidden].set(jnp.transpose(params['Uh'], (0, 2, 1)))
    uzr = uzr.astype(mxu_dtype)
    uh = uh.astype(mxu_dtype)

    h0_pad = jnp.zeros((num_layers, bp, hp), f32).at[:, :batch, :hidden].set(h0)

    # ---- Chunked sequential grid over time. ----
    t_chunk = next(c for c in (8, 4, 2, 1) if seq % c == 0)
    num_chunks = seq // t_chunk

    grid_spec = pltpu.PrefetchScalarGridSpec(
        num_scalar_prefetch=0,
        grid=(num_chunks,),
        in_specs=[
            pl.BlockSpec((t_chunk, num_layers, bp, 3 * hp), lambda s: (s, 0, 0, 0)),
            pl.BlockSpec((num_layers, bp, hp), lambda s: (0, 0, 0)),       # h0
            pl.BlockSpec((num_layers, hp, 2 * hp), lambda s: (0, 0, 0)),   # Uzr
            pl.BlockSpec((num_layers, hp, hp), lambda s: (0, 0, 0)),       # Uh
        ],
        out_specs=[
            pl.BlockSpec((t_chunk, bp, hp), lambda s: (s, 0, 0)),          # output
            pl.BlockSpec((num_layers, bp, hp), lambda s: (0, 0, 0)),       # h_n (carry)
        ],
    )

    out_shapes = (
        jax.ShapeDtypeStruct((seq, bp, hp), f32),
        jax.ShapeDtypeStruct((num_layers, bp, hp), f32),
    )

    # Keep resident weights + pipelined blocks under an explicit scoped-VMEM
    # budget (weights are reused every step and should stay VMEM-resident).
    resident = (uzr.size * uzr.dtype.itemsize + uh.size * uh.dtype.itemsize
                + 4 * num_layers * bp * hp * 4)
    pipelined = 2 * (t_chunk * num_layers * bp * 3 * hp + t_chunk * bp * hp) * 4
    vmem_limit = int(min(64 * 2**20, max(32 * 2**20, 2 * (resident + pipelined))))

    out_pad, hn_pad = pl.pallas_call(
        gru_kernel,
        grid_spec=grid_spec,
        out_shape=out_shapes,
        compiler_params=pltpu.CompilerParams(
            dimension_semantics=("arbitrary",),     # true sequential recurrence
            vmem_limit_bytes=vmem_limit),
    )(xproj, h0_pad, uzr, uh)

    return out_pad[:, :batch, :hidden], hn_pad[:, :batch, :hidden]


def gru_reference(x, h0, params):
    """Pure-JAX reference matching the PyTorch module exactly (f32, HIGHEST)."""
    P = jax.lax.Precision.HIGHEST
    seq = x.shape[0]
    num_layers = h0.shape[0]
    h = [h0[l] for l in range(num_layers)]
    outs = []
    for t in range(seq):
        for layer in range(num_layers):
            hprev = h[layer]
            z = jax.nn.sigmoid(jnp.dot(x[t], params['Wz'][layer].T, precision=P)
                               + jnp.dot(hprev, params['Uz'][layer].T, precision=P)
                               + params['bz'][layer])
            r = jax.nn.sigmoid(jnp.dot(x[t], params['Wr'][layer].T, precision=P)
                               + jnp.dot(hprev, params['Ur'][layer].T, precision=P)
                               + params['br'][layer])
            hh = jnp.tanh(jnp.dot(x[t], params['Wh'][layer].T, precision=P)
                          + jnp.dot(r * hprev, params['Uh'][layer].T, precision=P)
                          + params['bh'][layer])
            h[layer] = (1.0 - z) * hprev + z * hh
        outs.append(h[-1])
    return jnp.stack(outs, axis=0), jnp.stack(h, axis=0)


def init_gru_params(key, input_size, hidden_size, num_layers):
    """uniform(-sqrt(1/hidden), sqrt(1/hidden)), like the PyTorch module."""
    bound = (1.0 / hidden_size) ** 0.5
    names_shapes = {
        'Wz': (num_layers, hidden_size, input_size),
        'Wr': (num_layers, hidden_size, input_size),
        'Wh': (num_layers, hidden_size, input_size),
        'Uz': (num_layers, hidden_size, hidden_size),
        'Ur': (num_layers, hidden_size, hidden_size),
        'Uh': (num_layers, hidden_size, hidden_size),
        'bz': (num_layers, hidden_size),
        'br': (num_layers, hidden_size),
        'bh': (num_layers, hidden_size),
    }
    params = {}
    keys = jax.random.split(key, len(names_shapes))
    for k, (name, shape) in zip(keys, names_shapes.items()):
        params[name] = jax.random.uniform(
            k, shape, dtype=jnp.float32, minval=-bound, maxval=bound)
    return params


if __name__ == "__main__":
    seq, batch, input_size, hidden, num_layers = 8, 2, 16, 32, 2

    key = jax.random.PRNGKey(0)
    k_p, k_x, k_h = jax.random.split(key, 3)
    params = init_gru_params(k_p, input_size, hidden, num_layers)
    x = jax.random.normal(k_x, (seq, batch, input_size), dtype=jnp.float32)
    h0 = jax.random.normal(k_h, (num_layers, batch, hidden), dtype=jnp.float32)

    output, hn = gru_forward(x, h0, params)
    jax.block_until_ready((output, hn))

    ref_out, ref_hn = gru_reference(x, h0, params)
    assert output.shape == (seq, batch, hidden)
    assert hn.shape == (num_layers, batch, hidden)
    assert jnp.allclose(output, ref_out, atol=1e-4, rtol=1e-4), \
        float(jnp.max(jnp.abs(output - ref_out)))
    assert jnp.allclose(hn, ref_hn, atol=1e-4, rtol=1e-4), \
        float(jnp.max(jnp.abs(hn - ref_hn)))

    print("KERNEL_OK")
</pallas_src>

<mosaic_0001>
module attributes {stable_mosaic.version = 11 : i64} {
  func.func @gru_kernel(%arg0: i32, %arg1: memref<8x2x8x384xf32, #tpu.memory_space<vmem>>, %arg2: memref<2x8x128xf32, #tpu.memory_space<vmem>>, %arg3: memref<2x128x256xf32, #tpu.memory_space<vmem>>, %arg4: memref<2x128x128xf32, #tpu.memory_space<vmem>>, %arg5: memref<8x8x128xf32, #tpu.memory_space<vmem>>, %arg6: memref<2x8x128xf32, #tpu.memory_space<vmem>>) attributes {dimension_semantics = [#tpu.dimension_semantics<arbitrary>], iteration_bounds = array<i64: 1>, scalar_prefetch = 0 : i64, scratch_operands = 0 : i64, tpu.core_type = #tpu.core_type<tc>, window_params = [{transform_indices = @transform_0, window_bounds = array<i64: 8, 2, 8, 384>}, {pipeline_mode = #tpu.pipeline_mode<synchronous>, transform_indices = @transform_1, window_bounds = array<i64: 2, 8, 128>}, {pipeline_mode = #tpu.pipeline_mode<synchronous>, transform_indices = @transform_2, window_bounds = array<i64: 2, 128, 256>}, {pipeline_mode = #tpu.pipeline_mode<synchronous>, transform_indices = @transform_3, window_bounds = array<i64: 2, 128, 128>}, {transform_indices = @transform_4, window_bounds = array<i64: 8, 8, 128>}, {pipeline_mode = #tpu.pipeline_mode<synchronous>, transform_indices = @transform_5, window_bounds = array<i64: 2, 8, 128>}]} {
    %c0_i32 = arith.constant 0 : i32
    %0 = arith.cmpi eq, %arg0, %c0_i32 : i32
    %1 = arith.extui %0 : i1 to i32
    %c0_i32_0 = arith.constant 0 : i32
    %2 = arith.cmpi ne, %1, %c0_i32_0 : i32
    scf.if %2 {
      %c0_134 = arith.constant 0 : index
      %c0_135 = arith.constant 0 : index
      %c0_136 = arith.constant 0 : index
      %237 = vector.load %arg2[%c0_134, %c0_135, %c0_136] : memref<2x8x128xf32, #tpu.memory_space<vmem>>, vector<2x8x128xf32>
      %c0_137 = arith.constant 0 : index
      %c0_138 = arith.constant 0 : index
      %c0_139 = arith.constant 0 : index
      %238 = vector.load %arg6[%c0_137, %c0_138, %c0_139] : memref<2x8x128xf32, #tpu.memory_space<vmem>>, vector<2x8x128xf32>
      tpu.vector_store %arg6[%c0_137, %c0_138, %c0_139], %237 {strides = array<i32>} : memref<2x8x128xf32, #tpu.memory_space<vmem>>, vector<2x8x128xf32>,
    } else {
    }
    %c0 = arith.constant 0 : index
    %c0_1 = arith.constant 0 : index
    %c0_2 = arith.constant 0 : index
    %3 = vector.load %arg6[%c0, %c0_1, %c0_2] : memref<2x8x128xf32, #tpu.memory_space<vmem>>, vector<2x8x128xf32>
    %c0_3 = arith.constant 0 : index
    %c0_4 = arith.constant 0 : index
    %c0_5 = arith.constant 0 : index
    %c0_6 = arith.constant 0 : index
    %4 = vector.load %arg1[%c0_3, %c0_4, %c0_5, %c0_6] : memref<8x2x8x384xf32, #tpu.memory_space<vmem>>, vector<1x2x8x384xf32>
    %5 = vector.shape_cast %4 : vector<1x2x8x384xf32> to vector<2x8x384xf32>
    %6 = vector.extract_strided_slice %5 {offsets = [0, 0, 0], sizes = [2, 8, 256], strides = [1, 1, 1]} : vector<2x8x384xf32> to vector<2x8x256xf32>
    %c0_7 = arith.constant 0 : index
    %c0_8 = arith.constant 0 : index
    %c0_9 = arith.constant 0 : index
    %7 = vector.load %arg3[%c0_7, %c0_8, %c0_9] : memref<2x128x256xf32, #tpu.memory_space<vmem>>, vector<2x128x256xf32>
    "tpu.trace_start"() <{level = 10 : i32, message = "lbh,lho->lbo"}> : () -> ()
    %cst = arith.constant dense<0.000000e+00> : vector<2x8x256xf32>
    %8 = tpu.matmul %3, %7, %cst {dimension_numbers = #tpu.dot_dimension_numbers<[2], [1], [1], [2], [0, 0, 0, 1, 1, 2], [0], [0]>} : vector<2x8x128xf32>, vector<2x128x256xf32>, vector<2x8x256xf32> -> vector<2x8x256xf32>
    "tpu.trace_stop"() : () -> ()
    %9 = arith.addf %6, %8 : vector<2x8x256xf32>
    %10 = arith.negf %9 : vector<2x8x256xf32>
    %11 = math.exp %10 : vector<2x8x256xf32>
    %cst_10 = arith.constant 1.000000e+00 : f32
    %12 = vector.broadcast %cst_10 : f32 to vector<2x8x256xf32>
    %13 = arith.addf %12, %11 : vector<2x8x256xf32>
    %14 = arith.divf %12, %13 : vector<2x8x256xf32>
    %15 = vector.extract_strided_slice %14 {offsets = [0, 0, 0], sizes = [2, 8, 128], strides = [1, 1, 1]} : vector<2x8x256xf32> to vector<2x8x128xf32>
    %16 = vector.extract_strided_slice %14 {offsets = [0, 0, 128], sizes = [2, 8, 128], strides = [1, 1, 1]} : vector<2x8x256xf32> to vector<2x8x128xf32>
    %17 = vector.extract_strided_slice %5 {offsets = [0, 0, 256], sizes = [2, 8, 128], strides = [1, 1, 1]} : vector<2x8x384xf32> to vector<2x8x128xf32>
    %18 = arith.mulf %16, %3 : vector<2x8x128xf32>
    %c0_11 = arith.constant 0 : index
    %c0_12 = arith.constant 0 : index
    %c0_13 = arith.constant 0 : index
    %19 = vector.load %arg4[%c0_11, %c0_12, %c0_13] : memref<2x128x128xf32, #tpu.memory_space<vmem>>, vector<2x128x128xf32>
    "tpu.trace_start"() <{level = 10 : i32, message = "lbh,lho->lbo"}> : () -> ()
    %cst_14 = arith.constant dense<0.000000e+00> : vector<2x8x128xf32>
    %20 = tpu.matmul %18, %19, %cst_14 {dimension_numbers = #tpu.dot_dimension_numbers<[2], [1], [1], [2], [0, 0, 0, 1, 1, 2], [0], [0]>} : vector<2x8x128xf32>, vector<2x128x128xf32>, vector<2x8x128xf32> -> vector<2x8x128xf32>
    "tpu.trace_stop"() : () -> ()
    %21 = arith.addf %17, %20 : vector<2x8x128xf32>
    %22 = math.tanh %21 : vector<2x8x128xf32>
    %cst_15 = arith.constant 1.000000e+00 : f32
    %23 = vector.broadcast %cst_15 : f32 to vector<2x8x128xf32>
    %24 = arith.subf %23, %15 : vector<2x8x128xf32>
    %25 = arith.mulf %24, %3 : vector<2x8x128xf32>
    %26 = arith.mulf %15, %22 : vector<2x8x128xf32>
    %27 = arith.addf %25, %26 : vector<2x8x128xf32>
    %28 = vector.extract_strided_slice %27 {offsets = [1, 0, 0], sizes = [1, 8, 128], strides = [1, 1, 1]} : vector<2x8x128xf32> to vector<1x8x128xf32>
    %29 = vector.shape_cast %28 : vector<1x8x128xf32> to vector<8x128xf32>
    %c0_16 = arith.constant 0 : index
    %c0_17 = arith.constant 0 : index
    %c0_18 = arith.constant 0 : index
    %30 = vector.load %arg5[%c0_16, %c0_17, %c0_18] : memref<8x8x128xf32, #tpu.memory_space<vmem>>, vector<1x8x128xf32>
    %31 = vector.shape_cast %30 : vector<1x8x128xf32> to vector<8x128xf32>
    %32 = vector.shape_cast %29 : vector<8x128xf32> to vector<1x8x128xf32>
    tpu.vector_store %arg5[%c0_16, %c0_17, %c0_18], %32 {strides = array<i32>} : memref<8x8x128xf32, #tpu.memory_space<vmem>>, vector<1x8x128xf32>,
    %c1 = arith.constant 1 : index
    %c0_19 = arith.constant 0 : index
    %c0_20 = arith.constant 0 : index
    %c0_21 = arith.constant 0 : index
    %33 = vector.load %arg1[%c1, %c0_19, %c0_20, %c0_21] : memref<8x2x8x384xf32, #tpu.memory_space<vmem>>, vector<1x2x8x384xf32>
    %34 = vector.shape_cast %33 : vector<1x2x8x384xf32> to vector<2x8x384xf32>
    %35 = vector.extract_strided_slice %34 {offsets = [0, 0, 0], sizes = [2, 8, 256], strides = [1, 1, 1]} : vector<2x8x384xf32> to vector<2x8x256xf32>
    %c0_22 = arith.constant 0 : index
    %c0_23 = arith.constant 0 : index
    %c0_24 = arith.constant 0 : index
    %36 = vector.load %arg3[%c0_22, %c0_23, %c0_24] : memref<2x128x256xf32, #tpu.memory_space<vmem>>, vector<2x128x256xf32>
    "tpu.trace_start"() <{level = 10 : i32, message = "lbh,lho->lbo"}> : () -> ()
    %cst_25 = arith.constant dense<0.000000e+00> : vector<2x8x256xf32>
    %37 = tpu.matmul %27, %36, %cst_25 {dimension_numbers = #tpu.dot_dimension_numbers<[2], [1], [1], [2], [0, 0, 0, 1, 1, 2], [0], [0]>} : vector<2x8x128xf32>, vector<2x128x256xf32>, vector<2x8x256xf32> -> vector<2x8x256xf32>
    "tpu.trace_stop"() : () -> ()
    %38 = arith.addf %35, %37 : vector<2x8x256xf32>
    %39 = arith.negf %38 : vector<2x8x256xf32>
    %40 = math.exp %39 : vector<2x8x256xf32>
    %cst_26 = arith.constant 1.000000e+00 : f32
    %41 = vector.broadcast %cst_26 : f32 to vector<2x8x256xf32>
    %42 = arith.addf %41, %40 : vector<2x8x256xf32>
    %43 = arith.divf %41, %42 : vector<2x8x256xf32>
    %44 = vector.extract_strided_slice %43 {offsets = [0, 0, 0], sizes = [2, 8, 128], strides = [1, 1, 1]} : vector<2x8x256xf32> to vector<2x8x128xf32>
    %45 = vector.extract_strided_slice %43 {offsets = [0, 0, 128], sizes = [2, 8, 128], strides = [1, 1, 1]} : vector<2x8x256xf32> to vector<2x8x128xf32>
    %46 = vector.extract_strided_slice %34 {offsets = [0, 0, 256], sizes = [2, 8, 128], strides = [1, 1, 1]} : vector<2x8x384xf32> to vector<2x8x128xf32>
    %47 = arith.mulf %45, %27 : vector<2x8x128xf32>
    %c0_27 = arith.constant 0 : index
    %c0_28 = arith.constant 0 : index
    %c0_29 = arith.constant 0 : index
    %48 = vector.load %arg4[%c0_27, %c0_28, %c0_29] : memref<2x128x128xf32, #tpu.memory_space<vmem>>, vector<2x128x128xf32>
    "tpu.trace_start"() <{level = 10 : i32, message = "lbh,lho->lbo"}> : () -> ()
    %cst_30 = arith.constant dense<0.000000e+00> : vector<2x8x128xf32>
    %49 = tpu.matmul %47, %48, %cst_30 {dimension_numbers = #tpu.dot_dimension_numbers<[2], [1], [1], [2], [0, 0, 0, 1, 1, 2], [0], [0]>} : vector<2x8x128xf32>, vector<2x128x128xf32>, vector<2x8x128xf32> -> vector<2x8x128xf32>
    "tpu.trace_stop"() : () -> ()
    %50 = arith.addf %46, %49 : vector<2x8x128xf32>
    %51 = math.tanh %50 : vector<2x8x128xf32>
    %cst_31 = arith.constant 1.000000e+00 : f32
    %52 = vector.broadcast %cst_31 : f32 to vector<2x8x128xf32>
    %53 = arith.subf %52, %44 : vector<2x8x128xf32>
    %54 = arith.mulf %53, %27 : vector<2x8x128xf32>
    %55 = arith.mulf %44, %51 : vector<2x8x128xf32>
    %56 = arith.addf %54, %55 : vector<2x8x128xf32>
    %57 = vector.extract_strided_slice %56 {offsets = [1, 0, 0], sizes = [1, 8, 128], strides = [1, 1, 1]} : vector<2x8x128xf32> to vector<1x8x128xf32>
    %58 = vector.shape_cast %57 : vector<1x8x128xf32> to vector<8x128xf32>
    %c1_32 = arith.constant 1 : index
    %c0_33 = arith.constant 0 : index
    %c0_34 = arith.constant 0 : index
    %59 = vector.load %arg5[%c1_32, %c0_33, %c0_34] : memref<8x8x128xf32, #tpu.memory_space<vmem>>, vector<1x8x128xf32>
    %60 = vector.shape_cast %59 : vector<1x8x128xf32> to vector<8x128xf32>
    %61 = vector.shape_cast %58 : vector<8x128xf32> to vector<1x8x128xf32>
    tpu.vector_store %arg5[%c1_32, %c0_33, %c0_34], %61 {strides = array<i32>} : memref<8x8x128xf32, #tpu.memory_space<vmem>>, vector<1x8x128xf32>,
    %c2 = arith.constant 2 : index
    %c0_35 = arith.constant 0 : index
    %c0_36 = arith.constant 0 : index
    %c0_37 = arith.constant 0 : index
    %62 = vector.load %arg1[%c2, %c0_35, %c0_36, %c0_37] : memref<8x2x8x384xf32, #tpu.memory_space<vmem>>, vector<1x2x8x384xf32>
    %63 = vector.shape_cast %62 : vector<1x2x8x384xf32> to vector<2x8x384xf32>
    %64 = vector.extract_strided_slice %63 {offsets = [0, 0, 0], sizes = [2, 8, 256], strides = [1, 1, 1]} : vector<2x8x384xf32> to vector<2x8x256xf32>
    %c0_38 = arith.constant 0 : index
    %c0_39 = arith.constant 0 : index
    %c0_40 = arith.constant 0 : index
    %65 = vector.load %arg3[%c0_38, %c0_39, %c0_40] : memref<2x128x256xf32, #tpu.memory_space<vmem>>, vector<2x128x256xf32>
    "tpu.trace_start"() <{level = 10 : i32, message = "lbh,lho->lbo"}> : () -> ()
    %cst_41 = arith.constant dense<0.000000e+00> : vector<2x8x256xf32>
    %66 = tpu.matmul %56, %65, %cst_41 {dimension_numbers = #tpu.dot_dimension_numbers<[2], [1], [1], [2], [0, 0, 0, 1, 1, 2], [0], [0]>} : vector<2x8x128xf32>, vector<2x128x256xf32>, vector<2x8x256xf32> -> vector<2x8x256xf32>
    "tpu.trace_stop"() : () -> ()
    %67 = arith.addf %64, %66 : vector<2x8x256xf32>
    %68 = arith.negf %67 : vector<2x8x256xf32>
    %69 = math.exp %68 : vector<2x8x256xf32>
    %cst_42 = arith.constant 1.000000e+00 : f32
    %70 = vector.broadcast %cst_42 : f32 to vector<2x8x256xf32>
    %71 = arith.addf %70, %69 : vector<2x8x256xf32>
    %72 = arith.divf %70, %71 : vector<2x8x256xf32>
    %73 = vector.extract_strided_slice %72 {offsets = [0, 0, 0], sizes = [2, 8, 128], strides = [1, 1, 1]} : vector<2x8x256xf32> to vector<2x8x128xf32>
    %74 = vector.extract_strided_slice %72 {offsets = [0, 0, 128], sizes = [2, 8, 128], strides = [1, 1, 1]} : vector<2x8x256xf32> to vector<2x8x128xf32>
    %75 = vector.extract_strided_slice %63 {offsets = [0, 0, 256], sizes = [2, 8, 128], strides = [1, 1, 1]} : vector<2x8x384xf32> to vector<2x8x128xf32>
    %76 = arith.mulf %74, %56 : vector<2x8x128xf32>
    %c0_43 = arith.constant 0 : index
    %c0_44 = arith.constant 0 : index
    %c0_45 = arith.constant 0 : index
    %77 = vector.load %arg4[%c0_43, %c0_44, %c0_45] : memref<2x128x128xf32, #tpu.memory_space<vmem>>, vector<2x128x128xf32>
    "tpu.trace_start"() <{level = 10 : i32, message = "lbh,lho->lbo"}> : () -> ()
    %cst_46 = arith.constant dense<0.000000e+00> : vector<2x8x128xf32>
    %78 = tpu.matmul %76, %77, %cst_46 {dimension_numbers = #tpu.dot_dimension_numbers<[2], [1], [1], [2], [0, 0, 0, 1, 1, 2], [0], [0]>} : vector<2x8x128xf32>, vector<2x128x128xf32>, vector<2x8x128xf32> -> vector<2x8x128xf32>
    "tpu.trace_stop"() : () -> ()
    %79 = arith.addf %75, %78 : vector<2x8x128xf32>
    %80 = math.tanh %79 : vector<2x8x128xf32>
    %cst_47 = arith.constant 1.000000e+00 : f32
    %81 = vector.broadcast %cst_47 : f32 to vector<2x8x128xf32>
    %82 = arith.subf %81, %73 : vector<2x8x128xf32>
    %83 = arith.mulf %82, %56 : vector<2x8x128xf32>
    %84 = arith.mulf %73, %80 : vector<2x8x128xf32>
    %85 = arith.addf %83, %84 : vector<2x8x128xf32>
    %86 = vector.extract_strided_slice %85 {offsets = [1, 0, 0], sizes = [1, 8, 128], strides = [1, 1, 1]} : vector<2x8x128xf32> to vector<1x8x128xf32>
    %87 = vector.shape_cast %86 : vector<1x8x128xf32> to vector<8x128xf32>
    %c2_48 = arith.constant 2 : index
    %c0_49 = arith.constant 0 : index
    %c0_50 = arith.constant 0 : index
    %88 = vector.load %arg5[%c2_48, %c0_49, %c0_50] : memref<8x8x128xf32, #tpu.memory_space<vmem>>, vector<1x8x128xf32>
    %89 = vector.shape_cast %88 : vector<1x8x128xf32> to vector<8x128xf32>
    %90 = vector.shape_cast %87 : vector<8x128xf32> to vector<1x8x128xf32>
    tpu.vector_store %arg5[%c2_48, %c0_49, %c0_50], %90 {strides = array<i32>} : memref<8x8x128xf32, #tpu.memory_space<vmem>>, vector<1x8x128xf32>,
    %c3 = arith.constant 3 : index
    %c0_51 = arith.constant 0 : index
    %c0_52 = arith.constant 0 : index
    %c0_53 = arith.constant 0 : index
    %91 = vector.load %arg1[%c3, %c0_51, %c0_52, %c0_53] : memref<8x2x8x384xf32, #tpu.memory_space<vmem>>, vector<1x2x8x384xf32>
    %92 = vector.shape_cast %91 : vector<1x2x8x384xf32> to vector<2x8x384xf32>
    %93 = vector.extract_strided_slice %92 {offsets = [0, 0, 0], sizes = [2, 8, 256], strides = [1, 1, 1]} : vector<2x8x384xf32> to vector<2x8x256xf32>
    %c0_54 = arith.constant 0 : index
    %c0_55 = arith.constant 0 : index
    %c0_56 = arith.constant 0 : index
    %94 = vector.load %arg3[%c0_54, %c0_55, %c0_56] : memref<2x128x256xf32, #tpu.memory_space<vmem>>, vector<2x128x256xf32>
    "tpu.trace_start"() <{level = 10 : i32, message = "lbh,lho->lbo"}> : () -> ()
    %cst_57 = arith.constant dense<0.000000e+00> : vector<2x8x256xf32>
    %95 = tpu.matmul %85, %94, %cst_57 {dimension_numbers = #tpu.dot_dimension_numbers<[2], [1], [1], [2], [0, 0, 0, 1, 1, 2], [0], [0]>} : vector<2x8x128xf32>, vector<2x128x256xf32>, vector<2x8x256xf32> -> vector<2x8x256xf32>
    "tpu.trace_stop"() : () -> ()
    %96 = arith.addf %93, %95 : vector<2x8x256xf32>
    %97 = arith.negf %96 : vector<2x8x256xf32>
    %98 = math.exp %97 : vector<2x8x256xf32>
    %cst_58 = arith.constant 1.000000e+00 : f32
    %99 = vector.broadcast %cst_58 : f32 to vector<2x8x256xf32>
    %100 = arith.addf %99, %98 : vector<2x8x256xf32>
    %101 = arith.divf %99, %100 : vector<2x8x256xf32>
    %102 = vector.extract_strided_slice %101 {offsets = [0, 0, 0], sizes = [2, 8, 128], strides = [1, 1, 1]} : vector<2x8x256xf32> to vector<2x8x128xf32>
    %103 = vector.extract_strided_slice %101 {offsets = [0, 0, 128], sizes = [2, 8, 128], strides = [1, 1, 1]} : vector<2x8x256xf32> to vector<2x8x128xf32>
    %104 = vector.extract_strided_slice %92 {offsets = [0, 0, 256], sizes = [2, 8, 128], strides = [1, 1, 1]} : vector<2x8x384xf32> to vector<2x8x128xf32>
    %105 = arith.mulf %103, %85 : vector<2x8x128xf32>
    %c0_59 = arith.constant 0 : index
    %c0_60 = arith.constant 0 : index
    %c0_61 = arith.constant 0 : index
    %106 = vector.load %arg4[%c0_59, %c0_60, %c0_61] : memref<2x128x128xf32, #tpu.memory_space<vmem>>, vector<2x128x128xf32>
    "tpu.trace_start"() <{level = 10 : i32, message = "lbh,lho->lbo"}> : () -> ()
    %cst_62 = arith.constant dense<0.000000e+00> : vector<2x8x128xf32>
    %107 = tpu.matmul %105, %106, %cst_62 {dimension_numbers = #tpu.dot_dimension_numbers<[2], [1], [1], [2], [0, 0, 0, 1, 1, 2], [0], [0]>} : vector<2x8x128xf32>, vector<2x128x128xf32>, vector<2x8x128xf32> -> vector<2x8x128xf32>
    "tpu.trace_stop"() : () -> ()
    %108 = arith.addf %104, %107 : vector<2x8x128xf32>
    %109 = math.tanh %108 : vector<2x8x128xf32>
    %cst_63 = arith.constant 1.000000e+00 : f32
    %110 = vector.broadcast %cst_63 : f32 to vector<2x8x128xf32>
    %111 = arith.subf %110, %102 : vector<2x8x128xf32>
    %112 = arith.mulf %111, %85 : vector<2x8x128xf32>
    %113 = arith.mulf %102, %109 : vector<2x8x128xf32>
    %114 = arith.addf %112, %113 : vector<2x8x128xf32>
    %115 = vector.extract_strided_slice %114 {offsets = [1, 0, 0], sizes = [1, 8, 128], strides = [1, 1, 1]} : vector<2x8x128xf32> to vector<1x8x128xf32>
    %116 = vector.shape_cast %115 : vector<1x8x128xf32> to vector<8x128xf32>
    %c3_64 = arith.constant 3 : index
    %c0_65 = arith.constant 0 : index
    %c0_66 = arith.constant 0 : index
    %117 = vector.load %arg5[%c3_64, %c0_65, %c0_66] : memref<8x8x128xf32, #tpu.memory_space<vmem>>, vector<1x8x128xf32>
    %118 = vector.shape_cast %117 : vector<1x8x128xf32> to vector<8x128xf32>
    %119 = vector.shape_cast %116 : vector<8x128xf32> to vector<1x8x128xf32>
    tpu.vector_store %arg5[%c3_64, %c0_65, %c0_66], %119 {strides = array<i32>} : memref<8x8x128xf32, #tpu.memory_space<vmem>>, vector<1x8x128xf32>,
    %c4 = arith.constant 4 : index
    %c0_67 = arith.constant 0 : index
    %c0_68 = arith.constant 0 : index
    %c0_69 = arith.constant 0 : index
    %120 = vector.load %arg1[%c4, %c0_67, %c0_68, %c0_69] : memref<8x2x8x384xf32, #tpu.memory_space<vmem>>, vector<1x2x8x384xf32>
    %121 = vector.shape_cast %120 : vector<1x2x8x384xf32> to vector<2x8x384xf32>
    %122 = vector.extract_strided_slice %121 {offsets = [0, 0, 0], sizes = [2, 8, 256], strides = [1, 1, 1]} : vector<2x8x384xf32> to vector<2x8x256xf32>
    %c0_70 = arith.constant 0 : index
    %c0_71 = arith.constant 0 : index
    %c0_72 = arith.constant 0 : index
    %123 = vector.load %arg3[%c0_70, %c0_71, %c0_72] : memref<2x128x256xf32, #tpu.memory_space<vmem>>, vector<2x128x256xf32>
    "tpu.trace_start"() <{level = 10 : i32, message = "lbh,lho->lbo"}> : () -> ()
    %cst_73 = arith.constant dense<0.000000e+00> : vector<2x8x256xf32>
    %124 = tpu.matmul %114, %123, %cst_73 {dimension_numbers = #tpu.dot_dimension_numbers<[2], [1], [1], [2], [0, 0, 0, 1, 1, 2], [0], [0]>} : vector<2x8x128xf32>, vector<2x128x256xf32>, vector<2x8x256xf32> -> vector<2x8x256xf32>
    "tpu.trace_stop"() : () -> ()
    %125 = arith.addf %122, %124 : vector<2x8x256xf32>
    %126 = arith.negf %125 : vector<2x8x256xf32>
    %127 = math.exp %126 : vector<2x8x256xf32>
    %cst_74 = arith.constant 1.000000e+00 : f32
    %128 = vector.broadcast %cst_74 : f32 to vector<2x8x256xf32>
    %129 = arith.addf %128, %127 : vector<2x8x256xf32>
    %130 = arith.divf %128, %129 : vector<2x8x256xf32>
    %131 = vector.extract_strided_slice %130 {offsets = [0, 0, 0], sizes = [2, 8, 128], strides = [1, 1, 1]} : vector<2x8x256xf32> to vector<2x8x128xf32>
    %132 = vector.extract_strided_slice %130 {offsets = [0, 0, 128], sizes = [2, 8, 128], strides = [1, 1, 1]} : vector<2x8x256xf32> to vector<2x8x128xf32>
    %133 = vector.extract_strided_slice %121 {offsets = [0, 0, 256], sizes = [2, 8, 128], strides = [1, 1, 1]} : vector<2x8x384xf32> to vector<2x8x128xf32>
    %134 = arith.mulf %132, %114 : vector<2x8x128xf32>
    %c0_75 = arith.constant 0 : index
    %c0_76 = arith.constant 0 : index
    %c0_77 = arith.constant 0 : index
    %135 = vector.load %arg4[%c0_75, %c0_76, %c0_77] : memref<2x128x128xf32, #tpu.memory_space<vmem>>, vector<2x128x128xf32>
    "tpu.trace_start"() <{level = 10 : i32, message = "lbh,lho->lbo"}> : () -> ()
    %cst_78 = arith.constant dense<0.000000e+00> : vector<2x8x128xf32>
    %136 = tpu.matmul %134, %135, %cst_78 {dimension_numbers = #tpu.dot_dimension_numbers<[2], [1], [1], [2], [0, 0, 0, 1, 1, 2], [0], [0]>} : vector<2x8x128xf32>, vector<2x128x128xf32>, vector<2x8x128xf32> -> vector<2x8x128xf32>
    "tpu.trace_stop"() : () -> ()
    %137 = arith.addf %133, %136 : vector<2x8x128xf32>
    %138 = math.tanh %137 : vector<2x8x128xf32>
    %cst_79 = arith.constant 1.000000e+00 : f32
    %139 = vector.broadcast %cst_79 : f32 to vector<2x8x128xf32>
    %140 = arith.subf %139, %131 : vector<2x8x128xf32>
    %141 = arith.mulf %140, %114 : vector<2x8x128xf32>
    %142 = arith.mulf %131, %138 : vector<2x8x128xf32>
    %143 = arith.addf %141, %142 : vector<2x8x128xf32>
    %144 = vector.extract_strided_slice %143 {offsets = [1, 0, 0], sizes = [1, 8, 128], strides = [1, 1, 1]} : vector<2x8x128xf32> to vector<1x8x128xf32>
    %145 = vector.shape_cast %144 : vector<1x8x128xf32> to vector<8x128xf32>
    %c4_80 = arith.constant 4 : index
    %c0_81 = arith.constant 0 : index
    %c0_82 = arith.constant 0 : index
    %146 = vector.load %arg5[%c4_80, %c0_81, %c0_82] : memref<8x8x128xf32, #tpu.memory_space<vmem>>, vector<1x8x128xf32>
    %147 = vector.shape_cast %146 : vector<1x8x128xf32> to vector<8x128xf32>
    %148 = vector.shape_cast %145 : vector<8x128xf32> to vector<1x8x128xf32>
    tpu.vector_store %arg5[%c4_80, %c0_81, %c0_82], %148 {strides = array<i32>} : memref<8x8x128xf32, #tpu.memory_space<vmem>>, vector<1x8x128xf32>,
    %c5 = arith.constant 5 : index
    %c0_83 = arith.constant 0 : index
    %c0_84 = arith.constant 0 : index
    %c0_85 = arith.constant 0 : index
    %149 = vector.load %arg1[%c5, %c0_83, %c0_84, %c0_85] : memref<8x2x8x384xf32, #tpu.memory_space<vmem>>, vector<1x2x8x384xf32>
    %150 = vector.shape_cast %149 : vector<1x2x8x384xf32> to vector<2x8x384xf32>
    %151 = vector.extract_strided_slice %150 {offsets = [0, 0, 0], sizes = [2, 8, 256], strides = [1, 1, 1]} : vector<2x8x384xf32> to vector<2x8x256xf32>
    %c0_86 = arith.constant 0 : index
    %c0_87 = arith.constant 0 : index
    %c0_88 = arith.constant 0 : index
    %152 = vector.load %arg3[%c0_86, %c0_87, %c0_88] : memref<2x128x256xf32, #tpu.memory_space<vmem>>, vector<2x128x256xf32>
    "tpu.trace_start"() <{level = 10 : i32, message = "lbh,lho->lbo"}> : () -> ()
    %cst_89 = arith.constant dense<0.000000e+00> : vector<2x8x256xf32>
    %153 = tpu.matmul %143, %152, %cst_89 {dimension_numbers = #tpu.dot_dimension_numbers<[2], [1], [1], [2], [0, 0, 0, 1, 1, 2], [0], [0]>} : vector<2x8x128xf32>, vector<2x128x256xf32>, vector<2x8x256xf32> -> vector<2x8x256xf32>
    "tpu.trace_stop"() : () -> ()
    %154 = arith.addf %151, %153 : vector<2x8x256xf32>
    %155 = arith.negf %154 : vector<2x8x256xf32>
    %156 = math.exp %155 : vector<2x8x256xf32>
    %cst_90 = arith.constant 1.000000e+00 : f32
    %157 = vector.broadcast %cst_90 : f32 to vector<2x8x256xf32>
    %158 = arith.addf %157, %156 : vector<2x8x256xf32>
    %159 = arith.divf %157, %158 : vector<2x8x256xf32>
    %160 = vector.extract_strided_slice %159 {offsets = [0, 0, 0], sizes = [2, 8, 128], strides = [1, 1, 1]} : vector<2x8x256xf32> to vector<2x8x128xf32>
    %161 = vector.extract_strided_slice %159 {offsets = [0, 0, 128], sizes = [2, 8, 128], strides = [1, 1, 1]} : vector<2x8x256xf32> to vector<2x8x128xf32>
    %162 = vector.extract_strided_slice %150 {offsets = [0, 0, 256], sizes = [2, 8, 128], strides = [1, 1, 1]} : vector<2x8x384xf32> to vector<2x8x128xf32>
    %163 = arith.mulf %161, %143 : vector<2x8x128xf32>
    %c0_91 = arith.constant 0 : index
    %c0_92 = arith.constant 0 : index
    %c0_93 = arith.constant 0 : index
    %164 = vector.load %arg4[%c0_91, %c0_92, %c0_93] : memref<2x128x128xf32, #tpu.memory_space<vmem>>, vector<2x128x128xf32>
    "tpu.trace_start"() <{level = 10 : i32, message = "lbh,lho->lbo"}> : () -> ()
    %cst_94 = arith.constant dense<0.000000e+00> : vector<2x8x128xf32>
    %165 = tpu.matmul %163, %164, %cst_94 {dimension_numbers = #tpu.dot_dimension_numbers<[2], [1], [1], [2], [0, 0, 0, 1, 1, 2], [0], [0]>} : vector<2x8x128xf32>, vector<2x128x128xf32>, vector<2x8x128xf32> -> vector<2x8x128xf32>
    "tpu.trace_stop"() : () -> ()
    %166 = arith.addf %162, %165 : vector<2x8x128xf32>
    %167 = math.tanh %166 : vector<2x8x128xf32>
    %cst_95 = arith.constant 1.000000e+00 : f32
    %168 = vector.broadcast %cst_95 : f32 to vector<2x8x128xf32>
    %169 = arith.subf %168, %160 : vector<2x8x128xf32>
    %170 = arith.mulf %169, %143 : vector<2x8x128xf32>
    %171 = arith.mulf %160, %167 : vector<2x8x128xf32>
    %172 = arith.addf %170, %171 : vector<2x8x128xf32>
    %173 = vector.extract_strided_slice %172 {offsets = [1, 0, 0], sizes = [1, 8, 128], strides = [1, 1, 1]} : vector<2x8x128xf32> to vector<1x8x128xf32>
    %174 = vector.shape_cast %173 : vector<1x8x128xf32> to vector<8x128xf32>
    %c5_96 = arith.constant 5 : index
    %c0_97 = arith.constant 0 : index
    %c0_98 = arith.constant 0 : index
    %175 = vector.load %arg5[%c5_96, %c0_97, %c0_98] : memref<8x8x128xf32, #tpu.memory_space<vmem>>, vector<1x8x128xf32>
    %176 = vector.shape_cast %175 : vector<1x8x128xf32> to vector<8x128xf32>
    %177 = vector.shape_cast %174 : vector<8x128xf32> to vector<1x8x128xf32>
    tpu.vector_store %arg5[%c5_96, %c0_97, %c0_98], %177 {strides = array<i32>} : memref<8x8x128xf32, #tpu.memory_space<vmem>>, vector<1x8x128xf32>,
    %c6 = arith.constant 6 : index
    %c0_99 = arith.constant 0 : index
    %c0_100 = arith.constant 0 : index
    %c0_101 = arith.constant 0 : index
    %178 = vector.load %arg1[%c6, %c0_99, %c0_100, %c0_101] : memref<8x2x8x384xf32, #tpu.memory_space<vmem>>, vector<1x2x8x384xf32>
    %179 = vector.shape_cast %178 : vector<1x2x8x384xf32> to vector<2x8x384xf32>
    %180 = vector.extract_strided_slice %179 {offsets = [0, 0, 0], sizes = [2, 8, 256], strides = [1, 1, 1]} : vector<2x8x384xf32> to vector<2x8x256xf32>
    %c0_102 = arith.constant 0 : index
    %c0_103 = arith.constant 0 : index
    %c0_104 = arith.constant 0 : index
    %181 = vector.load %arg3[%c0_102, %c0_103, %c0_104] : memref<2x128x256xf32, #tpu.memory_space<vmem>>, vector<2x128x256xf32>
    "tpu.trace_start"() <{level = 10 : i32, message = "lbh,lho->lbo"}> : () -> ()
    %cst_105 = arith.constant dense<0.000000e+00> : vector<2x8x256xf32>
    %182 = tpu.matmul %172, %181, %cst_105 {dimension_numbers = #tpu.dot_dimension_numbers<[2], [1], [1], [2], [0, 0, 0, 1, 1, 2], [0], [0]>} : vector<2x8x128xf32>, vector<2x128x256xf32>, vector<2x8x256xf32> -> vector<2x8x256xf32>
    "tpu.trace_stop"() : () -> ()
    %183 = arith.addf %180, %182 : vector<2x8x256xf32>
    %184 = arith.negf %183 : vector<2x8x256xf32>
    %185 = math.exp %184 : vector<2x8x256xf32>
    %cst_106 = arith.constant 1.000000e+00 : f32
    %186 = vector.broadcast %cst_106 : f32 to vector<2x8x256xf32>
    %187 = arith.addf %186, %185 : vector<2x8x256xf32>
    %188 = arith.divf %186, %187 : vector<2x8x256xf32>
    %189 = vector.extract_strided_slice %188 {offsets = [0, 0, 0], sizes = [2, 8, 128], strides = [1, 1, 1]} : vector<2x8x256xf32> to vector<2x8x128xf32>
    %190 = vector.extract_strided_slice %188 {offsets = [0, 0, 128], sizes = [2, 8, 128], strides = [1, 1, 1]} : vector<2x8x256xf32> to vector<2x8x128xf32>
    %191 = vector.extract_strided_slice %179 {offsets = [0, 0, 256], sizes = [2, 8, 128], strides = [1, 1, 1]} : vector<2x8x384xf32> to vector<2x8x128xf32>
    %192 = arith.mulf %190, %172 : vector<2x8x128xf32>
    %c0_107 = arith.constant 0 : index
    %c0_108 = arith.constant 0 : index
    %c0_109 = arith.constant 0 : index
    %193 = vector.load %arg4[%c0_107, %c0_108, %c0_109] : memref<2x128x128xf32, #tpu.memory_space<vmem>>, vector<2x128x128xf32>
    "tpu.trace_start"() <{level = 10 : i32, message = "lbh,lho->lbo"}> : () -> ()
    %cst_110 = arith.constant dense<0.000000e+00> : vector<2x8x128xf32>
    %194 = tpu.matmul %192, %193, %cst_110 {dimension_numbers = #tpu.dot_dimension_numbers<[2], [1], [1], [2], [0, 0, 0, 1, 1, 2], [0], [0]>} : vector<2x8x128xf32>, vector<2x128x128xf32>, vector<2x8x128xf32> -> vector<2x8x128xf32>
    "tpu.trace_stop"() : () -> ()
    %195 = arith.addf %191, %194 : vector<2x8x128xf32>
    %196 = math.tanh %195 : vector<2x8x128xf32>
    %cst_111 = arith.constant 1.000000e+00 : f32
    %197 = vector.broadcast %cst_111 : f32 to vector<2x8x128xf32>
    %198 = arith.subf %197, %189 : vector<2x8x128xf32>
    %199 = arith.mulf %198, %172 : vector<2x8x128xf32>
    %200 = arith.mulf %189, %196 : vector<2x8x128xf32>
    %201 = arith.addf %199, %200 : vector<2x8x128xf32>
    %202 = vector.extract_strided_slice %201 {offsets = [1, 0, 0], sizes = [1, 8, 128], strides = [1, 1, 1]} : vector<2x8x128xf32> to vector<1x8x128xf32>
    %203 = vector.shape_cast %202 : vector<1x8x128xf32> to vector<8x128xf32>
    %c6_112 = arith.constant 6 : index
    %c0_113 = arith.constant 0 : index
    %c0_114 = arith.constant 0 : index
    %204 = vector.load %arg5[%c6_112, %c0_113, %c0_114] : memref<8x8x128xf32, #tpu.memory_space<vmem>>, vector<1x8x128xf32>
    %205 = vector.shape_cast %204 : vector<1x8x128xf32> to vector<8x128xf32>
    %206 = vector.shape_cast %203 : vector<8x128xf32> to vector<1x8x128xf32>
    tpu.vector_store %arg5[%c6_112, %c0_113, %c0_114], %206 {strides = array<i32>} : memref<8x8x128xf32, #tpu.memory_space<vmem>>, vector<1x8x128xf32>,
    %c7 = arith.constant 7 : index
    %c0_115 = arith.constant 0 : index
    %c0_116 = arith.constant 0 : index
    %c0_117 = arith.constant 0 : index
    %207 = vector.load %arg1[%c7, %c0_115, %c0_116, %c0_117] : memref<8x2x8x384xf32, #tpu.memory_space<vmem>>, vector<1x2x8x384xf32>
    %208 = vector.shape_cast %207 : vector<1x2x8x384xf32> to vector<2x8x384xf32>
    %209 = vector.extract_strided_slice %208 {offsets = [0, 0, 0], sizes = [2, 8, 256], strides = [1, 1, 1]} : vector<2x8x384xf32> to vector<2x8x256xf32>
    %c0_118 = arith.constant 0 : index
    %c0_119 = arith.constant 0 : index
    %c0_120 = arith.constant 0 : index
    %210 = vector.load %arg3[%c0_118, %c0_119, %c0_120] : memref<2x128x256xf32, #tpu.memory_space<vmem>>, vector<2x128x256xf32>
    "tpu.trace_start"() <{level = 10 : i32, message = "lbh,lho->lbo"}> : () -> ()
    %cst_121 = arith.constant dense<0.000000e+00> : vector<2x8x256xf32>
    %211 = tpu.matmul %201, %210, %cst_121 {dimension_numbers = #tpu.dot_dimension_numbers<[2], [1], [1], [2], [0, 0, 0, 1, 1, 2], [0], [0]>} : vector<2x8x128xf32>, vector<2x128x256xf32>, vector<2x8x256xf32> -> vector<2x8x256xf32>
    "tpu.trace_stop"() : () -> ()
    %212 = arith.addf %209, %211 : vector<2x8x256xf32>
    %213 = arith.negf %212 : vector<2x8x256xf32>
    %214 = math.exp %213 : vector<2x8x256xf32>
    %cst_122 = arith.constant 1.000000e+00 : f32
    %215 = vector.broadcast %cst_122 : f32 to vector<2x8x256xf32>
    %216 = arith.addf %215, %214 : vector<2x8x256xf32>
    %217 = arith.divf %215, %216 : vector<2x8x256xf32>
    %218 = vector.extract_strided_slice %217 {offsets = [0, 0, 0], sizes = [2, 8, 128], strides = [1, 1, 1]} : vector<2x8x256xf32> to vector<2x8x128xf32>
    %219 = vector.extract_strided_slice %217 {offsets = [0, 0, 128], sizes = [2, 8, 128], strides = [1, 1, 1]} : vector<2x8x256xf32> to vector<2x8x128xf32>
    %220 = vector.extract_strided_slice %208 {offsets = [0, 0, 256], sizes = [2, 8, 128], strides = [1, 1, 1]} : vector<2x8x384xf32> to vector<2x8x128xf32>
    %221 = arith.mulf %219, %201 : vector<2x8x128xf32>
    %c0_123 = arith.constant 0 : index
    %c0_124 = arith.constant 0 : index
    %c0_125 = arith.constant 0 : index
    %222 = vector.load %arg4[%c0_123, %c0_124, %c0_125] : memref<2x128x128xf32, #tpu.memory_space<vmem>>, vector<2x128x128xf32>
    "tpu.trace_start"() <{level = 10 : i32, message = "lbh,lho->lbo"}> : () -> ()
    %cst_126 = arith.constant dense<0.000000e+00> : vector<2x8x128xf32>
    %223 = tpu.matmul %221, %222, %cst_126 {dimension_numbers = #tpu.dot_dimension_numbers<[2], [1], [1], [2], [0, 0, 0, 1, 1, 2], [0], [0]>} : vector<2x8x128xf32>, vector<2x128x128xf32>, vector<2x8x128xf32> -> vector<2x8x128xf32>
    "tpu.trace_stop"() : () -> ()
    %224 = arith.addf %220, %223 : vector<2x8x128xf32>
    %225 = math.tanh %224 : vector<2x8x128xf32>
    %cst_127 = arith.constant 1.000000e+00 : f32
    %226 = vector.broadcast %cst_127 : f32 to vector<2x8x128xf32>
    %227 = arith.subf %226, %218 : vector<2x8x128xf32>
    %228 = arith.mulf %227, %201 : vector<2x8x128xf32>
    %229 = arith.mulf %218, %225 : vector<2x8x128xf32>
    %230 = arith.addf %228, %229 : vector<2x8x128xf32>
    %231 = vector.extract_strided_slice %230 {offsets = [1, 0, 0], sizes = [1, 8, 128], strides = [1, 1, 1]} : vector<2x8x128xf32> to vector<1x8x128xf32>
    %232 = vector.shape_cast %231 : vector<1x8x128xf32> to vector<8x128xf32>
    %c7_128 = arith.constant 7 : index
    %c0_129 = arith.constant 0 : index
    %c0_130 = arith.constant 0 : index
    %233 = vector.load %arg5[%c7_128, %c0_129, %c0_130] : memref<8x8x128xf32, #tpu.memory_space<vmem>>, vector<1x8x128xf32>
    %234 = vector.shape_cast %233 : vector<1x8x128xf32> to vector<8x128xf32>
    %235 = vector.shape_cast %232 : vector<8x128xf32> to vector<1x8x128xf32>
    tpu.vector_store %arg5[%c7_128, %c0_129, %c0_130], %235 {strides = array<i32>} : memref<8x8x128xf32, #tpu.memory_space<vmem>>, vector<1x8x128xf32>,
    %c0_131 = arith.constant 0 : index
    %c0_132 = arith.constant 0 : index
    %c0_133 = arith.constant 0 : index
    %236 = vector.load %arg6[%c0_131, %c0_132, %c0_133] : memref<2x8x128xf32, #tpu.memory_space<vmem>>, vector<2x8x128xf32>
    tpu.vector_store %arg6[%c0_131, %c0_132, %c0_133], %230 {strides = array<i32>} : memref<2x8x128xf32, #tpu.memory_space<vmem>>, vector<2x8x128xf32>,
    return
  }
  func.func @transform_0(%arg0: i32) -> (i32, i32, i32, i32) {
    %c0_i32 = arith.constant 0 : i32
    %c0_i32_0 = arith.constant 0 : i32
    %c0_i32_1 = arith.constant 0 : i32
    %c0_i32_2 = arith.constant 0 : i32
    return %arg0, %c0_i32, %c0_i32_0, %c0_i32_1 : i32, i32, i32, i32
  }
  func.func @transform_1(%arg0: i32) -> (i32, i32, i32) {
    %c0_i32 = arith.constant 0 : i32
    %c0_i32_0 = arith.constant 0 : i32
    %c0_i32_1 = arith.constant 0 : i32
    %c0_i32_2 = arith.constant 0 : i32
    return %c0_i32, %c0_i32_0, %c0_i32_1 : i32, i32, i32
  }
  func.func @transform_2(%arg0: i32) -> (i32, i32, i32) {
    %c0_i32 = arith.constant 0 : i32
    %c0_i32_0 = arith.constant 0 : i32
    %c0_i32_1 = arith.constant 0 : i32
    %c0_i32_2 = arith.constant 0 : i32
    return %c0_i32, %c0_i32_0, %c0_i32_1 : i32, i32, i32
  }
  func.func @transform_3(%arg0: i32) -> (i32, i32, i32) {
    %c0_i32 = arith.constant 0 : i32
    %c0_i32_0 = arith.constant 0 : i32
    %c0_i32_1 = arith.constant 0 : i32
    %c0_i32_2 = arith.constant 0 : i32
    return %c0_i32, %c0_i32_0, %c0_i32_1 : i32, i32, i32
  }
  func.func @transform_4(%arg0: i32) -> (i32, i32, i32) {
    %c0_i32 = arith.constant 0 : i32
    %c0_i32_0 = arith.constant 0 : i32
    %c0_i32_1 = arith.constant 0 : i32
    return %arg0, %c0_i32, %c0_i32_0 : i32, i32, i32
  }
  func.func @transform_5(%arg0: i32) -> (i32, i32, i32) {
    %c0_i32 = arith.constant 0 : i32
    %c0_i32_0 = arith.constant 0 : i32
    %c0_i32_1 = arith.constant 0 : i32
    %c0_i32_2 = arith.constant 0 : i32
    return %c0_i32, %c0_i32_0, %c0_i32_1 : i32, i32, i32
  }
}

</mosaic_0001>

<llo_original>
// kernel: tpu_custom_call.1
$region0: #{tpu_custom_call.1}
  #allocation0 [shape = 'u32[]', space=smem, size = 0x4, offset = 0x4, fixed_abs, tag = 'smem constant byte address 0x4 - core index']
  #allocation1 [shape = 'u32[72,128]{1,0:T(1,128)}', space=vmem, size = 0x9000, scoped, tag = 'internal scratch']
  %s0 = inlined_call_operand.hbm [shape: f32[8,2,8,384], index: 0, kind: input, shape index: {}]
  %s1 = inlined_call_operand.hbm [shape: f32[2,8,128], index: 1, kind: input, shape index: {}]
  %s2 = inlined_call_operand.hbm [shape: f32[2,128,256], index: 2, kind: input, shape index: {}]
  %s3 = inlined_call_operand.hbm [shape: f32[2,128,128], index: 3, kind: input, shape index: {}]
  %s4 = inlined_call_operand.hbm [shape: f32[8,8,128], index: 4, kind: output, shape index: {0}]
  %s5 = inlined_call_operand.hbm [shape: f32[2,8,128], index: 5, kind: output, shape index: {1}]
  %6 = xla_tuple %s4, %s5
  %s7 = sld [smem:[#allocation0]]
  $region54: #{tpu_custom_call.1} parent=0
    _
  %s9 = ssub.s32 1, %s7
  %s10 = scalar_select 0, %s9, %s7
  $region1: #{tpu_custom_call.1} parent=0
    #allocation2 [shape = 'u8[196608]{0}', space=vmem, size = 0x30000, scoped, tag = 'input window, operand 0, single buffered']
    #allocation3 [shape = 's32[1]{0}', space=sflag, size = 0x4, scoped, tag = 'scoped memory for tpu_custom_call.1']
    #allocation4 [shape = 's32[1]{0}', space=sflag, size = 0x4, scoped, tag = 'scoped memory for tpu_custom_call.1']
    #allocation5 [shape = 'u8[8192]{0}', space=vmem, size = 0x2000, scoped, tag = 'input window, operand 1, single buffered']
    #allocation6 [shape = 's32[1]{0}', space=sflag, size = 0x4, scoped, tag = 'scoped memory for tpu_custom_call.1']
    #allocation7 [shape = 'u8[262144]{0}', space=vmem, size = 0x40000, scoped, tag = 'input window, operand 2, single buffered']
    #allocation8 [shape = 'u8[131072]{0}', space=vmem, size = 0x20000, scoped, tag = 'input window, operand 3, single buffered']
    #allocation9 [shape = 's32[1]{0}', space=sflag, size = 0x4, scoped, tag = 'scoped memory for tpu_custom_call.1']
    #allocation10 [shape = 'u8[32768]{0}', space=vmem, size = 0x8000, scoped, tag = 'output window, operand 0, single buffered']
    #allocation11 [shape = 'u8[8192]{0}', space=vmem, size = 0x2000, scoped, tag = 'output window, operand 1, single buffered']
    #allocation12 [shape = 's32[1]{0}', space=sflag, size = 0x4, scoped, tag = 'scoped memory for tpu_custom_call.1']
    %11 = vsyncpa [#allocation3], 0
    %12 = vsyncpa [#allocation6], 0
    %13 = vsyncpa [#allocation9], 0
    %14 = vsyncpa [#allocation4], 0
    %15 = vsyncpa [#allocation12], 0
    // Predicated region
    $region2: #{tpu_custom_call.1} parent=1 // pred_check
      _
    $region3: #{tpu_custom_call.1} parent=1 // pred_check_branch
      %17 = sbr.rel (0) target = $region5
    $region4: #{tpu_custom_call.1} parent=1 // pred_region
      %19 = vsyncadd [#allocation3], 0
      %s20 = sshll.u32 %s0, 4
      %s21 = int_to_ptr.hbm [resolvable:$true] %s20
      %s22 = sshll.u32 [#allocation2], 4
      %s23 = int_to_ptr.vmem [resolvable:$true] %s22
      %28 = dma.hbm_to_vmem [thread:$0]  %s21, 6144, %s23, [#allocation3], 384, 384, 24
    $region5: #{tpu_custom_call.1} parent=1 // pred_fallthru
      _
    // Predicated region
    $region6: #{tpu_custom_call.1} parent=1 // pred_check
      _
    $region7: #{tpu_custom_call.1} parent=1 // pred_check_branch
      %30 = sbr.rel (0) target = $region9
    $region8: #{tpu_custom_call.1} parent=1 // pred_region
      %32 = vsyncadd [#allocation6], 0
      %s33 = sshll.u32 %s1, 4
      %s34 = int_to_ptr.hbm [resolvable:$true] %s33
      %s35 = sshll.u32 [#allocation5], 4
      %s36 = int_to_ptr.vmem [resolvable:$true] %s35
      %41 = dma.hbm_to_vmem [thread:$0]  %s34, 256, %s36, [#allocation6], 128, 128, 8
    $region9: #{tpu_custom_call.1} parent=1 // pred_fallthru
      _
    // Predicated region
    $region10: #{tpu_custom_call.1} parent=1 // pred_check
      _
    $region11: #{tpu_custom_call.1} parent=1 // pred_check_branch
      %43 = sbr.rel (0) target = $region13
    $region12: #{tpu_custom_call.1} parent=1 // pred_region
      %45 = vsyncadd [#allocation6], 0
      %s46 = sshll.u32 %s2, 4
      %s47 = int_to_ptr.hbm [resolvable:$true] %s46
      %s48 = sshll.u32 [#allocation7], 4
      %s49 = int_to_ptr.vmem [resolvable:$true] %s48
      %54 = dma.hbm_to_vmem [thread:$0]  %s47, 8192, %s49, [#allocation6], 256, 256, 16
    $region13: #{tpu_custom_call.1} parent=1 // pred_fallthru
      _
    // Predicated region
    $region14: #{tpu_custom_call.1} parent=1 // pred_check
      _
    $region15: #{tpu_custom_call.1} parent=1 // pred_check_branch
      %56 = sbr.rel (0) target = $region17
    $region16: #{tpu_custom_call.1} parent=1 // pred_region
      %58 = vsyncadd [#allocation9], 0
      %s59 = sshll.u32 %s3, 4
      %s60 = int_to_ptr.hbm [resolvable:$true] %s59
      %s61 = sshll.u32 [#allocation8], 4
      %s62 = int_to_ptr.vmem [resolvable:$true] %s61
      %67 = dma.hbm_to_vmem [thread:$0]  %s60, 4096, %s62, [#allocation9], 128, 128, 8
    $region17: #{tpu_custom_call.1} parent=1 // pred_fallthru
      _
    // Predicated region
    $region18: #{tpu_custom_call.1} parent=1 // pred_check
      _
    $region19: #{tpu_custom_call.1} parent=1 // pred_check_branch
      %69 = sbr.rel (0) target = $region21
    $region20: #{tpu_custom_call.1} parent=1 // pred_region
      %71 = dma.done [#allocation3], 6144
    $region21: #{tpu_custom_call.1} parent=1 // pred_fallthru
      _
    // Predicated region
    $region22: #{tpu_custom_call.1} parent=1 // pred_check
      _
    $region23: #{tpu_custom_call.1} parent=1 // pred_check_branch
      %73 = sbr.rel (0) target = $region25
    $region24: #{tpu_custom_call.1} parent=1 // pred_region
      %75 = dma.done [#allocation6], 256
    $region25: #{tpu_custom_call.1} parent=1 // pred_fallthru
      _
    // Predicated region
    $region26: #{tpu_custom_call.1} parent=1 // pred_check
      _
    $region27: #{tpu_custom_call.1} parent=1 // pred_check_branch
      %77 = sbr.rel (0) target = $region29
    $region28: #{tpu_custom_call.1} parent=1 // pred_region
      %79 = dma.done [#allocation6], 8192
    $region29: #{tpu_custom_call.1} parent=1 // pred_fallthru
      _
    // Predicated region
    $region30: #{tpu_custom_call.1} parent=1 // pred_check
      _
    $region31: #{tpu_custom_call.1} parent=1 // pred_check_branch
      %81 = sbr.rel (0) target = $region33
    $region32: #{tpu_custom_call.1} parent=1 // pred_region
      %83 = dma.done [#allocation9], 4096
    $region33: #{tpu_custom_call.1} parent=1 // pred_fallthru
      _
    %p84 = scmp.eq.s32.totalorder 0, 0
    // Predicated region
    $region34: #{tpu_custom_call.1} parent=1 // pred_check
      %p85 = pneg %p84
    $region35: #{tpu_custom_call.1} parent=1 // pred_check_branch
      %87 = sbr.rel (%p85) target = $region37
    $region36: #{tpu_custom_call.1} parent=1 // pred_region
      %v88 = vld [vmem:[#allocation5] sm:$0xff]
      %v89 = vld [vmem:[#allocation5 + $0x8] sm:$0xff]
      %90 = vst [vmem:[#allocation11] sm:$0xff] %v88
      %91 = vst [vmem:[#allocation11 + $0x8] sm:$0xff] %v89
    $region37: #{tpu_custom_call.1} parent=1 // pred_fallthru
      _
    %v92 = vld [vmem:[#allocation11] sm:$0xff]
    %v93 = vld [vmem:[#allocation11 + $0x8] sm:$0xff]
    %v94 = vld [vmem:[#allocation2] sm:$0xff]
    %v95 = vld [vmem:[#allocation2 + $0x8] sm:$0xff]
    %v96 = vld [vmem:[#allocation2 + $0x10] sm:$0xff]
    %v97 = vld [vmem:[#allocation2 + $0x18] sm:$0xff]
    %v98 = vld [vmem:[#allocation2 + $0x20] sm:$0xff]
    %v99 = vld [vmem:[#allocation2 + $0x28] sm:$0xff]
    %v100 = vld [vmem:[#allocation7] sm:$0xff]
    %v101 = vld [vmem:[#allocation7 + $0x8] sm:$0xff]
    %v102 = vld [vmem:[#allocation7 + $0x10] sm:$0xff]
    %v103 = vld [vmem:[#allocation7 + $0x18] sm:$0xff]
    %v104 = vld [vmem:[#allocation7 + $0x20] sm:$0xff]
    %v105 = vld [vmem:[#allocation7 + $0x28] sm:$0xff]
    %v106 = vld [vmem:[#allocation7 + $0x30] sm:$0xff]
    %v107 = vld [vmem:[#allocation7 + $0x38] sm:$0xff]
    %v108 = vld [vmem:[#allocation7 + $0x40] sm:$0xff]
    %v109 = vld [vmem:[#allocation7 + $0x48] sm:$0xff]
    %v110 = vld [vmem:[#allocation7 + $0x50] sm:$0xff]
    %v111 = vld [vmem:[#allocation7 + $0x58] sm:$0xff]
    %v112 = vld [vmem:[#allocation7 + $0x60] sm:$0xff]
    %v113 = vld [vmem:[#allocation7 + $0x68] sm:$0xff]
    %v114 = vld [vmem:[#allocation7 + $0x70] sm:$0xff]
    %v115 = vld [vmem:[#allocation7 + $0x78] sm:$0xff]
    %v116 = vld [vmem:[#allocation7 + $0x80] sm:$0xff]
    %v117 = vld [vmem:[#allocation7 + $0x88] sm:$0xff]
    %v118 = vld [vmem:[#allocation7 + $0x90] sm:$0xff]
    %v119 = vld [vmem:[#allocation7 + $0x98] sm:$0xff]
    %v120 = vld [vmem:[#allocation7 + $0xa0] sm:$0xff]
    %v121 = vld [vmem:[#allocation7 + $0xa8] sm:$0xff]
    %v122 = vld [vmem:[#allocation7 + $0xb0] sm:$0xff]
    %v123 = vld [vmem:[#allocation7 + $0xb8] sm:$0xff]
    %v124 = vld [vmem:[#allocation7 + $0xc0] sm:$0xff]
    %v125 = vld [vmem:[#allocation7 + $0xc8] sm:$0xff]
    %v126 = vld [vmem:[#allocation7 + $0xd0] sm:$0xff]
    %v127 = vld [vmem:[#allocation7 + $0xd8] sm:$0xff]
    %v128 = vld [vmem:[#allocation7 + $0xe0] sm:$0xff]
    %v129 = vld [vmem:[#allocation7 + $0xe8] sm:$0xff]
    %v130 = vld [vmem:[#allocation7 + $0xf0] sm:$0xff]
    %v131 = vld [vmem:[#allocation7 + $0xf8] sm:$0xff]
    %v132 = vld [vmem:[#allocation7 + $0x100] sm:$0xff]
    %v133 = vld [vmem:[#allocation7 + $0x108] sm:$0xff]
    %v134 = vld [vmem:[#allocation7 + $0x110] sm:$0xff]
    %v135 = vld [vmem:[#allocation7 + $0x118] sm:$0xff]
    %v136 = vld [vmem:[#allocation7 + $0x120] sm:$0xff]
    %v137 = vld [vmem:[#allocation7 + $0x128] sm:$0xff]
    %v138 = vld [vmem:[#allocation7 + $0x130] sm:$0xff]
    %v139 = vld [vmem:[#allocation7 + $0x138] sm:$0xff]
    %v140 = vld [vmem:[#allocation7 + $0x140] sm:$0xff]
    %v141 = vld [vmem:[#allocation7 + $0x148] sm:$0xff]
    %v142 = vld [vmem:[#allocation7 + $0x150] sm:$0xff]
    %v143 = vld [vmem:[#allocation7 + $0x158] sm:$0xff]
    %v144 = vld [vmem:[#allocation7 + $0x160] sm:$0xff]
    %v145 = vld [vmem:[#allocation7 + $0x168] sm:$0xff]
    %v146 = vld [vmem:[#allocation7 + $0x170] sm:$0xff]
    %v147 = vld [vmem:[#allocation7 + $0x178] sm:$0xff]
    %v148 = vld [vmem:[#allocation7 + $0x180] sm:$0xff]
    %v149 = vld [vmem:[#allocation7 + $0x188] sm:$0xff]
    %v150 = vld [vmem:[#allocation7 + $0x190] sm:$0xff]
    %v151 = vld [vmem:[#allocation7 + $0x198] sm:$0xff]
    %v152 = vld [vmem:[#allocation7 + $0x1a0] sm:$0xff]
    %v153 = vld [vmem:[#allocation7 + $0x1a8] sm:$0xff]
    %v154 = vld [vmem:[#allocation7 + $0x1b0] sm:$0xff]
    %v155 = vld [vmem:[#allocation7 + $0x1b8] sm:$0xff]
    %v156 = vld [vmem:[#allocation7 + $0x1c0] sm:$0xff]
    %v157 = vld [vmem:[#allocation7 + $0x1c8] sm:$0xff]
    %v158 = vld [vmem:[#allocation7 + $0x1d0] sm:$0xff]
    %v159 = vld [vmem:[#allocation7 + $0x1d8] sm:$0xff]
    %v160 = vld [vmem:[#allocation7 + $0x1e0] sm:$0xff]
    %v161 = vld [vmem:[#allocation7 + $0x1e8] sm:$0xff]
    %v162 = vld [vmem:[#allocation7 + $0x1f0] sm:$0xff]
    %v163 = vld [vmem:[#allocation7 + $0x1f8] sm:$0xff]
    %164 = vmatpush.msra.mxu0 %v130
    %165 = vmatpush.msra.mxu0 %v128
    %166 = vmatpush.msra.mxu0 %v126
    %167 = vmatpush.msra.mxu0 %v124
    %168 = vmatpush.msra.mxu0 %v122
    %169 = vmatpush.msra.mxu0 %v120
    %170 = vmatpush.msra.mxu0 %v118
    %171 = vmatpush.msra.mxu0 %v116
    %172 = vmatpush.msra.mxu0 %v114
    %173 = vmatpush.msra.mxu0 %v112
    %174 = vmatpush.msra.mxu0 %v110
    %175 = vmatpush.msra.mxu0 %v108
    %176 = vmatpush.msra.mxu0 %v106
    %177 = vmatpush.msra.mxu0 %v104
    %178 = vmatpush.msra.mxu0 %v102
    %179 = vmatpush.msra.mxu0 %v100
    %180 = vmatmul.f32.gmra.mxu0 %v92
    %v181 = vpop.f32.mrf.mxu0
    %v182 = vadd.f32 0.0, %v181
    %183 = vdwg.mxu0
    %184 = vmatpush.msra.mxu0 %v131
    %185 = vmatpush.msra.mxu0 %v129
    %186 = vmatpush.msra.mxu0 %v127
    %187 = vmatpush.msra.mxu0 %v125
    %188 = vmatpush.msra.mxu0 %v123
    %189 = vmatpush.msra.mxu0 %v121
    %190 = vmatpush.msra.mxu0 %v119
    %191 = vmatpush.msra.mxu0 %v117
    %192 = vmatpush.msra.mxu0 %v115
    %193 = vmatpush.msra.mxu0 %v113
    %194 = vmatpush.msra.mxu0 %v111
    %195 = vmatpush.msra.mxu0 %v109
    %196 = vmatpush.msra.mxu0 %v107
    %197 = vmatpush.msra.mxu0 %v105
    %198 = vmatpush.msra.mxu0 %v103
    %199 = vmatpush.msra.mxu0 %v101
    %200 = vmatmul.f32.gmra.mxu0 %v92
    %v201 = vpop.f32.mrf.mxu0
    %v202 = vadd.f32 0.0, %v201
    %203 = vdwg.mxu0
    %204 = vmatpush.msra.mxu0 %v162
    %205 = vmatpush.msra.mxu0 %v160
    %206 = vmatpush.msra.mxu0 %v158
    %207 = vmatpush.msra.mxu0 %v156
    %208 = vmatpush.msra.mxu0 %v154
    %209 = vmatpush.msra.mxu0 %v152
    %210 = vmatpush.msra.mxu0 %v150
    %211 = vmatpush.msra.mxu0 %v148
    %212 = vmatpush.msra.mxu0 %v146
    %213 = vmatpush.msra.mxu0 %v144
    %214 = vmatpush.msra.mxu0 %v142
    %215 = vmatpush.msra.mxu0 %v140
    %216 = vmatpush.msra.mxu0 %v138
    %217 = vmatpush.msra.mxu0 %v136
    %218 = vmatpush.msra.mxu0 %v134
    %219 = vmatpush.msra.mxu0 %v132
    %220 = vmatmul.f32.gmra.mxu0 %v93
    %v221 = vpop.f32.mrf.mxu0
    %v222 = vadd.f32 0.0, %v221
    %223 = vdwg.mxu0
    %224 = vmatpush.msra.mxu0 %v163
    %225 = vmatpush.msra.mxu0 %v161
    %226 = vmatpush.msra.mxu0 %v159
    %227 = vmatpush.msra.mxu0 %v157
    %228 = vmatpush.msra.mxu0 %v155
    %229 = vmatpush.msra.mxu0 %v153
    %230 = vmatpush.msra.mxu0 %v151
    %231 = vmatpush.msra.mxu0 %v149
    %232 = vmatpush.msra.mxu0 %v147
    %233 = vmatpush.msra.mxu0 %v145
    %234 = vmatpush.msra.mxu0 %v143
    %235 = vmatpush.msra.mxu0 %v141
    %236 = vmatpush.msra.mxu0 %v139
    %237 = vmatpush.msra.mxu0 %v137
    %238 = vmatpush.msra.mxu0 %v135
    %239 = vmatpush.msra.mxu0 %v133
    %240 = vmatmul.f32.gmra.mxu0 %v93
    %v241 = vpop.f32.mrf.mxu0
    %v242 = vadd.f32 0.0, %v241
    %243 = vdwg.mxu0
    %v244 = vadd.f32 %v94, %v182
    %v245 = vadd.f32 %v95, %v202
    %v246 = vadd.f32 %v97, %v222
    %v247 = vadd.f32 %v98, %v242
    %v248 = vxor.u32 %v244, 2147483648
    %v249 = vxor.u32 %v245, 2147483648
    %v250 = vxor.u32 %v246, 2147483648
    %v251 = vxor.u32 %v247, 2147483648
    %v252 = vmul.f32 %v248, 1.442695
    %v253 = vpow.pop %v252
    %v254 = vmul.f32 %v249, 1.442695
    %v255 = vpow.pop %v254
    %v256 = vmul.f32 %v250, 1.442695
    %v257 = vpow.pop %v256
    %v258 = vmul.f32 %v251, 1.442695
    %v259 = vpow.pop %v258
    %v260 = vadd.f32 %v253, 1.0
    %v261 = vadd.f32 %v255, 1.0
    %v262 = vadd.f32 %v257, 1.0
    %v263 = vadd.f32 %v259, 1.0
    %v264 = vrcp.pop %v260
    %v265 = vmul.f32 %v260, %v264
    %v266 = vsub.f32 1.0, %v265
    %v267 = vmul.f32 %v264, %v266
    %v268 = vadd.f32 %v264, %v267
    %vm269 = vweird.f32 %v260
    %vm270 = vweird.f32 %v264
    %vm271 = vmor %vm269, %vm270
    %v272 = vsel %vm271, %v264, %v268
    %v273 = vand.u32 2147483647, %v260
    %vm274 = vcmp.eq.f32.partialorder %v273, 8.507059e+37
    %v275 = vand.u32 %v260, 2147483648
    %v276 = vor.u32 1.1754944e-38, %v275
    %v277 = vsel %vm274, %v276, %v272
    %v278 = vmul.f32 1.0, %v277
    %v279 = vrcp.pop %v261
    %v280 = vmul.f32 %v261, %v279
    %v281 = vsub.f32 1.0, %v280
    %v282 = vmul.f32 %v279, %v281
    %v283 = vadd.f32 %v279, %v282
    %vm284 = vweird.f32 %v261
    %vm285 = vweird.f32 %v279
    %vm286 = vmor %vm284, %vm285
    %v287 = vsel %vm286, %v279, %v283
    %v288 = vand.u32 2147483647, %v261
    %vm289 = vcmp.eq.f32.partialorder %v288, 8.507059e+37
    %v290 = vand.u32 %v261, 2147483648
    %v291 = vor.u32 1.1754944e-38, %v290
    %v292 = vsel %vm289, %v291, %v287
    %v293 = vmul.f32 1.0, %v292
    %v294 = vrcp.pop %v262
    %v295 = vmul.f32 %v262, %v294
    %v296 = vsub.f32 1.0, %v295
    %v297 = vmul.f32 %v294, %v296
    %v298 = vadd.f32 %v294, %v297
    %vm299 = vweird.f32 %v262
    %vm300 = vweird.f32 %v294
    %vm301 = vmor %vm299, %vm300
    %v302 = vsel %vm301, %v294, %v298
    %v303 = vand.u32 2147483647, %v262
    %vm304 = vcmp.eq.f32.partialorder %v303, 8.507059e+37
    %v305 = vand.u32 %v262, 2147483648
    %v306 = vor.u32 1.1754944e-38, %v305
    %v307 = vsel %vm304, %v306, %v302
    %v308 = vmul.f32 1.0, %v307
    %v309 = vrcp.pop %v263
    %v310 = vmul.f32 %v263, %v309
    %v311 = vsub.f32 1.0, %v310
    %v312 = vmul.f32 %v309, %v311
    %v313 = vadd.f32 %v309, %v312
    %vm314 = vweird.f32 %v263
    %vm315 = vweird.f32 %v309
    %vm316 = vmor %vm314, %vm315
    %v317 = vsel %vm316, %v309, %v313
    %v318 = vand.u32 2147483647, %v263
    %vm319 = vcmp.eq.f32.partialorder %v318, 8.507059e+37
    %v320 = vand.u32 %v263, 2147483648
    %v321 = vor.u32 1.1754944e-38, %v320
    %v322 = vsel %vm319, %v321, %v317
    %v323 = vmul.f32 1.0, %v322
    %v324 = vmul.f32 %v293, %v92
    %v325 = vmul.f32 %v323, %v93
    %v326 = vld [vmem:[#allocation8] sm:$0xff]
    %v327 = vld [vmem:[#allocation8 + $0x8] sm:$0xff]
    %v328 = vld [vmem:[#allocation8 + $0x10] sm:$0xff]
    %v329 = vld [vmem:[#allocation8 + $0x18] sm:$0xff]
    %v330 = vld [vmem:[#allocation8 + $0x20] sm:$0xff]
    %v331 = vld [vmem:[#allocation8 + $0x28] sm:$0xff]
    %v332 = vld [vmem:[#allocation8 + $0x30] sm:$0xff]
    %v333 = vld [vmem:[#allocation8 + $0x38] sm:$0xff]
    %v334 = vld [vmem:[#allocation8 + $0x40] sm:$0xff]
    %v335 = vld [vmem:[#allocation8 + $0x48] sm:$0xff]
    %v336 = vld [vmem:[#allocation8 + $0x50] sm:$0xff]
    %v337 = vld [vmem:[#allocation8 + $0x58] sm:$0xff]
    %v338 = vld [vmem:[#allocation8 + $0x60] sm:$0xff]
    %v339 = vld [vmem:[#allocation8 + $0x68] sm:$0xff]
    %v340 = vld [vmem:[#allocation8 + $0x70] sm:$0xff]
    %v341 = vld [vmem:[#allocation8 + $0x78] sm:$0xff]
    %v342 = vld [vmem:[#allocation8 + $0x80] sm:$0xff]
    %v343 = vld [vmem:[#allocation8 + $0x88] sm:$0xff]
    %v344 = vld [vmem:[#allocation8 + $0x90] sm:$0xff]
    %v345 = vld [vmem:[#allocation8 + $0x98] sm:$0xff]
    %v346 = vld [vmem:[#allocation8 + $0xa0] sm:$0xff]
    %v347 = vld [vmem:[#allocation8 + $0xa8] sm:$0xff]
    %v348 = vld [vmem:[#allocation8 + $0xb0] sm:$0xff]
    %v349 = vld [vmem:[#allocation8 + $0xb8] sm:$0xff]
    %v350 = vld [vmem:[#allocation8 + $0xc0] sm:$0xff]
    %v351 = vld [vmem:[#allocation8 + $0xc8] sm:$0xff]
    %v352 = vld [vmem:[#allocation8 + $0xd0] sm:$0xff]
    %v353 = vld [vmem:[#allocation8 + $0xd8] sm:$0xff]
    %v354 = vld [vmem:[#allocation8 + $0xe0] sm:$0xff]
    %v355 = vld [vmem:[#allocation8 + $0xe8] sm:$0xff]
    %v356 = vld [vmem:[#allocation8 + $0xf0] sm:$0xff]
    %v357 = vld [vmem:[#allocation8 + $0xf8] sm:$0xff]
    %358 = vmatpush.msra.mxu0 %v341
    %359 = vmatpush.msra.mxu0 %v340
    %360 = vmatpush.msra.mxu0 %v339
    %361 = vmatpush.msra.mxu0 %v338
    %362 = vmatpush.msra.mxu0 %v337
    %363 = vmatpush.msra.mxu0 %v336
    %364 = vmatpush.msra.mxu0 %v335
    %365 = vmatpush.msra.mxu0 %v334
    %366 = vmatpush.msra.mxu0 %v333
    %367 = vmatpush.msra.mxu0 %v332
    %368 = vmatpush.msra.mxu0 %v331
    %369 = vmatpush.msra.mxu0 %v330
    %370 = vmatpush.msra.mxu0 %v329
    %371 = vmatpush.msra.mxu0 %v328
    %372 = vmatpush.msra.mxu0 %v327
    %373 = vmatpush.msra.mxu0 %v326
    %374 = vmatmul.f32.gmra.mxu0 %v324
    %v375 = vpop.f32.mrf.mxu0
    %v376 = vadd.f32 0.0, %v375
    %377 = vdwg.mxu0
    %378 = vmatpush.msra.mxu0 %v357
    %379 = vmatpush.msra.mxu0 %v356
    %380 = vmatpush.msra.mxu0 %v355
    %381 = vmatpush.msra.mxu0 %v354
    %382 = vmatpush.msra.mxu0 %v353
    %383 = vmatpush.msra.mxu0 %v352
    %384 = vmatpush.msra.mxu0 %v351
    %385 = vmatpush.msra.mxu0 %v350
    %386 = vmatpush.msra.mxu0 %v349
    %387 = vmatpush.msra.mxu0 %v348
    %388 = vmatpush.msra.mxu0 %v347
    %389 = vmatpush.msra.mxu0 %v346
    %390 = vmatpush.msra.mxu0 %v345
    %391 = vmatpush.msra.mxu0 %v344
    %392 = vmatpush.msra.mxu0 %v343
    %393 = vmatpush.msra.mxu0 %v342
    %394 = vmatmul.f32.gmra.mxu0 %v325
    %v395 = vpop.f32.mrf.mxu0
    %v396 = vadd.f32 0.0, %v395
    %397 = vdwg.mxu0
    %v398 = vadd.f32 %v96, %v376
    %v399 = vadd.f32 %v99, %v396
    %v400 = vtanh.pop %v398
    %v401 = vtanh.pop %v399
    %v402 = vsub.f32 1.0, %v278
    %v403 = vsub.f32 1.0, %v308
    %v404 = vmul.f32 %v402, %v92
    %v405 = vmul.f32 %v403, %v93
    %v406 = vmul.f32 %v278, %v400
    %v407 = vmul.f32 %v308, %v401
    %v408 = vadd.f32 %v404, %v406
    %v409 = vadd.f32 %v405, %v407
    %410 = vst [vmem:[#allocation10] sm:$0xff] %v409
    %s411 = scalar_lea.vmem [#allocation2], 48
    %v412 = vld [vmem:[%s411] sm:$0xff]
    %v413 = vld [vmem:[%s411 + $0x8] sm:$0xff]
    %v414 = vld [vmem:[%s411 + $0x10] sm:$0xff]
    %v415 = vld [vmem:[%s411 + $0x18] sm:$0xff]
    %v416 = vld [vmem:[%s411 + $0x20] sm:$0xff]
    %v417 = vld [vmem:[%s411 + $0x28] sm:$0xff]
    %v418 = vld [vmem:[#allocation7] sm:$0xff]
    %v419 = vld [vmem:[#allocation7 + $0x8] sm:$0xff]
    %v420 = vld [vmem:[#allocation7 + $0x10] sm:$0xff]
    %v421 = vld [vmem:[#allocation7 + $0x18] sm:$0xff]
    %v422 = vld [vmem:[#allocation7 + $0x20] sm:$0xff]
    %v423 = vld [vmem:[#allocation7 + $0x28] sm:$0xff]
    %v424 = vld [vmem:[#allocation7 + $0x30] sm:$0xff]
    %v425 = vld [vmem:[#allocation7 + $0x38] sm:$0xff]
    %v426 = vld [vmem:[#allocation7 + $0x40] sm:$0xff]
    %v427 = vld [vmem:[#allocation7 + $0x48] sm:$0xff]
    %v428 = vld [vmem:[#allocation7 + $0x50] sm:$0xff]
    %v429 = vld [vmem:[#allocation7 + $0x58] sm:$0xff]
    %v430 = vld [vmem:[#allocation7 + $0x60] sm:$0xff]
    %v431 = vld [vmem:[#allocation7 + $0x68] sm:$0xff]
    %v432 = vld [vmem:[#allocation7 + $0x70] sm:$0xff]
    %v433 = vld [vmem:[#allocation7 + $0x78] sm:$0xff]
    %v434 = vld [vmem:[#allocation7 + $0x80] sm:$0xff]
    %v435 = vld [vmem:[#allocation7 + $0x88] sm:$0xff]
    %v436 = vld [vmem:[#allocation7 + $0x90] sm:$0xff]
    %v437 = vld [vmem:[#allocation7 + $0x98] sm:$0xff]
    %v438 = vld [vmem:[#allocation7 + $0xa0] sm:$0xff]
    %v439 = vld [vmem:[#allocation7 + $0xa8] sm:$0xff]
    %v440 = vld [vmem:[#allocation7 + $0xb0] sm:$0xff]
    %v441 = vld [vmem:[#allocation7 + $0xb8] sm:$0xff]
    %v442 = vld [vmem:[#allocation7 + $0xc0] sm:$0xff]
    %v443 = vld [vmem:[#allocation7 + $0xc8] sm:$0xff]
    %v444 = vld [vmem:[#allocation7 + $0xd0] sm:$0xff]
    %v445 = vld [vmem:[#allocation7 + $0xd8] sm:$0xff]
    %v446 = vld [vmem:[#allocation7 + $0xe0] sm:$0xff]
    %v447 = vld [vmem:[#allocation7 + $0xe8] sm:$0xff]
    %v448 = vld [vmem:[#allocation7 + $0xf0] sm:$0xff]
    %v449 = vld [vmem:[#allocation7 + $0xf8] sm:$0xff]
    %v450 = vld [vmem:[#allocation7 + $0x100] sm:$0xff]
    %v451 = vld [vmem:[#allocation7 + $0x108] sm:$0xff]
    %v452 = vld [vmem:[#allocation7 + $0x110] sm:$0xff]
    %v453 = vld [vmem:[#allocation7 + $0x118] sm:$0xff]
    %v454 = vld [vmem:[#allocation7 + $0x120] sm:$0xff]
    %v455 = vld [vmem:[#allocation7 + $0x128] sm:$0xff]
    %v456 = vld [vmem:[#allocation7 + $0x130] sm:$0xff]
    %v457 = vld [vmem:[#allocation7 + $0x138] sm:$0xff]
    %v458 = vld [vmem:[#allocation7 + $0x140] sm:$0xff]
    %v459 = vld [vmem:[#allocation7 + $0x148] sm:$0xff]
    %v460 = vld [vmem:[#allocation7 + $0x150] sm:$0xff]
    %v461 = vld [vmem:[#allocation7 + $0x158] sm:$0xff]
    %v462 = vld [vmem:[#allocation7 + $0x160] sm:$0xff]
    %v463 = vld [vmem:[#allocation7 + $0x168] sm:$0xff]
    %v464 = vld [vmem:[#allocation7 + $0x170] sm:$0xff]
    %v465 = vld [vmem:[#allocation7 + $0x178] sm:$0xff]
    %v466 = vld [vmem:[#allocation7 + $0x180] sm:$0xff]
    %v467 = vld [vmem:[#allocation7 + $0x188] sm:$0xff]
    %v468 = vld [vmem:[#allocation7 + $0x190] sm:$0xff]
    %v469 = vld [vmem:[#allocation7 + $0x198] sm:$0xff]
    %v470 = vld [vmem:[#allocation7 + $0x1a0] sm:$0xff]
    %v471 = vld [vmem:[#allocation7 + $0x1a8] sm:$0xff]
    %v472 = vld [vmem:[#allocation7 + $0x1b0] sm:$0xff]
    %v473 = vld [vmem:[#allocation7 + $0x1b8] sm:$0xff]
    %v474 = vld [vmem:[#allocation7 + $0x1c0] sm:$0xff]
    %v475 = vld [vmem:[#allocation7 + $0x1c8] sm:$0xff]
    %v476 = vld [vmem:[#allocation7 + $0x1d0] sm:$0xff]
    %v477 = vld [vmem:[#allocation7 + $0x1d8] sm:$0xff]
    %v478 = vld [vmem:[#allocation7 + $0x1e0] sm:$0xff]
    %v479 = vld [vmem:[#allocation7 + $0x1e8] sm:$0xff]
    %v480 = vld [vmem:[#allocation7 + $0x1f0] sm:$0xff]
    %v481 = vld [vmem:[#allocation7 + $0x1f8] sm:$0xff]
    %482 = vmatpush.msra.mxu0 %v448
    %483 = vmatpush.msra.mxu0 %v446
    %484 = vmatpush.msra.mxu0 %v444
    %485 = vmatpush.msra.mxu0 %v442
    %486 = vmatpush.msra.mxu0 %v440
    %487 = vmatpush.msra.mxu0 %v438
    %488 = vmatpush.msra.mxu0 %v436
    %489 = vmatpush.msra.mxu0 %v434
    %490 = vmatpush.msra.mxu0 %v432
    %491 = vmatpush.msra.mxu0 %v430
    %492 = vmatpush.msra.mxu0 %v428
    %493 = vmatpush.msra.mxu0 %v426
    %494 = vmatpush.msra.mxu0 %v424
    %495 = vmatpush.msra.mxu0 %v422
    %496 = vmatpush.msra.mxu0 %v420
    %497 = vmatpush.msra.mxu0 %v418
    %498 = vmatmul.f32.gmra.mxu0 %v408
    %v499 = vpop.f32.mrf.mxu0
    %v500 = vadd.f32 0.0, %v499
    %501 = vdwg.mxu0
    %502 = vmatpush.msra.mxu0 %v449
    %503 = vmatpush.msra.mxu0 %v447
    %504 = vmatpush.msra.mxu0 %v445
    %505 = vmatpush.msra.mxu0 %v443
    %506 = vmatpush.msra.mxu0 %v441
    %507 = vmatpush.msra.mxu0 %v439
    %508 = vmatpush.msra.mxu0 %v437
    %509 = vmatpush.msra.mxu0 %v435
    %510 = vmatpush.msra.mxu0 %v433
    %511 = vmatpush.msra.mxu0 %v431
    %512 = vmatpush.msra.mxu0 %v429
    %513 = vmatpush.msra.mxu0 %v427
    %514 = vmatpush.msra.mxu0 %v425
    %515 = vmatpush.msra.mxu0 %v423
    %516 = vmatpush.msra.mxu0 %v421
    %517 = vmatpush.msra.mxu0 %v419
    %518 = vmatmul.f32.gmra.mxu0 %v408
    %v519 = vpop.f32.mrf.mxu0
    %v520 = vadd.f32 0.0, %v519
    %521 = vdwg.mxu0
    %522 = vmatpush.msra.mxu0 %v480
    %523 = vmatpush.msra.mxu0 %v478
    %524 = vmatpush.msra.mxu0 %v476
    %525 = vmatpush.msra.mxu0 %v474
    %526 = vmatpush.msra.mxu0 %v472
    %527 = vmatpush.msra.mxu0 %v470
    %528 = vmatpush.msra.mxu0 %v468
    %529 = vmatpush.msra.mxu0 %v466
    %530 = vmatpush.msra.mxu0 %v464
    %531 = vmatpush.msra.mxu0 %v462
    %532 = vmatpush.msra.mxu0 %v460
    %533 = vmatpush.msra.mxu0 %v458
    %534 = vmatpush.msra.mxu0 %v456
    %535 = vmatpush.msra.mxu0 %v454
    %536 = vmatpush.msra.mxu0 %v452
    %537 = vmatpush.msra.mxu0 %v450
    %538 = vmatmul.f32.gmra.mxu0 %v409
    %v539 = vpop.f32.mrf.mxu0
    %v540 = vadd.f32 0.0, %v539
    %541 = vdwg.mxu0
    %542 = vmatpush.msra.mxu0 %v481
    %543 = vmatpush.msra.mxu0 %v479
    %544 = vmatpush.msra.mxu0 %v477
    %545 = vmatpush.msra.mxu0 %v475
    %546 = vmatpush.msra.mxu0 %v473
    %547 = vmatpush.msra.mxu0 %v471
    %548 = vmatpush.msra.mxu0 %v469
    %549 = vmatpush.msra.mxu0 %v467
    %550 = vmatpush.msra.mxu0 %v465
    %551 = vmatpush.msra.mxu0 %v463
    %552 = vmatpush.msra.mxu0 %v461
    %553 = vmatpush.msra.mxu0 %v459
    %554 = vmatpush.msra.mxu0 %v457
    %555 = vmatpush.msra.mxu0 %v455
    %556 = vmatpush.msra.mxu0 %v453
    %557 = vmatpush.msra.mxu0 %v451
    %558 = vmatmul.f32.gmra.mxu0 %v409
    %v559 = vpop.f32.mrf.mxu0
    %v560 = vadd.f32 0.0, %v559
    %561 = vdwg.mxu0
    %v562 = vadd.f32 %v412, %v500
    %v563 = vadd.f32 %v413, %v520
    %v564 = vadd.f32 %v415, %v540
    %v565 = vadd.f32 %v416, %v560
    %v566 = vxor.u32 %v562, 2147483648
    %v567 = vxor.u32 %v563, 2147483648
    %v568 = vxor.u32 %v564, 2147483648
    %v569 = vxor.u32 %v565, 2147483648
    %v570 = vmul.f32 %v566, 1.442695
    %v571 = vpow.pop %v570
    %v572 = vmul.f32 %v567, 1.442695
    %v573 = vpow.pop %v572
    %v574 = vmul.f32 %v568, 1.442695
    %v575 = vpow.pop %v574
    %v576 = vmul.f32 %v569, 1.442695
    %v577 = vpow.pop %v576
    %v578 = vadd.f32 %v571, 1.0
    %v579 = vadd.f32 %v573, 1.0
    %v580 = vadd.f32 %v575, 1.0
    %v581 = vadd.f32 %v577, 1.0
    %v582 = vrcp.pop %v578
    %v583 = vmul.f32 %v578, %v582
    %v584 = vsub.f32 1.0, %v583
    %v585 = vmul.f32 %v582, %v584
    %v586 = vadd.f32 %v582, %v585
    %vm587 = vweird.f32 %v578
    %vm588 = vweird.f32 %v582
    %vm589 = vmor %vm587, %vm588
    %v590 = vsel %vm589, %v582, %v586
    %v591 = vand.u32 2147483647, %v578
    %vm592 = vcmp.eq.f32.partialorder %v591, 8.507059e+37
    %v593 = vand.u32 %v578, 2147483648
    %v594 = vor.u32 1.1754944e-38, %v593
    %v595 = vsel %vm592, %v594, %v590
    %v596 = vmul.f32 1.0, %v595
    %v597 = vrcp.pop %v579
    %v598 = vmul.f32 %v579, %v597
    %v599 = vsub.f32 1.0, %v598
    %v600 = vmul.f32 %v597, %v599
    %v601 = vadd.f32 %v597, %v600
    %vm602 = vweird.f32 %v579
    %vm603 = vweird.f32 %v597
    %vm604 = vmor %vm602, %vm603
    %v605 = vsel %vm604, %v597, %v601
    %v606 = vand.u32 2147483647, %v579
    %vm607 = vcmp.eq.f32.partialorder %v606, 8.507059e+37
    %v608 = vand.u32 %v579, 2147483648
    %v609 = vor.u32 1.1754944e-38, %v608
    %v610 = vsel %vm607, %v609, %v605
    %v611 = vmul.f32 1.0, %v610
    %v612 = vrcp.pop %v580
    %v613 = vmul.f32 %v580, %v612
    %v614 = vsub.f32 1.0, %v613
    %v615 = vmul.f32 %v612, %v614
    %v616 = vadd.f32 %v612, %v615
    %vm617 = vweird.f32 %v580
    %vm618 = vweird.f32 %v612
    %vm619 = vmor %vm617, %vm618
    %v620 = vsel %vm619, %v612, %v616
    %v621 = vand.u32 2147483647, %v580
    %vm622 = vcmp.eq.f32.partialorder %v621, 8.507059e+37
    %v623 = vand.u32 %v580, 2147483648
    %v624 = vor.u32 1.1754944e-38, %v623
    %v625 = vsel %vm622, %v624, %v620
    %v626 = vmul.f32 1.0, %v625
    %v627 = vrcp.pop %v581
    %v628 = vmul.f32 %v581, %v627
    %v629 = vsub.f32 1.0, %v628
    %v630 = vmul.f32 %v627, %v629
    %v631 = vadd.f32 %v627, %v630
    %vm632 = vweird.f32 %v581
    %vm633 = vweird.f32 %v627
    %vm634 = vmor %vm632, %vm633
    %v635 = vsel %vm634, %v627, %v631
    %v636 = vand.u32 2147483647, %v581
    %vm637 = vcmp.eq.f32.partialorder %v636, 8.507059e+37
    %v638 = vand.u32 %v581, 2147483648
    %v639 = vor.u32 1.1754944e-38, %v638
    %v640 = vsel %vm637, %v639, %v635
    %v641 = vmul.f32 1.0, %v640
    %v642 = vmul.f32 %v611, %v408
    %v643 = vmul.f32 %v641, %v409
    %v644 = vld [vmem:[#allocation8] sm:$0xff]
    %v645 = vld [vmem:[#allocation8 + $0x8] sm:$0xff]
    %v646 = vld [vmem:[#allocation8 + $0x10] sm:$0xff]
    %v647 = vld [vmem:[#allocation8 + $0x18] sm:$0xff]
    %v648 = vld [vmem:[#allocation8 + $0x20] sm:$0xff]
    %v649 = vld [vmem:[#allocation8 + $0x28] sm:$0xff]
    %v650 = vld [vmem:[#allocation8 + $0x30] sm:$0xff]
    %v651 = vld [vmem:[#allocation8 + $0x38] sm:$0xff]
    %v652 = vld [vmem:[#allocation8 + $0x40] sm:$0xff]
    %v653 = vld [vmem:[#allocation8 + $0x48] sm:$0xff]
    %v654 = vld [vmem:[#allocation8 + $0x50] sm:$0xff]
    %v655 = vld [vmem:[#allocation8 + $0x58] sm:$0xff]
    %v656 = vld [vmem:[#allocation8 + $0x60] sm:$0xff]
    %v657 = vld [vmem:[#allocation8 + $0x68] sm:$0xff]
    %v658 = vld [vmem:[#allocation8 + $0x70] sm:$0xff]
    %v659 = vld [vmem:[#allocation8 + $0x78] sm:$0xff]
    %v660 = vld [vmem:[#allocation8 + $0x80] sm:$0xff]
    %v661 = vld [vmem:[#allocation8 + $0x88] sm:$0xff]
    %v662 = vld [vmem:[#allocation8 + $0x90] sm:$0xff]
    %v663 = vld [vmem:[#allocation8 + $0x98] sm:$0xff]
    %v664 = vld [vmem:[#allocation8 + $0xa0] sm:$0xff]
    %v665 = vld [vmem:[#allocation8 + $0xa8] sm:$0xff]
    %v666 = vld [vmem:[#allocation8 + $0xb0] sm:$0xff]
    %v667 = vld [vmem:[#allocation8 + $0xb8] sm:$0xff]
    %v668 = vld [vmem:[#allocation8 + $0xc0] sm:$0xff]
    %v669 = vld [vmem:[#allocation8 + $0xc8] sm:$0xff]
    %v670 = vld [vmem:[#allocation8 + $0xd0] sm:$0xff]
    %v671 = vld [vmem:[#allocation8 + $0xd8] sm:$0xff]
    %v672 = vld [vmem:[#allocation8 + $0xe0] sm:$0xff]
    %v673 = vld [vmem:[#allocation8 + $0xe8] sm:$0xff]
    %v674 = vld [vmem:[#allocation8 + $0xf0] sm:$0xff]
    %v675 = vld [vmem:[#allocation8 + $0xf8] sm:$0xff]
    %676 = vmatpush.msra.mxu0 %v659
    %677 = vmatpush.msra.mxu0 %v658
    %678 = vmatpush.msra.mxu0 %v657
    %679 = vmatpush.msra.mxu0 %v656
    %680 = vmatpush.msra.mxu0 %v655
    %681 = vmatpush.msra.mxu0 %v654
    %682 = vmatpush.msra.mxu0 %v653
    %683 = vmatpush.msra.mxu0 %v652
    %684 = vmatpush.msra.mxu0 %v651
    %685 = vmatpush.msra.mxu0 %v650
    %686 = vmatpush.msra.mxu0 %v649
    %687 = vmatpush.msra.mxu0 %v648
    %688 = vmatpush.msra.mxu0 %v647
    %689 = vmatpush.msra.mxu0 %v646
    %690 = vmatpush.msra.mxu0 %v645
    %691 = vmatpush.msra.mxu0 %v644
    %692 = vmatmul.f32.gmra.mxu0 %v642
    %v693 = vpop.f32.mrf.mxu0
    %v694 = vadd.f32 0.0, %v693
    %695 = vdwg.mxu0
    %696 = vmatpush.msra.mxu0 %v675
    %697 = vmatpush.msra.mxu0 %v674
    %698 = vmatpush.msra.mxu0 %v673
    %699 = vmatpush.msra.mxu0 %v672
    %700 = vmatpush.msra.mxu0 %v671
    %701 = vmatpush.msra.mxu0 %v670
    %702 = vmatpush.msra.mxu0 %v669
    %703 = vmatpush.msra.mxu0 %v668
    %704 = vmatpush.msra.mxu0 %v667
    %705 = vmatpush.msra.mxu0 %v666
    %706 = vmatpush.msra.mxu0 %v665
    %707 = vmatpush.msra.mxu0 %v664
    %708 = vmatpush.msra.mxu0 %v663
    %709 = vmatpush.msra.mxu0 %v662
    %710 = vmatpush.msra.mxu0 %v661
    %711 = vmatpush.msra.mxu0 %v660
    %712 = vmatmul.f32.gmra.mxu0 %v643
    %v713 = vpop.f32.mrf.mxu0
    %v714 = vadd.f32 0.0, %v713
    %715 = vdwg.mxu0
    %v716 = vadd.f32 %v414, %v694
    %v717 = vadd.f32 %v417, %v714
    %v718 = vtanh.pop %v716
    %v719 = vtanh.pop %v717
    %v720 = vsub.f32 1.0, %v596
    %v721 = vsub.f32 1.0, %v626
    %v722 = vmul.f32 %v720, %v408
    %v723 = vmul.f32 %v721, %v409
    %v724 = vmul.f32 %v596, %v718
    %v725 = vmul.f32 %v626, %v719
    %v726 = vadd.f32 %v722, %v724
    %v727 = vadd.f32 %v723, %v725
    %s728 = scalar_lea.vmem [#allocation10], 8
    %729 = vst [vmem:[%s728] sm:$0xff] %v727
    %s730 = scalar_lea.vmem [#allocation2], 96
    %v731 = vld [vmem:[%s730] sm:$0xff]
    %v732 = vld [vmem:[%s730 + $0x8] sm:$0xff]
    %v733 = vld [vmem:[%s730 + $0x10] sm:$0xff]
    %v734 = vld [vmem:[%s730 + $0x18] sm:$0xff]
    %v735 = vld [vmem:[%s730 + $0x20] sm:$0xff]
    %v736 = vld [vmem:[%s730 + $0x28] sm:$0xff]
    %v737 = vld [vmem:[#allocation7] sm:$0xff]
    %v738 = vld [vmem:[#allocation7 + $0x8] sm:$0xff]
    %v739 = vld [vmem:[#allocation7 + $0x10] sm:$0xff]
    %v740 = vld [vmem:[#allocation7 + $0x18] sm:$0xff]
    %v741 = vld [vmem:[#allocation7 + $0x20] sm:$0xff]
    %v742 = vld [vmem:[#allocation7 + $0x28] sm:$0xff]
    %v743 = vld [vmem:[#allocation7 + $0x30] sm:$0xff]
    %v744 = vld [vmem:[#allocation7 + $0x38] sm:$0xff]
    %v745 = vld [vmem:[#allocation7 + $0x40] sm:$0xff]
    %v746 = vld [vmem:[#allocation7 + $0x48] sm:$0xff]
    %v747 = vld [vmem:[#allocation7 + $0x50] sm:$0xff]
    %v748 = vld [vmem:[#allocation7 + $0x58] sm:$0xff]
    %v749 = vld [vmem:[#allocation7 + $0x60] sm:$0xff]
    %v750 = vld [vmem:[#allocation7 + $0x68] sm:$0xff]
    %v751 = vld [vmem:[#allocation7 + $0x70] sm:$0xff]
    %v752 = vld [vmem:[#allocation7 + $0x78] sm:$0xff]
    %v753 = vld [vmem:[#allocation7 + $0x80] sm:$0xff]
    %v754 = vld [vmem:[#allocation7 + $0x88] sm:$0xff]
    %v755 = vld [vmem:[#allocation7 + $0x90] sm:$0xff]
    %v756 = vld [vmem:[#allocation7 + $0x98] sm:$0xff]
    %v757 = vld [vmem:[#allocation7 + $0xa0] sm:$0xff]
    %v758 = vld [vmem:[#allocation7 + $0xa8] sm:$0xff]
    %v759 = vld [vmem:[#allocation7 + $0xb0] sm:$0xff]
    %v760 = vld [vmem:[#allocation7 + $0xb8] sm:$0xff]
    %v761 = vld [vmem:[#allocation7 + $0xc0] sm:$0xff]
    %v762 = vld [vmem:[#allocation7 + $0xc8] sm:$0xff]
    %v763 = vld [vmem:[#allocation7 + $0xd0] sm:$0xff]
    %v764 = vld [vmem:[#allocation7 + $0xd8] sm:$0xff]
    %v765 = vld [vmem:[#allocation7 + $0xe0] sm:$0xff]
    %v766 = vld [vmem:[#allocation7 + $0xe8] sm:$0xff]
    %v767 = vld [vmem:[#allocation7 + $0xf0] sm:$0xff]
    %v768 = vld [vmem:[#allocation7 + $0xf8] sm:$0xff]
    %v769 = vld [vmem:[#allocation7 + $0x100] sm:$0xff]
    %v770 = vld [vmem:[#allocation7 + $0x108] sm:$0xff]
    %v771 = vld [vmem:[#allocation7 + $0x110] sm:$0xff]
    %v772 = vld [vmem:[#allocation7 + $0x118] sm:$0xff]
    %v773 = vld [vmem:[#allocation7 + $0x120] sm:$0xff]
    %v774 = vld [vmem:[#allocation7 + $0x128] sm:$0xff]
    %v775 = vld [vmem:[#allocation7 + $0x130] sm:$0xff]
    %v776 = vld [vmem:[#allocation7 + $0x138] sm:$0xff]
    %v777 = vld [vmem:[#allocation7 + $0x140] sm:$0xff]
    %v778 = vld [vmem:[#allocation7 + $0x148] sm:$0xff]
    %v779 = vld [vmem:[#allocation7 + $0x150] sm:$0xff]
    %v780 = vld [vmem:[#allocation7 + $0x158] sm:$0xff]
    %v781 = vld [vmem:[#allocation7 + $0x160] sm:$0xff]
    %v782 = vld [vmem:[#allocation7 + $0x168] sm:$0xff]
    %v783 = vld [vmem:[#allocation7 + $0x170] sm:$0xff]
    %v784 = vld [vmem:[#allocation7 + $0x178] sm:$0xff]
    %v785 = vld [vmem:[#allocation7 + $0x180] sm:$0xff]
    %v786 = vld [vmem:[#allocation7 + $0x188] sm:$0xff]
    %v787 = vld [vmem:[#allocation7 + $0x190] sm:$0xff]
    %v788 = vld [vmem:[#allocation7 + $0x198] sm:$0xff]
    %v789 = vld [vmem:[#allocation7 + $0x1a0] sm:$0xff]
    %v790 = vld [vmem:[#allocation7 + $0x1a8] sm:$0xff]
    %v791 = vld [vmem:[#allocation7 + $0x1b0] sm:$0xff]
    %v792 = vld [vmem:[#allocation7 + $0x1b8] sm:$0xff]
    %v793 = vld [vmem:[#allocation7 + $0x1c0] sm:$0xff]
    %v794 = vld [vmem:[#allocation7 + $0x1c8] sm:$0xff]
    %v795 = vld [vmem:[#allocation7 + $0x1d0] sm:$0xff]
    %v796 = vld [vmem:[#allocation7 + $0x1d8] sm:$0xff]
    %v797 = vld [vmem:[#allocation7 + $0x1e0] sm:$0xff]
    %v798 = vld [vmem:[#allocation7 + $0x1e8] sm:$0xff]
    %v799 = vld [vmem:[#allocation7 + $0x1f0] sm:$0xff]
    %v800 = vld [vmem:[#allocation7 + $0x1f8] sm:$0xff]
    %801 = vmatpush.msra.mxu0 %v767
    %802 = vmatpush.msra.mxu0 %v765
    %803 = vmatpush.msra.mxu0 %v763
    %804 = vmatpush.msra.mxu0 %v761
    %805 = vmatpush.msra.mxu0 %v759
    %806 = vmatpush.msra.mxu0 %v757
    %807 = vmatpush.msra.mxu0 %v755
    %808 = vmatpush.msra.mxu0 %v753
    %809 = vmatpush.msra.mxu0 %v751
    %810 = vmatpush.msra.mxu0 %v749
    %811 = vmatpush.msra.mxu0 %v747
    %812 = vmatpush.msra.mxu0 %v745
    %813 = vmatpush.msra.mxu0 %v743
    %814 = vmatpush.msra.mxu0 %v741
    %815 = vmatpush.msra.mxu0 %v739
    %816 = vmatpush.msra.mxu0 %v737
    %817 = vmatmul.f32.gmra.mxu0 %v726
    %v818 = vpop.f32.mrf.mxu0
    %v819 = vadd.f32 0.0, %v818
    %820 = vdwg.mxu0
    %821 = vmatpush.msra.mxu0 %v768
    %822 = vmatpush.msra.mxu0 %v766
    %823 = vmatpush.msra.mxu0 %v764
    %824 = vmatpush.msra.mxu0 %v762
    %825 = vmatpush.msra.mxu0 %v760
    %826 = vmatpush.msra.mxu0 %v758
    %827 = vmatpush.msra.mxu0 %v756
    %828 = vmatpush.msra.mxu0 %v754
    %829 = vmatpush.msra.mxu0 %v752
    %830 = vmatpush.msra.mxu0 %v750
    %831 = vmatpush.msra.mxu0 %v748
    %832 = vmatpush.msra.mxu0 %v746
    %833 = vmatpush.msra.mxu0 %v744
    %834 = vmatpush.msra.mxu0 %v742
    %835 = vmatpush.msra.mxu0 %v740
    %836 = vmatpush.msra.mxu0 %v738
    %837 = vmatmul.f32.gmra.mxu0 %v726
    %v838 = vpop.f32.mrf.mxu0
    %v839 = vadd.f32 0.0, %v838
    %840 = vdwg.mxu0
    %841 = vmatpush.msra.mxu0 %v799
    %842 = vmatpush.msra.mxu0 %v797
    %843 = vmatpush.msra.mxu0 %v795
    %844 = vmatpush.msra.mxu0 %v793
    %845 = vmatpush.msra.mxu0 %v791
    %846 = vmatpush.msra.mxu0 %v789
    %847 = vmatpush.msra.mxu0 %v787
    %848 = vmatpush.msra.mxu0 %v785
    %849 = vmatpush.msra.mxu0 %v783
    %850 = vmatpush.msra.mxu0 %v781
    %851 = vmatpush.msra.mxu0 %v779
    %852 = vmatpush.msra.mxu0 %v777
    %853 = vmatpush.msra.mxu0 %v775
    %854 = vmatpush.msra.mxu0 %v773
    %855 = vmatpush.msra.mxu0 %v771
    %856 = vmatpush.msra.mxu0 %v769
    %857 = vmatmul.f32.gmra.mxu0 %v727
    %v858 = vpop.f32.mrf.mxu0
    %v859 = vadd.f32 0.0, %v858
    %860 = vdwg.mxu0
    %861 = vmatpush.msra.mxu0 %v800
    %862 = vmatpush.msra.mxu0 %v798
    %863 = vmatpush.msra.mxu0 %v796
    %864 = vmatpush.msra.mxu0 %v794
    %865 = vmatpush.msra.mxu0 %v792
    %866 = vmatpush.msra.mxu0 %v790
    %867 = vmatpush.msra.mxu0 %v788
    %868 = vmatpush.msra.mxu0 %v786
    %869 = vmatpush.msra.mxu0 %v784
    %870 = vmatpush.msra.mxu0 %v782
    %871 = vmatpush.msra.mxu0 %v780
    %872 = vmatpush.msra.mxu0 %v778
    %873 = vmatpush.msra.mxu0 %v776
    %874 = vmatpush.msra.mxu0 %v774
    %875 = vmatpush.msra.mxu0 %v772
    %876 = vmatpush.msra.mxu0 %v770
    %877 = vmatmul.f32.gmra.mxu0 %v727
    %v878 = vpop.f32.mrf.mxu0
    %v879 = vadd.f32 0.0, %v878
    %880 = vdwg.mxu0
    %v881 = vadd.f32 %v731, %v819
    %v882 = vadd.f32 %v732, %v839
    %v883 = vadd.f32 %v734, %v859
    %v884 = vadd.f32 %v735, %v879
    %v885 = vxor.u32 %v881, 2147483648
    %v886 = vxor.u32 %v882, 2147483648
    %v887 = vxor.u32 %v883, 2147483648
    %v888 = vxor.u32 %v884, 2147483648
    %v889 = vmul.f32 %v885, 1.442695
    %v890 = vpow.pop %v889
    %v891 = vmul.f32 %v886, 1.442695
    %v892 = vpow.pop %v891
    %v893 = vmul.f32 %v887, 1.442695
    %v894 = vpow.pop %v893
    %v895 = vmul.f32 %v888, 1.442695
    %v896 = vpow.pop %v895
    %v897 = vadd.f32 %v890, 1.0
    %v898 = vadd.f32 %v892, 1.0
    %v899 = vadd.f32 %v894, 1.0
    %v900 = vadd.f32 %v896, 1.0
    %v901 = vrcp.pop %v897
    %v902 = vmul.f32 %v897, %v901
    %v903 = vsub.f32 1.0, %v902
    %v904 = vmul.f32 %v901, %v903
    %v905 = vadd.f32 %v901, %v904
    %vm906 = vweird.f32 %v897
    %vm907 = vweird.f32 %v901
    %vm908 = vmor %vm906, %vm907
    %v909 = vsel %vm908, %v901, %v905
    %v910 = vand.u32 2147483647, %v897
    %vm911 = vcmp.eq.f32.partialorder %v910, 8.507059e+37
    %v912 = vand.u32 %v897, 2147483648
    %v913 = vor.u32 1.1754944e-38, %v912
    %v914 = vsel %vm911, %v913, %v909
    %v915 = vmul.f32 1.0, %v914
    %v916 = vrcp.pop %v898
    %v917 = vmul.f32 %v898, %v916
    %v918 = vsub.f32 1.0, %v917
    %v919 = vmul.f32 %v916, %v918
    %v920 = vadd.f32 %v916, %v919
    %vm921 = vweird.f32 %v898
    %vm922 = vweird.f32 %v916
    %vm923 = vmor %vm921, %vm922
    %v924 = vsel %vm923, %v916, %v920
    %v925 = vand.u32 2147483647, %v898
    %vm926 = vcmp.eq.f32.partialorder %v925, 8.507059e+37
    %v927 = vand.u32 %v898, 2147483648
    %v928 = vor.u32 1.1754944e-38, %v927
    %v929 = vsel %vm926, %v928, %v924
    %v930 = vmul.f32 1.0, %v929
    %v931 = vrcp.pop %v899
    %v932 = vmul.f32 %v899, %v931
    %v933 = vsub.f32 1.0, %v932
    %v934 = vmul.f32 %v931, %v933
    %v935 = vadd.f32 %v931, %v934
    %vm936 = vweird.f32 %v899
    %vm937 = vweird.f32 %v931
    %vm938 = vmor %vm936, %vm937
    %v939 = vsel %vm938, %v931, %v935
    %v940 = vand.u32 2147483647, %v899
    %vm941 = vcmp.eq.f32.partialorder %v940, 8.507059e+37
    %v942 = vand.u32 %v899, 2147483648
    %v943 = vor.u32 1.1754944e-38, %v942
    %v944 = vsel %vm941, %v943, %v939
    %v945 = vmul.f32 1.0, %v944
    %v946 = vrcp.pop %v900
    %v947 = vmul.f32 %v900, %v946
    %v948 = vsub.f32 1.0, %v947
    %v949 = vmul.f32 %v946, %v948
    %v950 = vadd.f32 %v946, %v949
    %vm951 = vweird.f32 %v900
    %vm952 = vweird.f32 %v946
    %vm953 = vmor %vm951, %vm952
    %v954 = vsel %vm953, %v946, %v950
    %v955 = vand.u32 2147483647, %v900
    %vm956 = vcmp.eq.f32.partialorder %v955, 8.507059e+37
    %v957 = vand.u32 %v900, 2147483648
    %v958 = vor.u32 1.1754944e-38, %v957
    %v959 = vsel %vm956, %v958, %v954
    %v960 = vmul.f32 1.0, %v959
    %v961 = vmul.f32 %v930, %v726
    %v962 = vmul.f32 %v960, %v727
    %v963 = vld [vmem:[#allocation8] sm:$0xff]
    %v964 = vld [vmem:[#allocation8 + $0x8] sm:$0xff]
    %v965 = vld [vmem:[#allocation8 + $0x10] sm:$0xff]
    %v966 = vld [vmem:[#allocation8 + $0x18] sm:$0xff]
    %v967 = vld [vmem:[#allocation8 + $0x20] sm:$0xff]
    %v968 = vld [vmem:[#allocation8 + $0x28] sm:$0xff]
    %v969 = vld [vmem:[#allocation8 + $0x30] sm:$0xff]
    %v970 = vld [vmem:[#allocation8 + $0x38] sm:$0xff]
    %v971 = vld [vmem:[#allocation8 + $0x40] sm:$0xff]
    %v972 = vld [vmem:[#allocation8 + $0x48] sm:$0xff]
    %v973 = vld [vmem:[#allocation8 + $0x50] sm:$0xff]
    %v974 = vld [vmem:[#allocation8 + $0x58] sm:$0xff]
    %v975 = vld [vmem:[#allocation8 + $0x60] sm:$0xff]
    %v976 = vld [vmem:[#allocation8 + $0x68] sm:$0xff]
    %v977 = vld [vmem:[#allocation8 + $0x70] sm:$0xff]
    %v978 = vld [vmem:[#allocation8 + $0x78] sm:$0xff]
    %v979 = vld [vmem:[#allocation8 + $0x80] sm:$0xff]
    %v980 = vld [vmem:[#allocation8 + $0x88] sm:$0xff]
    %v981 = vld [vmem:[#allocation8 + $0x90] sm:$0xff]
    %v982 = vld [vmem:[#allocation8 + $0x98] sm:$0xff]
    %v983 = vld [vmem:[#allocation8 + $0xa0] sm:$0xff]
    %v984 = vld [vmem:[#allocation8 + $0xa8] sm:$0xff]
    %v985 = vld [vmem:[#allocation8 + $0xb0] sm:$0xff]
    %v986 = vld [vmem:[#allocation8 + $0xb8] sm:$0xff]
    %v987 = vld [vmem:[#allocation8 + $0xc0] sm:$0xff]
    %v988 = vld [vmem:[#allocation8 + $0xc8] sm:$0xff]
    %v989 = vld [vmem:[#allocation8 + $0xd0] sm:$0xff]
    %v990 = vld [vmem:[#allocation8 + $0xd8] sm:$0xff]
    %v991 = vld [vmem:[#allocation8 + $0xe0] sm:$0xff]
    %v992 = vld [vmem:[#allocation8 + $0xe8] sm:$0xff]
    %v993 = vld [vmem:[#allocation8 + $0xf0] sm:$0xff]
    %v994 = vld [vmem:[#allocation8 + $0xf8] sm:$0xff]
    %995 = vmatpush.msra.mxu0 %v978
    %996 = vmatpush.msra.mxu0 %v977
    %997 = vmatpush.msra.mxu0 %v976
    %998 = vmatpush.msra.mxu0 %v975
    %999 = vmatpush.msra.mxu0 %v974
    %1000 = vmatpush.msra.mxu0 %v973
    %1001 = vmatpush.msra.mxu0 %v972
    %1002 = vmatpush.msra.mxu0 %v971
    %1003 = vmatpush.msra.mxu0 %v970
    %1004 = vmatpush.msra.mxu0 %v969
    %1005 = vmatpush.msra.mxu0 %v968
    %1006 = vmatpush.msra.mxu0 %v967
    %1007 = vmatpush.msra.mxu0 %v966
    %1008 = vmatpush.msra.mxu0 %v965
    %1009 = vmatpush.msra.mxu0 %v964
    %1010 = vmatpush.msra.mxu0 %v963
    %1011 = vmatmul.f32.gmra.mxu0 %v961
    %v1012 = vpop.f32.mrf.mxu0
    %v1013 = vadd.f32 0.0, %v1012
    %1014 = vdwg.mxu0
    %1015 = vmatpush.msra.mxu0 %v994
    %1016 = vmatpush.msra.mxu0 %v993
    %1017 = vmatpush.msra.mxu0 %v992
    %1018 = vmatpush.msra.mxu0 %v991
    %1019 = vmatpush.msra.mxu0 %v990
    %1020 = vmatpush.msra.mxu0 %v989
    %1021 = vmatpush.msra.mxu0 %v988
    %1022 = vmatpush.msra.mxu0 %v987
    %1023 = vmatpush.msra.mxu0 %v986
    %1024 = vmatpush.msra.mxu0 %v985
    %1025 = vmatpush.msra.mxu0 %v984
    %1026 = vmatpush.msra.mxu0 %v983
    %1027 = vmatpush.msra.mxu0 %v982
    %1028 = vmatpush.msra.mxu0 %v981
    %1029 = vmatpush.msra.mxu0 %v980
    %1030 = vmatpush.msra.mxu0 %v979
    %1031 = vmatmul.f32.gmra.mxu0 %v962
    %v1032 = vpop.f32.mrf.mxu0
    %v1033 = vadd.f32 0.0, %v1032
    %1034 = vdwg.mxu0
    %v1035 = vadd.f32 %v733, %v1013
    %v1036 = vadd.f32 %v736, %v1033
    %v1037 = vtanh.pop %v1035
    %v1038 = vtanh.pop %v1036
    %v1039 = vsub.f32 1.0, %v915
    %v1040 = vsub.f32 1.0, %v945
    %v1041 = vmul.f32 %v1039, %v726
    %v1042 = vmul.f32 %v1040, %v727
    %v1043 = vmul.f32 %v915, %v1037
    %v1044 = vmul.f32 %v945, %v1038
    %v1045 = vadd.f32 %v1041, %v1043
    %v1046 = vadd.f32 %v1042, %v1044
    %s1047 = scalar_lea.vmem [#allocation10], 16
    %1048 = vst [vmem:[%s1047] sm:$0xff] %v1046
    %s1049 = scalar_lea.vmem [#allocation2], 144
    %v1050 = vld [vmem:[%s1049] sm:$0xff]
    %v1051 = vld [vmem:[%s1049 + $0x8] sm:$0xff]
    %v1052 = vld [vmem:[%s1049 + $0x10] sm:$0xff]
    %v1053 = vld [vmem:[%s1049 + $0x18] sm:$0xff]
    %v1054 = vld [vmem:[%s1049 + $0x20] sm:$0xff]
    %v1055 = vld [vmem:[%s1049 + $0x28] sm:$0xff]
    %v1056 = vld [vmem:[#allocation7] sm:$0xff]
    %v1057 = vld [vmem:[#allocation7 + $0x8] sm:$0xff]
    %v1058 = vld [vmem:[#allocation7 + $0x10] sm:$0xff]
    %v1059 = vld [vmem:[#allocation7 + $0x18] sm:$0xff]
    %v1060 = vld [vmem:[#allocation7 + $0x20] sm:$0xff]
    %v1061 = vld [vmem:[#allocation7 + $0x28] sm:$0xff]
    %v1062 = vld [vmem:[#allocation7 + $0x30] sm:$0xff]
    %v1063 = vld [vmem:[#allocation7 + $0x38] sm:$0xff]
    %v1064 = vld [vmem:[#allocation7 + $0x40] sm:$0xff]
    %v1065 = vld [vmem:[#allocation7 + $0x48] sm:$0xff]
    %v1066 = vld [vmem:[#allocation7 + $0x50] sm:$0xff]
    %v1067 = vld [vmem:[#allocation7 + $0x58] sm:$0xff]
    %v1068 = vld [vmem:[#allocation7 + $0x60] sm:$0xff]
    %v1069 = vld [vmem:[#allocation7 + $0x68] sm:$0xff]
    %v1070 = vld [vmem:[#allocation7 + $0x70] sm:$0xff]
    %v1071 = vld [vmem:[#allocation7 + $0x78] sm:$0xff]
    %v1072 = vld [vmem:[#allocation7 + $0x80] sm:$0xff]
    %v1073 = vld [vmem:[#allocation7 + $0x88] sm:$0xff]
    %v1074 = vld [vmem:[#allocation7 + $0x90] sm:$0xff]
    %v1075 = vld [vmem:[#allocation7 + $0x98] sm:$0xff]
    %v1076 = vld [vmem:[#allocation7 + $0xa0] sm:$0xff]
    %v1077 = vld [vmem:[#allocation7 + $0xa8] sm:$0xff]
    %v1078 = vld [vmem:[#allocation7 + $0xb0] sm:$0xff]
    %v1079 = vld [vmem:[#allocation7 + $0xb8] sm:$0xff]
    %v1080 = vld [vmem:[#allocation7 + $0xc0] sm:$0xff]
    %v1081 = vld [vmem:[#allocation7 + $0xc8] sm:$0xff]
    %v1082 = vld [vmem:[#allocation7 + $0xd0] sm:$0xff]
    %v1083 = vld [vmem:[#allocation7 + $0xd8] sm:$0xff]
    %v1084 = vld [vmem:[#allocation7 + $0xe0] sm:$0xff]
    %v1085 = vld [vmem:[#allocation7 + $0xe8] sm:$0xff]
    %v1086 = vld [vmem:[#allocation7 + $0xf0] sm:$0xff]
    %v1087 = vld [vmem:[#allocation7 + $0xf8] sm:$0xff]
    %v1088 = vld [vmem:[#allocation7 + $0x100] sm:$0xff]
    %v1089 = vld [vmem:[#allocation7 + $0x108] sm:$0xff]
    %v1090 = vld [vmem:[#allocation7 + $0x110] sm:$0xff]
    %v1091 = vld [vmem:[#allocation7 + $0x118] sm:$0xff]
    %v1092 = vld [vmem:[#allocation7 + $0x120] sm:$0xff]
    %v1093 = vld [vmem:[#allocation7 + $0x128] sm:$0xff]
    %v1094 = vld [vmem:[#allocation7 + $0x130] sm:$0xff]
    %v1095 = vld [vmem:[#allocation7 + $0x138] sm:$0xff]
    %v1096 = vld [vmem:[#allocation7 + $0x140] sm:$0xff]
    %v1097 = vld [vmem:[#allocation7 + $0x148] sm:$0xff]
    %v1098 = vld [vmem:[#allocation7 + $0x150] sm:$0xff]
    %v1099 = vld [vmem:[#allocation7 + $0x158] sm:$0xff]
    %v1100 = vld [vmem:[#allocation7 + $0x160] sm:$0xff]
    %v1101 = vld [vmem:[#allocation7 + $0x168] sm:$0xff]
    %v1102 = vld [vmem:[#allocation7 + $0x170] sm:$0xff]
    %v1103 = vld [vmem:[#allocation7 + $0x178] sm:$0xff]
    %v1104 = vld [vmem:[#allocation7 + $0x180] sm:$0xff]
    %v1105 = vld [vmem:[#allocation7 + $0x188] sm:$0xff]
    %v1106 = vld [vmem:[#allocation7 + $0x190] sm:$0xff]
    %v1107 = vld [vmem:[#allocation7 + $0x198] sm:$0xff]
    %v1108 = vld [vmem:[#allocation7 + $0x1a0] sm:$0xff]
    %v1109 = vld [vmem:[#allocation7 + $0x1a8] sm:$0xff]
    %v1110 = vld [vmem:[#allocation7 + $0x1b0] sm:$0xff]
    %v1111 = vld [vmem:[#allocation7 + $0x1b8] sm:$0xff]
    %v1112 = vld [vmem:[#allocation7 + $0x1c0] sm:$0xff]
    %v1113 = vld [vmem:[#allocation7 + $0x1c8] sm:$0xff]
    %v1114 = vld [vmem:[#allocation7 + $0x1d0] sm:$0xff]
    %v1115 = vld [vmem:[#allocation7 + $0x1d8] sm:$0xff]
    %v1116 = vld [vmem:[#allocation7 + $0x1e0] sm:$0xff]
    %v1117 = vld [vmem:[#allocation7 + $0x1e8] sm:$0xff]
    %v1118 = vld [vmem:[#allocation7 + $0x1f0] sm:$0xff]
    %v1119 = vld [vmem:[#allocation7 + $0x1f8] sm:$0xff]
    %1120 = vmatpush.msra.mxu0 %v1086
    %1121 = vmatpush.msra.mxu0 %v1084
    %1122 = vmatpush.msra.mxu0 %v1082
    %1123 = vmatpush.msra.mxu0 %v1080
    %1124 = vmatpush.msra.mxu0 %v1078
    %1125 = vmatpush.msra.mxu0 %v1076
    %1126 = vmatpush.msra.mxu0 %v1074
    %1127 = vmatpush.msra.mxu0 %v1072
    %1128 = vmatpush.msra.mxu0 %v1070
    %1129 = vmatpush.msra.mxu0 %v1068
    %1130 = vmatpush.msra.mxu0 %v1066
    %1131 = vmatpush.msra.mxu0 %v1064
    %1132 = vmatpush.msra.mxu0 %v1062
    %1133 = vmatpush.msra.mxu0 %v1060
    %1134 = vmatpush.msra.mxu0 %v1058
    %1135 = vmatpush.msra.mxu0 %v1056
    %1136 = vmatmul.f32.gmra.mxu0 %v1045
    %v1137 = vpop.f32.mrf.mxu0
    %v1138 = vadd.f32 0.0, %v1137
    %1139 = vdwg.mxu0
    %1140 = vmatpush.msra.mxu0 %v1087
    %1141 = vmatpush.msra.mxu0 %v1085
    %1142 = vmatpush.msra.mxu0 %v1083
    %1143 = vmatpush.msra.mxu0 %v1081
    %1144 = vmatpush.msra.mxu0 %v1079
    %1145 = vmatpush.msra.mxu0 %v1077
    %1146 = vmatpush.msra.mxu0 %v1075
    %1147 = vmatpush.msra.mxu0 %v1073
    %1148 = vmatpush.msra.mxu0 %v1071
    %1149 = vmatpush.msra.mxu0 %v1069
    %1150 = vmatpush.msra.mxu0 %v1067
    %1151 = vmatpush.msra.mxu0 %v1065
    %1152 = vmatpush.msra.mxu0 %v1063
    %1153 = vmatpush.msra.mxu0 %v1061
    %1154 = vmatpush.msra.mxu0 %v1059
    %1155 = vmatpush.msra.mxu0 %v1057
    %1156 = vmatmul.f32.gmra.mxu0 %v1045
    %v1157 = vpop.f32.mrf.mxu0
    %v1158 = vadd.f32 0.0, %v1157
    %1159 = vdwg.mxu0
    %1160 = vmatpush.msra.mxu0 %v1118
    %1161 = vmatpush.msra.mxu0 %v1116
    %1162 = vmatpush.msra.mxu0 %v1114
    %1163 = vmatpush.msra.mxu0 %v1112
    %1164 = vmatpush.msra.mxu0 %v1110
    %1165 = vmatpush.msra.mxu0 %v1108
    %1166 = vmatpush.msra.mxu0 %v1106
    %1167 = vmatpush.msra.mxu0 %v1104
    %1168 = vmatpush.msra.mxu0 %v1102
    %1169 = vmatpush.msra.mxu0 %v1100
    %1170 = vmatpush.msra.mxu0 %v1098
    %1171 = vmatpush.msra.mxu0 %v1096
    %1172 = vmatpush.msra.mxu0 %v1094
    %1173 = vmatpush.msra.mxu0 %v1092
    %1174 = vmatpush.msra.mxu0 %v1090
    %1175 = vmatpush.msra.mxu0 %v1088
    %1176 = vmatmul.f32.gmra.mxu0 %v1046
    %v1177 = vpop.f32.mrf.mxu0
    %v1178 = vadd.f32 0.0, %v1177
    %1179 = vdwg.mxu0
    %1180 = vmatpush.msra.mxu0 %v1119
    %1181 = vmatpush.msra.mxu0 %v1117
    %1182 = vmatpush.msra.mxu0 %v1115
    %1183 = vmatpush.msra.mxu0 %v1113
    %1184 = vmatpush.msra.mxu0 %v1111
    %1185 = vmatpush.msra.mxu0 %v1109
    %1186 = vmatpush.msra.mxu0 %v1107
    %1187 = vmatpush.msra.mxu0 %v1105
    %1188 = vmatpush.msra.mxu0 %v1103
    %1189 = vmatpush.msra.mxu0 %v1101
    %1190 = vmatpush.msra.mxu0 %v1099
    %1191 = vmatpush.msra.mxu0 %v1097
    %1192 = vmatpush.msra.mxu0 %v1095
    %1193 = vmatpush.msra.mxu0 %v1093
    %1194 = vmatpush.msra.mxu0 %v1091
    %1195 = vmatpush.msra.mxu0 %v1089
    %1196 = vmatmul.f32.gmra.mxu0 %v1046
    %v1197 = vpop.f32.mrf.mxu0
    %v1198 = vadd.f32 0.0, %v1197
    %1199 = vdwg.mxu0
    %v1200 = vadd.f32 %v1050, %v1138
    %v1201 = vadd.f32 %v1051, %v1158
    %v1202 = vadd.f32 %v1053, %v1178
    %v1203 = vadd.f32 %v1054, %v1198
    %v1204 = vxor.u32 %v1200, 2147483648
    %v1205 = vxor.u32 %v1201, 2147483648
    %v1206 = vxor.u32 %v1202, 2147483648
    %v1207 = vxor.u32 %v1203, 2147483648
    %v1208 = vmul.f32 %v1204, 1.442695
    %v1209 = vpow.pop %v1208
    %v1210 = vmul.f32 %v1205, 1.442695
    %v1211 = vpow.pop %v1210
    %v1212 = vmul.f32 %v1206, 1.442695
    %v1213 = vpow.pop %v1212
    %v1214 = vmul.f32 %v1207, 1.442695
    %v1215 = vpow.pop %v1214
    %v1216 = vadd.f32 %v1209, 1.0
    %v1217 = vadd.f32 %v1211, 1.0
    %v1218 = vadd.f32 %v1213, 1.0
    %v1219 = vadd.f32 %v1215, 1.0
    %v1220 = vrcp.pop %v1216
    %v1221 = vmul.f32 %v1216, %v1220
    %v1222 = vsub.f32 1.0, %v1221
    %v1223 = vmul.f32 %v1220, %v1222
    %v1224 = vadd.f32 %v1220, %v1223
    %vm1225 = vweird.f32 %v1216
    %vm1226 = vweird.f32 %v1220
    %vm1227 = vmor %vm1225, %vm1226
    %v1228 = vsel %vm1227, %v1220, %v1224
    %v1229 = vand.u32 2147483647, %v1216
    %vm1230 = vcmp.eq.f32.partialorder %v1229, 8.507059e+37
    %v1231 = vand.u32 %v1216, 2147483648
    %v1232 = vor.u32 1.1754944e-38, %v1231
    %v1233 = vsel %vm1230, %v1232, %v1228
    %v1234 = vmul.f32 1.0, %v1233
    %v1235 = vrcp.pop %v1217
    %v1236 = vmul.f32 %v1217, %v1235
    %v1237 = vsub.f32 1.0, %v1236
    %v1238 = vmul.f32 %v1235, %v1237
    %v1239 = vadd.f32 %v1235, %v1238
    %vm1240 = vweird.f32 %v1217
    %vm1241 = vweird.f32 %v1235
    %vm1242 = vmor %vm1240, %vm1241
    %v1243 = vsel %vm1242, %v1235, %v1239
    %v1244 = vand.u32 2147483647, %v1217
    %vm1245 = vcmp.eq.f32.partialorder %v1244, 8.507059e+37
    %v1246 = vand.u32 %v1217, 2147483648
    %v1247 = vor.u32 1.1754944e-38, %v1246
    %v1248 = vsel %vm1245, %v1247, %v1243
    %v1249 = vmul.f32 1.0, %v1248
    %v1250 = vrcp.pop %v1218
    %v1251 = vmul.f32 %v1218, %v1250
    %v1252 = vsub.f32 1.0, %v1251
    %v1253 = vmul.f32 %v1250, %v1252
    %v1254 = vadd.f32 %v1250, %v1253
    %vm1255 = vweird.f32 %v1218
    %vm1256 = vweird.f32 %v1250
    %vm1257 = vmor %vm1255, %vm1256
    %v1258 = vsel %vm1257, %v1250, %v1254
    %v1259 = vand.u32 2147483647, %v1218
    %vm1260 = vcmp.eq.f32.partialorder %v1259, 8.507059e+37
    %v1261 = vand.u32 %v1218, 2147483648
    %v1262 = vor.u32 1.1754944e-38, %v1261
    %v1263 = vsel %vm1260, %v1262, %v1258
    %v1264 = vmul.f32 1.0, %v1263
    %v1265 = vrcp.pop %v1219
    %v1266 = vmul.f32 %v1219, %v1265
    %v1267 = vsub.f32 1.0, %v1266
    %v1268 = vmul.f32 %v1265, %v1267
    %v1269 = vadd.f32 %v1265, %v1268
    %vm1270 = vweird.f32 %v1219
    %vm1271 = vweird.f32 %v1265
    %vm1272 = vmor %vm1270, %vm1271
    %v1273 = vsel %vm1272, %v1265, %v1269
    %v1274 = vand.u32 2147483647, %v1219
    %vm1275 = vcmp.eq.f32.partialorder %v1274, 8.507059e+37
    %v1276 = vand.u32 %v1219, 2147483648
    %v1277 = vor.u32 1.1754944e-38, %v1276
    %v1278 = vsel %vm1275, %v1277, %v1273
    %v1279 = vmul.f32 1.0, %v1278
    %v1280 = vmul.f32 %v1249, %v1045
    %v1281 = vmul.f32 %v1279, %v1046
    %v1282 = vld [vmem:[#allocation8] sm:$0xff]
    %v1283 = vld [vmem:[#allocation8 + $0x8] sm:$0xff]
    %v1284 = vld [vmem:[#allocation8 + $0x10] sm:$0xff]
    %v1285 = vld [vmem:[#allocation8 + $0x18] sm:$0xff]
    %v1286 = vld [vmem:[#allocation8 + $0x20] sm:$0xff]
    %v1287 = vld [vmem:[#allocation8 + $0x28] sm:$0xff]
    %v1288 = vld [vmem:[#allocation8 + $0x30] sm:$0xff]
    %v1289 = vld [vmem:[#allocation8 + $0x38] sm:$0xff]
    %v1290 = vld [vmem:[#allocation8 + $0x40] sm:$0xff]
    %v1291 = vld [vmem:[#allocation8 + $0x48] sm:$0xff]
    %v1292 = vld [vmem:[#allocation8 + $0x50] sm:$0xff]
    %v1293 = vld [vmem:[#allocation8 + $0x58] sm:$0xff]
    %v1294 = vld [vmem:[#allocation8 + $0x60] sm:$0xff]
    %v1295 = vld [vmem:[#allocation8 + $0x68] sm:$0xff]
    %v1296 = vld [vmem:[#allocation8 + $0x70] sm:$0xff]
    %v1297 = vld [vmem:[#allocation8 + $0x78] sm:$0xff]
    %v1298 = vld [vmem:[#allocation8 + $0x80] sm:$0xff]
    %v1299 = vld [vmem:[#allocation8 + $0x88] sm:$0xff]
    %v1300 = vld [vmem:[#allocation8 + $0x90] sm:$0xff]
    %v1301 = vld [vmem:[#allocation8 + $0x98] sm:$0xff]
    %v1302 = vld [vmem:[#allocation8 + $0xa0] sm:$0xff]
    %v1303 = vld [vmem:[#allocation8 + $0xa8] sm:$0xff]
    %v1304 = vld [vmem:[#allocation8 + $0xb0] sm:$0xff]
    %v1305 = vld [vmem:[#allocation8 + $0xb8] sm:$0xff]
    %v1306 = vld [vmem:[#allocation8 + $0xc0] sm:$0xff]
    %v1307 = vld [vmem:[#allocation8 + $0xc8] sm:$0xff]
    %v1308 = vld [vmem:[#allocation8 + $0xd0] sm:$0xff]
    %v1309 = vld [vmem:[#allocation8 + $0xd8] sm:$0xff]
    %v1310 = vld [vmem:[#allocation8 + $0xe0] sm:$0xff]
    %v1311 = vld [vmem:[#allocation8 + $0xe8] sm:$0xff]
    %v1312 = vld [vmem:[#allocation8 + $0xf0] sm:$0xff]
    %v1313 = vld [vmem:[#allocation8 + $0xf8] sm:$0xff]
    %1314 = vmatpush.msra.mxu0 %v1297
    %1315 = vmatpush.msra.mxu0 %v1296
    %1316 = vmatpush.msra.mxu0 %v1295
    %1317 = vmatpush.msra.mxu0 %v1294
    %1318 = vmatpush.msra.mxu0 %v1293
    %1319 = vmatpush.msra.mxu0 %v1292
    %1320 = vmatpush.msra.mxu0 %v1291
    %1321 = vmatpush.msra.mxu0 %v1290
    %1322 = vmatpush.msra.mxu0 %v1289
    %1323 = vmatpush.msra.mxu0 %v1288
    %1324 = vmatpush.msra.mxu0 %v1287
    %1325 = vmatpush.msra.mxu0 %v1286
    %1326 = vmatpush.msra.mxu0 %v1285
    %1327 = vmatpush.msra.mxu0 %v1284
    %1328 = vmatpush.msra.mxu0 %v1283
    %1329 = vmatpush.msra.mxu0 %v1282
    %1330 = vmatmul.f32.gmra.mxu0 %v1280
    %v1331 = vpop.f32.mrf.mxu0
    %v1332 = vadd.f32 0.0, %v1331
    %1333 = vdwg.mxu0
    %1334 = vmatpush.msra.mxu0 %v1313
    %1335 = vmatpush.msra.mxu0 %v1312
    %1336 = vmatpush.msra.mxu0 %v1311
    %1337 = vmatpush.msra.mxu0 %v1310
    %1338 = vmatpush.msra.mxu0 %v1309
    %1339 = vmatpush.msra.mxu0 %v1308
    %1340 = vmatpush.msra.mxu0 %v1307
    %1341 = vmatpush.msra.mxu0 %v1306
    %1342 = vmatpush.msra.mxu0 %v1305
    %1343 = vmatpush.msra.mxu0 %v1304
    %1344 = vmatpush.msra.mxu0 %v1303
    %1345 = vmatpush.msra.mxu0 %v1302
    %1346 = vmatpush.msra.mxu0 %v1301
    %1347 = vmatpush.msra.mxu0 %v1300
    %1348 = vmatpush.msra.mxu0 %v1299
    %1349 = vmatpush.msra.mxu0 %v1298
    %1350 = vmatmul.f32.gmra.mxu0 %v1281
    %v1351 = vpop.f32.mrf.mxu0
    %v1352 = vadd.f32 0.0, %v1351
    %1353 = vdwg.mxu0
    %v1354 = vadd.f32 %v1052, %v1332
    %v1355 = vadd.f32 %v1055, %v1352
    %v1356 = vtanh.pop %v1354
    %v1357 = vtanh.pop %v1355
    %v1358 = vsub.f32 1.0, %v1234
    %v1359 = vsub.f32 1.0, %v1264
    %v1360 = vmul.f32 %v1358, %v1045
    %v1361 = vmul.f32 %v1359, %v1046
    %v1362 = vmul.f32 %v1234, %v1356
    %v1363 = vmul.f32 %v1264, %v1357
    %v1364 = vadd.f32 %v1360, %v1362
    %v1365 = vadd.f32 %v1361, %v1363
    %s1366 = scalar_lea.vmem [#allocation10], 24
    %1367 = vst [vmem:[%s1366] sm:$0xff] %v1365
    %s1368 = scalar_lea.vmem [#allocation2], 192
    %v1369 = vld [vmem:[%s1368] sm:$0xff]
    %v1370 = vld [vmem:[%s1368 + $0x8] sm:$0xff]
    %v1371 = vld [vmem:[%s1368 + $0x10] sm:$0xff]
    %v1372 = vld [vmem:[%s1368 + $0x18] sm:$0xff]
    %v1373 = vld [vmem:[%s1368 + $0x20] sm:$0xff]
    %v1374 = vld [vmem:[%s1368 + $0x28] sm:$0xff]
    %v1375 = vld [vmem:[#allocation7] sm:$0xff]
    %v1376 = vld [vmem:[#allocation7 + $0x8] sm:$0xff]
    %v1377 = vld [vmem:[#allocation7 + $0x10] sm:$0xff]
    %v1378 = vld [vmem:[#allocation7 + $0x18] sm:$0xff]
    %v1379 = vld [vmem:[#allocation7 + $0x20] sm:$0xff]
    %v1380 = vld [vmem:[#allocation7 + $0x28] sm:$0xff]
    %v1381 = vld [vmem:[#allocation7 + $0x30] sm:$0xff]
    %v1382 = vld [vmem:[#allocation7 + $0x38] sm:$0xff]
    %v1383 = vld [vmem:[#allocation7 + $0x40] sm:$0xff]
    %v1384 = vld [vmem:[#allocation7 + $0x48] sm:$0xff]
    %v1385 = vld [vmem:[#allocation7 + $0x50] sm:$0xff]
    %v1386 = vld [vmem:[#allocation7 + $0x58] sm:$0xff]
    %v1387 = vld [vmem:[#allocation7 + $0x60] sm:$0xff]
    %v1388 = vld [vmem:[#allocation7 + $0x68] sm:$0xff]
    %v1389 = vld [vmem:[#allocation7 + $0x70] sm:$0xff]
    %v1390 = vld [vmem:[#allocation7 + $0x78] sm:$0xff]
    %v1391 = vld [vmem:[#allocation7 + $0x80] sm:$0xff]
    %v1392 = vld [vmem:[#allocation7 + $0x88] sm:$0xff]
    %v1393 = vld [vmem:[#allocation7 + $0x90] sm:$0xff]
    %v1394 = vld [vmem:[#allocation7 + $0x98] sm:$0xff]
    %v1395 = vld [vmem:[#allocation7 + $0xa0] sm:$0xff]
    %v1396 = vld [vmem:[#allocation7 + $0xa8] sm:$0xff]
    %v1397 = vld [vmem:[#allocation7 + $0xb0] sm:$0xff]
    %v1398 = vld [vmem:[#allocation7 + $0xb8] sm:$0xff]
    %v1399 = vld [vmem:[#allocation7 + $0xc0] sm:$0xff]
    %v1400 = vld [vmem:[#allocation7 + $0xc8] sm:$0xff]
    %v1401 = vld [vmem:[#allocation7 + $0xd0] sm:$0xff]
    %v1402 = vld [vmem:[#allocation7 + $0xd8] sm:$0xff]
    %v1403 = vld [vmem:[#allocation7 + $0xe0] sm:$0xff]
    %v1404 = vld [vmem:[#allocation7 + $0xe8] sm:$0xff]
    %v1405 = vld [vmem:[#allocation7 + $0xf0] sm:$0xff]
    %v1406 = vld [vmem:[#allocation7 + $0xf8] sm:$0xff]
    %v1407 = vld [vmem:[#allocation7 + $0x100] sm:$0xff]
    %v1408 = vld [vmem:[#allocation7 + $0x108] sm:$0xff]
    %v1409 = vld [vmem:[#allocation7 + $0x110] sm:$0xff]
    %v1410 = vld [vmem:[#allocation7 + $0x118] sm:$0xff]
    %v1411 = vld [vmem:[#allocation7 + $0x120] sm:$0xff]
    %v1412 = vld [vmem:[#allocation7 + $0x128] sm:$0xff]
    %v1413 = vld [vmem:[#allocation7 + $0x130] sm:$0xff]
    %v1414 = vld [vmem:[#allocation7 + $0x138] sm:$0xff]
    %v1415 = vld [vmem:[#allocation7 + $0x140] sm:$0xff]
    %v1416 = vld [vmem:[#allocation7 + $0x148] sm:$0xff]
    %v1417 = vld [vmem:[#allocation7 + $0x150] sm:$0xff]
    %v1418 = vld [vmem:[#allocation7 + $0x158] sm:$0xff]
    %v1419 = vld [vmem:[#allocation7 + $0x160] sm:$0xff]
    %v1420 = vld [vmem:[#allocation7 + $0x168] sm:$0xff]
    %v1421 = vld [vmem:[#allocation7 + $0x170] sm:$0xff]
    %v1422 = vld [vmem:[#allocation7 + $0x178] sm:$0xff]
    %v1423 = vld [vmem:[#allocation7 + $0x180] sm:$0xff]
    %v1424 = vld [vmem:[#allocation7 + $0x188] sm:$0xff]
    %v1425 = vld [vmem:[#allocation7 + $0x190] sm:$0xff]
    %v1426 = vld [vmem:[#allocation7 + $0x198] sm:$0xff]
    %v1427 = vld [vmem:[#allocation7 + $0x1a0] sm:$0xff]
    %v1428 = vld [vmem:[#allocation7 + $0x1a8] sm:$0xff]
    %v1429 = vld [vmem:[#allocation7 + $0x1b0] sm:$0xff]
    %v1430 = vld [vmem:[#allocation7 + $0x1b8] sm:$0xff]
    %v1431 = vld [vmem:[#allocation7 + $0x1c0] sm:$0xff]
    %v1432 = vld [vmem:[#allocation7 + $0x1c8] sm:$0xff]
    %v1433 = vld [vmem:[#allocation7 + $0x1d0] sm:$0xff]
    %v1434 = vld [vmem:[#allocation7 + $0x1d8] sm:$0xff]
    %v1435 = vld [vmem:[#allocation7 + $0x1e0] sm:$0xff]
    %v1436 = vld [vmem:[#allocation7 + $0x1e8] sm:$0xff]
    %v1437 = vld [vmem:[#allocation7 + $0x1f0] sm:$0xff]
    %v1438 = vld [vmem:[#allocation7 + $0x1f8] sm:$0xff]
    %1439 = vmatpush.msra.mxu0 %v1405
    %1440 = vmatpush.msra.mxu0 %v1403
    %1441 = vmatpush.msra.mxu0 %v1401
    %1442 = vmatpush.msra.mxu0 %v1399
    %1443 = vmatpush.msra.mxu0 %v1397
    %1444 = vmatpush.msra.mxu0 %v1395
    %1445 = vmatpush.msra.mxu0 %v1393
    %1446 = vmatpush.msra.mxu0 %v1391
    %1447 = vmatpush.msra.mxu0 %v1389
    %1448 = vmatpush.msra.mxu0 %v1387
    %1449 = vmatpush.msra.mxu0 %v1385
    %1450 = vmatpush.msra.mxu0 %v1383
    %1451 = vmatpush.msra.mxu0 %v1381
    %1452 = vmatpush.msra.mxu0 %v1379
    %1453 = vmatpush.msra.mxu0 %v1377
    %1454 = vmatpush.msra.mxu0 %v1375
    %1455 = vmatmul.f32.gmra.mxu0 %v1364
    %v1456 = vpop.f32.mrf.mxu0
    %v1457 = vadd.f32 0.0, %v1456
    %1458 = vdwg.mxu0
    %1459 = vmatpush.msra.mxu0 %v1406
    %1460 = vmatpush.msra.mxu0 %v1404
    %1461 = vmatpush.msra.mxu0 %v1402
    %1462 = vmatpush.msra.mxu0 %v1400
    %1463 = vmatpush.msra.mxu0 %v1398
    %1464 = vmatpush.msra.mxu0 %v1396
    %1465 = vmatpush.msra.mxu0 %v1394
    %1466 = vmatpush.msra.mxu0 %v1392
    %1467 = vmatpush.msra.mxu0 %v1390
    %1468 = vmatpush.msra.mxu0 %v1388
    %1469 = vmatpush.msra.mxu0 %v1386
    %1470 = vmatpush.msra.mxu0 %v1384
    %1471 = vmatpush.msra.mxu0 %v1382
    %1472 = vmatpush.msra.mxu0 %v1380
    %1473 = vmatpush.msra.mxu0 %v1378
    %1474 = vmatpush.msra.mxu0 %v1376
    %1475 = vmatmul.f32.gmra.mxu0 %v1364
    %v1476 = vpop.f32.mrf.mxu0
    %v1477 = vadd.f32 0.0, %v1476
    %1478 = vdwg.mxu0
    %1479 = vmatpush.msra.mxu0 %v1437
    %1480 = vmatpush.msra.mxu0 %v1435
    %1481 = vmatpush.msra.mxu0 %v1433
    %1482 = vmatpush.msra.mxu0 %v1431
    %1483 = vmatpush.msra.mxu0 %v1429
    %1484 = vmatpush.msra.mxu0 %v1427
    %1485 = vmatpush.msra.mxu0 %v1425
    %1486 = vmatpush.msra.mxu0 %v1423
    %1487 = vmatpush.msra.mxu0 %v1421
    %1488 = vmatpush.msra.mxu0 %v1419
    %1489 = vmatpush.msra.mxu0 %v1417
    %1490 = vmatpush.msra.mxu0 %v1415
    %1491 = vmatpush.msra.mxu0 %v1413
    %1492 = vmatpush.msra.mxu0 %v1411
    %1493 = vmatpush.msra.mxu0 %v1409
    %1494 = vmatpush.msra.mxu0 %v1407
    %1495 = vmatmul.f32.gmra.mxu0 %v1365
    %v1496 = vpop.f32.mrf.mxu0
    %v1497 = vadd.f32 0.0, %v1496
    %1498 = vdwg.mxu0
    %1499 = vmatpush.msra.mxu0 %v1438
    %1500 = vmatpush.msra.mxu0 %v1436
    %1501 = vmatpush.msra.mxu0 %v1434
    %1502 = vmatpush.msra.mxu0 %v1432
    %1503 = vmatpush.msra.mxu0 %v1430
    %1504 = vmatpush.msra.mxu0 %v1428
    %1505 = vmatpush.msra.mxu0 %v1426
    %1506 = vmatpush.msra.mxu0 %v1424
    %1507 = vmatpush.msra.mxu0 %v1422
    %1508 = vmatpush.msra.mxu0 %v1420
    %1509 = vmatpush.msra.mxu0 %v1418
    %1510 = vmatpush.msra.mxu0 %v1416
    %1511 = vmatpush.msra.mxu0 %v1414
    %1512 = vmatpush.msra.mxu0 %v1412
    %1513 = vmatpush.msra.mxu0 %v1410
    %1514 = vmatpush.msra.mxu0 %v1408
    %1515 = vmatmul.f32.gmra.mxu0 %v1365
    %v1516 = vpop.f32.mrf.mxu0
    %v1517 = vadd.f32 0.0, %v1516
    %1518 = vdwg.mxu0
    %v1519 = vadd.f32 %v1369, %v1457
    %v1520 = vadd.f32 %v1370, %v1477
    %v1521 = vadd.f32 %v1372, %v1497
    %v1522 = vadd.f32 %v1373, %v1517
    %v1523 = vxor.u32 %v1519, 2147483648
    %v1524 = vxor.u32 %v1520, 2147483648
    %v1525 = vxor.u32 %v1521, 2147483648
    %v1526 = vxor.u32 %v1522, 2147483648
    %v1527 = vmul.f32 %v1523, 1.442695
    %v1528 = vpow.pop %v1527
    %v1529 = vmul.f32 %v1524, 1.442695
    %v1530 = vpow.pop %v1529
    %v1531 = vmul.f32 %v1525, 1.442695
    %v1532 = vpow.pop %v1531
    %v1533 = vmul.f32 %v1526, 1.442695
    %v1534 = vpow.pop %v1533
    %v1535 = vadd.f32 %v1528, 1.0
    %v1536 = vadd.f32 %v1530, 1.0
    %v1537 = vadd.f32 %v1532, 1.0
    %v1538 = vadd.f32 %v1534, 1.0
    %v1539 = vrcp.pop %v1535
    %v1540 = vmul.f32 %v1535, %v1539
    %v1541 = vsub.f32 1.0, %v1540
    %v1542 = vmul.f32 %v1539, %v1541
    %v1543 = vadd.f32 %v1539, %v1542
    %vm1544 = vweird.f32 %v1535
    %vm1545 = vweird.f32 %v1539
    %vm1546 = vmor %vm1544, %vm1545
    %v1547 = vsel %vm1546, %v1539, %v1543
    %v1548 = vand.u32 2147483647, %v1535
    %vm1549 = vcmp.eq.f32.partialorder %v1548, 8.507059e+37
    %v1550 = vand.u32 %v1535, 2147483648
    %v1551 = vor.u32 1.1754944e-38, %v1550
    %v1552 = vsel %vm1549, %v1551, %v1547
    %v1553 = vmul.f32 1.0, %v1552
    %v1554 = vrcp.pop %v1536
    %v1555 = vmul.f32 %v1536, %v1554
    %v1556 = vsub.f32 1.0, %v1555
    %v1557 = vmul.f32 %v1554, %v1556
    %v1558 = vadd.f32 %v1554, %v1557
    %vm1559 = vweird.f32 %v1536
    %vm1560 = vweird.f32 %v1554
    %vm1561 = vmor %vm1559, %vm1560
    %v1562 = vsel %vm1561, %v1554, %v1558
    %v1563 = vand.u32 2147483647, %v1536
    %vm1564 = vcmp.eq.f32.partialorder %v1563, 8.507059e+37
    %v1565 = vand.u32 %v1536, 2147483648
    %v1566 = vor.u32 1.1754944e-38, %v1565
    %v1567 = vsel %vm1564, %v1566, %v1562
    %v1568 = vmul.f32 1.0, %v1567
    %v1569 = vrcp.pop %v1537
    %v1570 = vmul.f32 %v1537, %v1569
    %v1571 = vsub.f32 1.0, %v1570
    %v1572 = vmul.f32 %v1569, %v1571
    %v1573 = vadd.f32 %v1569, %v1572
    %vm1574 = vweird.f32 %v1537
    %vm1575 = vweird.f32 %v1569
    %vm1576 = vmor %vm1574, %vm1575
    %v1577 = vsel %vm1576, %v1569, %v1573
    %v1578 = vand.u32 2147483647, %v1537
    %vm1579 = vcmp.eq.f32.partialorder %v1578, 8.507059e+37
    %v1580 = vand.u32 %v1537, 2147483648
    %v1581 = vor.u32 1.1754944e-38, %v1580
    %v1582 = vsel %vm1579, %v1581, %v1577
    %v1583 = vmul.f32 1.0, %v1582
    %v1584 = vrcp.pop %v1538
    %v1585 = vmul.f32 %v1538, %v1584
    %v1586 = vsub.f32 1.0, %v1585
    %v1587 = vmul.f32 %v1584, %v1586
    %v1588 = vadd.f32 %v1584, %v1587
    %vm1589 = vweird.f32 %v1538
    %vm1590 = vweird.f32 %v1584
    %vm1591 = vmor %vm1589, %vm1590
    %v1592 = vsel %vm1591, %v1584, %v1588
    %v1593 = vand.u32 2147483647, %v1538
    %vm1594 = vcmp.eq.f32.partialorder %v1593, 8.507059e+37
    %v1595 = vand.u32 %v1538, 2147483648
    %v1596 = vor.u32 1.1754944e-38, %v1595
    %v1597 = vsel %vm1594, %v1596, %v1592
    %v1598 = vmul.f32 1.0, %v1597
    %v1599 = vmul.f32 %v1568, %v1364
    %v1600 = vmul.f32 %v1598, %v1365
    %v1601 = vld [vmem:[#allocation8] sm:$0xff]
    %v1602 = vld [vmem:[#allocation8 + $0x8] sm:$0xff]
    %v1603 = vld [vmem:[#allocation8 + $0x10] sm:$0xff]
    %v1604 = vld [vmem:[#allocation8 + $0x18] sm:$0xff]
    %v1605 = vld [vmem:[#allocation8 + $0x20] sm:$0xff]
    %v1606 = vld [vmem:[#allocation8 + $0x28] sm:$0xff]
    %v1607 = vld [vmem:[#allocation8 + $0x30] sm:$0xff]
    %v1608 = vld [vmem:[#allocation8 + $0x38] sm:$0xff]
    %v1609 = vld [vmem:[#allocation8 + $0x40] sm:$0xff]
    %v1610 = vld [vmem:[#allocation8 + $0x48] sm:$0xff]
    %v1611 = vld [vmem:[#allocation8 + $0x50] sm:$0xff]
    %v1612 = vld [vmem:[#allocation8 + $0x58] sm:$0xff]
    %v1613 = vld [vmem:[#allocation8 + $0x60] sm:$0xff]
    %v1614 = vld [vmem:[#allocation8 + $0x68] sm:$0xff]
    %v1615 = vld [vmem:[#allocation8 + $0x70] sm:$0xff]
    %v1616 = vld [vmem:[#allocation8 + $0x78] sm:$0xff]
    %v1617 = vld [vmem:[#allocation8 + $0x80] sm:$0xff]
    %v1618 = vld [vmem:[#allocation8 + $0x88] sm:$0xff]
    %v1619 = vld [vmem:[#allocation8 + $0x90] sm:$0xff]
    %v1620 = vld [vmem:[#allocation8 + $0x98] sm:$0xff]
    %v1621 = vld [vmem:[#allocation8 + $0xa0] sm:$0xff]
    %v1622 = vld [vmem:[#allocation8 + $0xa8] sm:$0xff]
    %v1623 = vld [vmem:[#allocation8 + $0xb0] sm:$0xff]
    %v1624 = vld [vmem:[#allocation8 + $0xb8] sm:$0xff]
    %v1625 = vld [vmem:[#allocation8 + $0xc0] sm:$0xff]
    %v1626 = vld [vmem:[#allocation8 + $0xc8] sm:$0xff]
    %v1627 = vld [vmem:[#allocation8 + $0xd0] sm:$0xff]
    %v1628 = vld [vmem:[#allocation8 + $0xd8] sm:$0xff]
    %v1629 = vld [vmem:[#allocation8 + $0xe0] sm:$0xff]
    %v1630 = vld [vmem:[#allocation8 + $0xe8] sm:$0xff]
    %v1631 = vld [vmem:[#allocation8 + $0xf0] sm:$0xff]
    %v1632 = vld [vmem:[#allocation8 + $0xf8] sm:$0xff]
    %1633 = vmatpush.msra.mxu0 %v1616
    %1634 = vmatpush.msra.mxu0 %v1615
    %1635 = vmatpush.msra.mxu0 %v1614
    %1636 = vmatpush.msra.mxu0 %v1613
    %1637 = vmatpush.msra.mxu0 %v1612
    %1638 = vmatpush.msra.mxu0 %v1611
    %1639 = vmatpush.msra.mxu0 %v1610
    %1640 = vmatpush.msra.mxu0 %v1609
    %1641 = vmatpush.msra.mxu0 %v1608
    %1642 = vmatpush.msra.mxu0 %v1607
    %1643 = vmatpush.msra.mxu0 %v1606
    %1644 = vmatpush.msra.mxu0 %v1605
    %1645 = vmatpush.msra.mxu0 %v1604
    %1646 = vmatpush.msra.mxu0 %v1603
    %1647 = vmatpush.msra.mxu0 %v1602
    %1648 = vmatpush.msra.mxu0 %v1601
    %1649 = vmatmul.f32.gmra.mxu0 %v1599
    %v1650 = vpop.f32.mrf.mxu0
    %v1651 = vadd.f32 0.0, %v1650
    %1652 = vdwg.mxu0
    %1653 = vmatpush.msra.mxu0 %v1632
    %1654 = vmatpush.msra.mxu0 %v1631
    %1655 = vmatpush.msra.mxu0 %v1630
    %1656 = vmatpush.msra.mxu0 %v1629
    %1657 = vmatpush.msra.mxu0 %v1628
    %1658 = vmatpush.msra.mxu0 %v1627
    %1659 = vmatpush.msra.mxu0 %v1626
    %1660 = vmatpush.msra.mxu0 %v1625
    %1661 = vmatpush.msra.mxu0 %v1624
    %1662 = vmatpush.msra.mxu0 %v1623
    %1663 = vmatpush.msra.mxu0 %v1622
    %1664 = vmatpush.msra.mxu0 %v1621
    %1665 = vmatpush.msra.mxu0 %v1620
    %1666 = vmatpush.msra.mxu0 %v1619
    %1667 = vmatpush.msra.mxu0 %v1618
    %1668 = vmatpush.msra.mxu0 %v1617
    %1669 = vmatmul.f32.gmra.mxu0 %v1600
    %v1670 = vpop.f32.mrf.mxu0
    %v1671 = vadd.f32 0.0, %v1670
    %1672 = vdwg.mxu0
    %v1673 = vadd.f32 %v1371, %v1651
    %v1674 = vadd.f32 %v1374, %v1671
    %v1675 = vtanh.pop %v1673
    %v1676 = vtanh.pop %v1674
    %v1677 = vsub.f32 1.0, %v1553
    %v1678 = vsub.f32 1.0, %v1583
    %v1679 = vmul.f32 %v1677, %v1364
    %v1680 = vmul.f32 %v1678, %v1365
    %v1681 = vmul.f32 %v1553, %v1675
    %v1682 = vmul.f32 %v1583, %v1676
    %v1683 = vadd.f32 %v1679, %v1681
    %v1684 = vadd.f32 %v1680, %v1682
    %s1685 = scalar_lea.vmem [#allocation10], 32
    %1686 = vst [vmem:[%s1685] sm:$0xff] %v1684
    %s1687 = scalar_lea.vmem [#allocation2], 240
    %v1688 = vld [vmem:[%s1687] sm:$0xff]
    %v1689 = vld [vmem:[%s1687 + $0x8] sm:$0xff]
    %v1690 = vld [vmem:[%s1687 + $0x10] sm:$0xff]
    %v1691 = vld [vmem:[%s1687 + $0x18] sm:$0xff]
    %v1692 = vld [vmem:[%s1687 + $0x20] sm:$0xff]
    %v1693 = vld [vmem:[%s1687 + $0x28] sm:$0xff]
    %v1694 = vld [vmem:[#allocation7] sm:$0xff]
    %v1695 = vld [vmem:[#allocation7 + $0x8] sm:$0xff]
    %v1696 = vld [vmem:[#allocation7 + $0x10] sm:$0xff]
    %v1697 = vld [vmem:[#allocation7 + $0x18] sm:$0xff]
    %v1698 = vld [vmem:[#allocation7 + $0x20] sm:$0xff]
    %v1699 = vld [vmem:[#allocation7 + $0x28] sm:$0xff]
    %v1700 = vld [vmem:[#allocation7 + $0x30] sm:$0xff]
    %v1701 = vld [vmem:[#allocation7 + $0x38] sm:$0xff]
    %v1702 = vld [vmem:[#allocation7 + $0x40] sm:$0xff]
    %v1703 = vld [vmem:[#allocation7 + $0x48] sm:$0xff]
    %v1704 = vld [vmem:[#allocation7 + $0x50] sm:$0xff]
    %v1705 = vld [vmem:[#allocation7 + $0x58] sm:$0xff]
    %v1706 = vld [vmem:[#allocation7 + $0x60] sm:$0xff]
    %v1707 = vld [vmem:[#allocation7 + $0x68] sm:$0xff]
    %v1708 = vld [vmem:[#allocation7 + $0x70] sm:$0xff]
    %v1709 = vld [vmem:[#allocation7 + $0x78] sm:$0xff]
    %v1710 = vld [vmem:[#allocation7 + $0x80] sm:$0xff]
    %v1711 = vld [vmem:[#allocation7 + $0x88] sm:$0xff]
    %v1712 = vld [vmem:[#allocation7 + $0x90] sm:$0xff]
    %v1713 = vld [vmem:[#allocation7 + $0x98] sm:$0xff]
    %v1714 = vld [vmem:[#allocation7 + $0xa0] sm:$0xff]
    %v1715 = vld [vmem:[#allocation7 + $0xa8] sm:$0xff]
    %v1716 = vld [vmem:[#allocation7 + $0xb0] sm:$0xff]
    %v1717 = vld [vmem:[#allocation7 + $0xb8] sm:$0xff]
    %v1718 = vld [vmem:[#allocation7 + $0xc0] sm:$0xff]
    %v1719 = vld [vmem:[#allocation7 + $0xc8] sm:$0xff]
    %v1720 = vld [vmem:[#allocation7 + $0xd0] sm:$0xff]
    %v1721 = vld [vmem:[#allocation7 + $0xd8] sm:$0xff]
    %v1722 = vld [vmem:[#allocation7 + $0xe0] sm:$0xff]
    %v1723 = vld [vmem:[#allocation7 + $0xe8] sm:$0xff]
    %v1724 = vld [vmem:[#allocation7 + $0xf0] sm:$0xff]
    %v1725 = vld [vmem:[#allocation7 + $0xf8] sm:$0xff]
    %v1726 = vld [vmem:[#allocation7 + $0x100] sm:$0xff]
    %v1727 = vld [vmem:[#allocation7 + $0x108] sm:$0xff]
    %v1728 = vld [vmem:[#allocation7 + $0x110] sm:$0xff]
    %v1729 = vld [vmem:[#allocation7 + $0x118] sm:$0xff]
    %v1730 = vld [vmem:[#allocation7 + $0x120] sm:$0xff]
    %v1731 = vld [vmem:[#allocation7 + $0x128] sm:$0xff]
    %v1732 = vld [vmem:[#allocation7 + $0x130] sm:$0xff]
    %v1733 = vld [vmem:[#allocation7 + $0x138] sm:$0xff]
    %v1734 = vld [vmem:[#allocation7 + $0x140] sm:$0xff]
    %v1735 = vld [vmem:[#allocation7 + $0x148] sm:$0xff]
    %v1736 = vld [vmem:[#allocation7 + $0x150] sm:$0xff]
    %v1737 = vld [vmem:[#allocation7 + $0x158] sm:$0xff]
    %v1738 = vld [vmem:[#allocation7 + $0x160] sm:$0xff]
    %v1739 = vld [vmem:[#allocation7 + $0x168] sm:$0xff]
    %v1740 = vld [vmem:[#allocation7 + $0x170] sm:$0xff]
    %v1741 = vld [vmem:[#allocation7 + $0x178] sm:$0xff]
    %v1742 = vld [vmem:[#allocation7 + $0x180] sm:$0xff]
    %v1743 = vld [vmem:[#allocation7 + $0x188] sm:$0xff]
    %v1744 = vld [vmem:[#allocation7 + $0x190] sm:$0xff]
    %v1745 = vld [vmem:[#allocation7 + $0x198] sm:$0xff]
    %v1746 = vld [vmem:[#allocation7 + $0x1a0] sm:$0xff]
    %v1747 = vld [vmem:[#allocation7 + $0x1a8] sm:$0xff]
    %v1748 = vld [vmem:[#allocation7 + $0x1b0] sm:$0xff]
    %v1749 = vld [vmem:[#allocation7 + $0x1b8] sm:$0xff]
    %v1750 = vld [vmem:[#allocation7 + $0x1c0] sm:$0xff]
    %v1751 = vld [vmem:[#allocation7 + $0x1c8] sm:$0xff]
    %v1752 = vld [vmem:[#allocation7 + $0x1d0] sm:$0xff]
    %v1753 = vld [vmem:[#allocation7 + $0x1d8] sm:$0xff]
    %v1754 = vld [vmem:[#allocation7 + $0x1e0] sm:$0xff]
    %v1755 = vld [vmem:[#allocation7 + $0x1e8] sm:$0xff]
    %v1756 = vld [vmem:[#allocation7 + $0x1f0] sm:$0xff]
    %v1757 = vld [vmem:[#allocation7 + $0x1f8] sm:$0xff]
    %1758 = vmatpush.msra.mxu0 %v1724
    %1759 = vmatpush.msra.mxu0 %v1722
    %1760 = vmatpush.msra.mxu0 %v1720
    %1761 = vmatpush.msra.mxu0 %v1718
    %1762 = vmatpush.msra.mxu0 %v1716
    %1763 = vmatpush.msra.mxu0 %v1714
    %1764 = vmatpush.msra.mxu0 %v1712
    %1765 = vmatpush.msra.mxu0 %v1710
    %1766 = vmatpush.msra.mxu0 %v1708
    %1767 = vmatpush.msra.mxu0 %v1706
    %1768 = vmatpush.msra.mxu0 %v1704
    %1769 = vmatpush.msra.mxu0 %v1702
    %1770 = vmatpush.msra.mxu0 %v1700
    %1771 = vmatpush.msra.mxu0 %v1698
    %1772 = vmatpush.msra.mxu0 %v1696
    %1773 = vmatpush.msra.mxu0 %v1694
    %1774 = vmatmul.f32.gmra.mxu0 %v1683
    %v1775 = vpop.f32.mrf.mxu0
    %v1776 = vadd.f32 0.0, %v1775
    %1777 = vdwg.mxu0
    %1778 = vmatpush.msra.mxu0 %v1725
    %1779 = vmatpush.msra.mxu0 %v1723
    %1780 = vmatpush.msra.mxu0 %v1721
    %1781 = vmatpush.msra.mxu0 %v1719
    %1782 = vmatpush.msra.mxu0 %v1717
    %1783 = vmatpush.msra.mxu0 %v1715
    %1784 = vmatpush.msra.mxu0 %v1713
    %1785 = vmatpush.msra.mxu0 %v1711
    %1786 = vmatpush.msra.mxu0 %v1709
    %1787 = vmatpush.msra.mxu0 %v1707
    %1788 = vmatpush.msra.mxu0 %v1705
    %1789 = vmatpush.msra.mxu0 %v1703
    %1790 = vmatpush.msra.mxu0 %v1701
    %1791 = vmatpush.msra.mxu0 %v1699
    %1792 = vmatpush.msra.mxu0 %v1697
    %1793 = vmatpush.msra.mxu0 %v1695
    %1794 = vmatmul.f32.gmra.mxu0 %v1683
    %v1795 = vpop.f32.mrf.mxu0
    %v1796 = vadd.f32 0.0, %v1795
    %1797 = vdwg.mxu0
    %1798 = vmatpush.msra.mxu0 %v1756
    %1799 = vmatpush.msra.mxu0 %v1754
    %1800 = vmatpush.msra.mxu0 %v1752
    %1801 = vmatpush.msra.mxu0 %v1750
    %1802 = vmatpush.msra.mxu0 %v1748
    %1803 = vmatpush.msra.mxu0 %v1746
    %1804 = vmatpush.msra.mxu0 %v1744
    %1805 = vmatpush.msra.mxu0 %v1742
    %1806 = vmatpush.msra.mxu0 %v1740
    %1807 = vmatpush.msra.mxu0 %v1738
    %1808 = vmatpush.msra.mxu0 %v1736
    %1809 = vmatpush.msra.mxu0 %v1734
    %1810 = vmatpush.msra.mxu0 %v1732
    %1811 = vmatpush.msra.mxu0 %v1730
    %1812 = vmatpush.msra.mxu0 %v1728
    %1813 = vmatpush.msra.mxu0 %v1726
    %1814 = vmatmul.f32.gmra.mxu0 %v1684
    %v1815 = vpop.f32.mrf.mxu0
    %v1816 = vadd.f32 0.0, %v1815
    %1817 = vdwg.mxu0
    %1818 = vmatpush.msra.mxu0 %v1757
    %1819 = vmatpush.msra.mxu0 %v1755
    %1820 = vmatpush.msra.mxu0 %v1753
    %1821 = vmatpush.msra.mxu0 %v1751
    %1822 = vmatpush.msra.mxu0 %v1749
    %1823 = vmatpush.msra.mxu0 %v1747
    %1824 = vmatpush.msra.mxu0 %v1745
    %1825 = vmatpush.msra.mxu0 %v1743
    %1826 = vmatpush.msra.mxu0 %v1741
    %1827 = vmatpush.msra.mxu0 %v1739
    %1828 = vmatpush.msra.mxu0 %v1737
    %1829 = vmatpush.msra.mxu0 %v1735
    %1830 = vmatpush.msra.mxu0 %v1733
    %1831 = vmatpush.msra.mxu0 %v1731
    %1832 = vmatpush.msra.mxu0 %v1729
    %1833 = vmatpush.msra.mxu0 %v1727
    %1834 = vmatmul.f32.gmra.mxu0 %v1684
    %v1835 = vpop.f32.mrf.mxu0
    %v1836 = vadd.f32 0.0, %v1835
    %1837 = vdwg.mxu0
    %v1838 = vadd.f32 %v1688, %v1776
    %v1839 = vadd.f32 %v1689, %v1796
    %v1840 = vadd.f32 %v1691, %v1816
    %v1841 = vadd.f32 %v1692, %v1836
    %v1842 = vxor.u32 %v1838, 2147483648
    %v1843 = vxor.u32 %v1839, 2147483648
    %v1844 = vxor.u32 %v1840, 2147483648
    %v1845 = vxor.u32 %v1841, 2147483648
    %v1846 = vmul.f32 %v1842, 1.442695
    %v1847 = vpow.pop %v1846
    %v1848 = vmul.f32 %v1843, 1.442695
    %v1849 = vpow.pop %v1848
    %v1850 = vmul.f32 %v1844, 1.442695
    %v1851 = vpow.pop %v1850
    %v1852 = vmul.f32 %v1845, 1.442695
    %v1853 = vpow.pop %v1852
    %v1854 = vadd.f32 %v1847, 1.0
    %v1855 = vadd.f32 %v1849, 1.0
    %v1856 = vadd.f32 %v1851, 1.0
    %v1857 = vadd.f32 %v1853, 1.0
    %v1858 = vrcp.pop %v1854
    %v1859 = vmul.f32 %v1854, %v1858
    %v1860 = vsub.f32 1.0, %v1859
    %v1861 = vmul.f32 %v1858, %v1860
    %v1862 = vadd.f32 %v1858, %v1861
    %vm1863 = vweird.f32 %v1854
    %vm1864 = vweird.f32 %v1858
    %vm1865 = vmor %vm1863, %vm1864
    %v1866 = vsel %vm1865, %v1858, %v1862
    %v1867 = vand.u32 2147483647, %v1854
    %vm1868 = vcmp.eq.f32.partialorder %v1867, 8.507059e+37
    %v1869 = vand.u32 %v1854, 2147483648
    %v1870 = vor.u32 1.1754944e-38, %v1869
    %v1871 = vsel %vm1868, %v1870, %v1866
    %v1872 = vmul.f32 1.0, %v1871
    %v1873 = vrcp.pop %v1855
    %v1874 = vmul.f32 %v1855, %v1873
    %v1875 = vsub.f32 1.0, %v1874
    %v1876 = vmul.f32 %v1873, %v1875
    %v1877 = vadd.f32 %v1873, %v1876
    %vm1878 = vweird.f32 %v1855
    %vm1879 = vweird.f32 %v1873
    %vm1880 = vmor %vm1878, %vm1879
    %v1881 = vsel %vm1880, %v1873, %v1877
    %v1882 = vand.u32 2147483647, %v1855
    %vm1883 = vcmp.eq.f32.partialorder %v1882, 8.507059e+37
    %v1884 = vand.u32 %v1855, 2147483648
    %v1885 = vor.u32 1.1754944e-38, %v1884
    %v1886 = vsel %vm1883, %v1885, %v1881
    %v1887 = vmul.f32 1.0, %v1886
    %v1888 = vrcp.pop %v1856
    %v1889 = vmul.f32 %v1856, %v1888
    %v1890 = vsub.f32 1.0, %v1889
    %v1891 = vmul.f32 %v1888, %v1890
    %v1892 = vadd.f32 %v1888, %v1891
    %vm1893 = vweird.f32 %v1856
    %vm1894 = vweird.f32 %v1888
    %vm1895 = vmor %vm1893, %vm1894
    %v1896 = vsel %vm1895, %v1888, %v1892
    %v1897 = vand.u32 2147483647, %v1856
    %vm1898 = vcmp.eq.f32.partialorder %v1897, 8.507059e+37
    %v1899 = vand.u32 %v1856, 2147483648
    %v1900 = vor.u32 1.1754944e-38, %v1899
    %v1901 = vsel %vm1898, %v1900, %v1896
    %v1902 = vmul.f32 1.0, %v1901
    %v1903 = vrcp.pop %v1857
    %v1904 = vmul.f32 %v1857, %v1903
    %v1905 = vsub.f32 1.0, %v1904
    %v1906 = vmul.f32 %v1903, %v1905
    %v1907 = vadd.f32 %v1903, %v1906
    %vm1908 = vweird.f32 %v1857
    %vm1909 = vweird.f32 %v1903
    %vm1910 = vmor %vm1908, %vm1909
    %v1911 = vsel %vm1910, %v1903, %v1907
    %v1912 = vand.u32 2147483647, %v1857
    %vm1913 = vcmp.eq.f32.partialorder %v1912, 8.507059e+37
    %v1914 = vand.u32 %v1857, 2147483648
    %v1915 = vor.u32 1.1754944e-38, %v1914
    %v1916 = vsel %vm1913, %v1915, %v1911
    %v1917 = vmul.f32 1.0, %v1916
    %v1918 = vmul.f32 %v1887, %v1683
    %v1919 = vmul.f32 %v1917, %v1684
    %v1920 = vld [vmem:[#allocation8] sm:$0xff]
    %v1921 = vld [vmem:[#allocation8 + $0x8] sm:$0xff]
    %v1922 = vld [vmem:[#allocation8 + $0x10] sm:$0xff]
    %v1923 = vld [vmem:[#allocation8 + $0x18] sm:$0xff]
    %v1924 = vld [vmem:[#allocation8 + $0x20] sm:$0xff]
    %v1925 = vld [vmem:[#allocation8 + $0x28] sm:$0xff]
    %v1926 = vld [vmem:[#allocation8 + $0x30] sm:$0xff]
    %v1927 = vld [vmem:[#allocation8 + $0x38] sm:$0xff]
    %v1928 = vld [vmem:[#allocation8 + $0x40] sm:$0xff]
    %v1929 = vld [vmem:[#allocation8 + $0x48] sm:$0xff]
    %v1930 = vld [vmem:[#allocation8 + $0x50] sm:$0xff]
    %v1931 = vld [vmem:[#allocation8 + $0x58] sm:$0xff]
    %v1932 = vld [vmem:[#allocation8 + $0x60] sm:$0xff]
    %v1933 = vld [vmem:[#allocation8 + $0x68] sm:$0xff]
    %v1934 = vld [vmem:[#allocation8 + $0x70] sm:$0xff]
    %v1935 = vld [vmem:[#allocation8 + $0x78] sm:$0xff]
    %v1936 = vld [vmem:[#allocation8 + $0x80] sm:$0xff]
    %v1937 = vld [vmem:[#allocation8 + $0x88] sm:$0xff]
    %v1938 = vld [vmem:[#allocation8 + $0x90] sm:$0xff]
    %v1939 = vld [vmem:[#allocation8 + $0x98] sm:$0xff]
    %v1940 = vld [vmem:[#allocation8 + $0xa0] sm:$0xff]
    %v1941 = vld [vmem:[#allocation8 + $0xa8] sm:$0xff]
    %v1942 = vld [vmem:[#allocation8 + $0xb0] sm:$0xff]
    %v1943 = vld [vmem:[#allocation8 + $0xb8] sm:$0xff]
    %v1944 = vld [vmem:[#allocation8 + $0xc0] sm:$0xff]
    %v1945 = vld [vmem:[#allocation8 + $0xc8] sm:$0xff]
    %v1946 = vld [vmem:[#allocation8 + $0xd0] sm:$0xff]
    %v1947 = vld [vmem:[#allocation8 + $0xd8] sm:$0xff]
    %v1948 = vld [vmem:[#allocation8 + $0xe0] sm:$0xff]
    %v1949 = vld [vmem:[#allocation8 + $0xe8] sm:$0xff]
    %v1950 = vld [vmem:[#allocation8 + $0xf0] sm:$0xff]
    %v1951 = vld [vmem:[#allocation8 + $0xf8] sm:$0xff]
    %1952 = vmatpush.msra.mxu0 %v1935
    %1953 = vmatpush.msra.mxu0 %v1934
    %1954 = vmatpush.msra.mxu0 %v1933
    %1955 = vmatpush.msra.mxu0 %v1932
    %1956 = vmatpush.msra.mxu0 %v1931
    %1957 = vmatpush.msra.mxu0 %v1930
    %1958 = vmatpush.msra.mxu0 %v1929
    %1959 = vmatpush.msra.mxu0 %v1928
    %1960 = vmatpush.msra.mxu0 %v1927
    %1961 = vmatpush.msra.mxu0 %v1926
    %1962 = vmatpush.msra.mxu0 %v1925
    %1963 = vmatpush.msra.mxu0 %v1924
    %1964 = vmatpush.msra.mxu0 %v1923
    %1965 = vmatpush.msra.mxu0 %v1922
    %1966 = vmatpush.msra.mxu0 %v1921
    %1967 = vmatpush.msra.mxu0 %v1920
    %1968 = vmatmul.f32.gmra.mxu0 %v1918
    %v1969 = vpop.f32.mrf.mxu0
    %v1970 = vadd.f32 0.0, %v1969
    %1971 = vdwg.mxu0
    %1972 = vmatpush.msra.mxu0 %v1951
    %1973 = vmatpush.msra.mxu0 %v1950
    %1974 = vmatpush.msra.mxu0 %v1949
    %1975 = vmatpush.msra.mxu0 %v1948
    %1976 = vmatpush.msra.mxu0 %v1947
    %1977 = vmatpush.msra.mxu0 %v1946
    %1978 = vmatpush.msra.mxu0 %v1945
    %1979 = vmatpush.msra.mxu0 %v1944
    %1980 = vmatpush.msra.mxu0 %v1943
    %1981 = vmatpush.msra.mxu0 %v1942
    %1982 = vmatpush.msra.mxu0 %v1941
    %1983 = vmatpush.msra.mxu0 %v1940
    %1984 = vmatpush.msra.mxu0 %v1939
    %1985 = vmatpush.msra.mxu0 %v1938
    %1986 = vmatpush.msra.mxu0 %v1937
    %1987 = vmatpush.msra.mxu0 %v1936
    %1988 = vmatmul.f32.gmra.mxu0 %v1919
    %v1989 = vpop.f32.mrf.mxu0
    %v1990 = vadd.f32 0.0, %v1989
    %1991 = vdwg.mxu0
    %v1992 = vadd.f32 %v1690, %v1970
    %v1993 = vadd.f32 %v1693, %v1990
    %v1994 = vtanh.pop %v1992
    %v1995 = vtanh.pop %v1993
    %v1996 = vsub.f32 1.0, %v1872
    %v1997 = vsub.f32 1.0, %v1902
    %v1998 = vmul.f32 %v1996, %v1683
    %v1999 = vmul.f32 %v1997, %v1684
    %v2000 = vmul.f32 %v1872, %v1994
    %v2001 = vmul.f32 %v1902, %v1995
    %v2002 = vadd.f32 %v1998, %v2000
    %v2003 = vadd.f32 %v1999, %v2001
    %s2004 = scalar_lea.vmem [#allocation10], 40
    %2005 = vst [vmem:[%s2004] sm:$0xff] %v2003
    %s2006 = scalar_lea.vmem [#allocation2], 288
    %v2007 = vld [vmem:[%s2006] sm:$0xff]
    %v2008 = vld [vmem:[%s2006 + $0x8] sm:$0xff]
    %v2009 = vld [vmem:[%s2006 + $0x10] sm:$0xff]
    %v2010 = vld [vmem:[%s2006 + $0x18] sm:$0xff]
    %v2011 = vld [vmem:[%s2006 + $0x20] sm:$0xff]
    %v2012 = vld [vmem:[%s2006 + $0x28] sm:$0xff]
    %v2013 = vld [vmem:[#allocation7] sm:$0xff]
    %v2014 = vld [vmem:[#allocation7 + $0x8] sm:$0xff]
    %v2015 = vld [vmem:[#allocation7 + $0x10] sm:$0xff]
    %v2016 = vld [vmem:[#allocation7 + $0x18] sm:$0xff]
    %v2017 = vld [vmem:[#allocation7 + $0x20] sm:$0xff]
    %v2018 = vld [vmem:[#allocation7 + $0x28] sm:$0xff]
    %v2019 = vld [vmem:[#allocation7 + $0x30] sm:$0xff]
    %v2020 = vld [vmem:[#allocation7 + $0x38] sm:$0xff]
    %v2021 = vld [vmem:[#allocation7 + $0x40] sm:$0xff]
    %v2022 = vld [vmem:[#allocation7 + $0x48] sm:$0xff]
    %v2023 = vld [vmem:[#allocation7 + $0x50] sm:$0xff]
    %v2024 = vld [vmem:[#allocation7 + $0x58] sm:$0xff]
    %v2025 = vld [vmem:[#allocation7 + $0x60] sm:$0xff]
    %v2026 = vld [vmem:[#allocation7 + $0x68] sm:$0xff]
    %v2027 = vld [vmem:[#allocation7 + $0x70] sm:$0xff]
    %v2028 = vld [vmem:[#allocation7 + $0x78] sm:$0xff]
    %v2029 = vld [vmem:[#allocation7 + $0x80] sm:$0xff]
    %v2030 = vld [vmem:[#allocation7 + $0x88] sm:$0xff]
    %v2031 = vld [vmem:[#allocation7 + $0x90] sm:$0xff]
    %v2032 = vld [vmem:[#allocation7 + $0x98] sm:$0xff]
    %v2033 = vld [vmem:[#allocation7 + $0xa0] sm:$0xff]
    %v2034 = vld [vmem:[#allocation7 + $0xa8] sm:$0xff]
    %v2035 = vld [vmem:[#allocation7 + $0xb0] sm:$0xff]
    %v2036 = vld [vmem:[#allocation7 + $0xb8] sm:$0xff]
    %v2037 = vld [vmem:[#allocation7 + $0xc0] sm:$0xff]
    %v2038 = vld [vmem:[#allocation7 + $0xc8] sm:$0xff]
    %v2039 = vld [vmem:[#allocation7 + $0xd0] sm:$0xff]
    %v2040 = vld [vmem:[#allocation7 + $0xd8] sm:$0xff]
    %v2041 = vld [vmem:[#allocation7 + $0xe0] sm:$0xff]
    %v2042 = vld [vmem:[#allocation7 + $0xe8] sm:$0xff]
    %v2043 = vld [vmem:[#allocation7 + $0xf0] sm:$0xff]
    %v2044 = vld [vmem:[#allocation7 + $0xf8] sm:$0xff]
    %v2045 = vld [vmem:[#allocation7 + $0x100] sm:$0xff]
    %v2046 = vld [vmem:[#allocation7 + $0x108] sm:$0xff]
    %v2047 = vld [vmem:[#allocation7 + $0x110] sm:$0xff]
    %v2048 = vld [vmem:[#allocation7 + $0x118] sm:$0xff]
    %v2049 = vld [vmem:[#allocation7 + $0x120] sm:$0xff]
    %v2050 = vld [vmem:[#allocation7 + $0x128] sm:$0xff]
    %v2051 = vld [vmem:[#allocation7 + $0x130] sm:$0xff]
    %v2052 = vld [vmem:[#allocation7 + $0x138] sm:$0xff]
    %v2053 = vld [vmem:[#allocation7 + $0x140] sm:$0xff]
    %v2054 = vld [vmem:[#allocation7 + $0x148] sm:$0xff]
    %v2055 = vld [vmem:[#allocation7 + $0x150] sm:$0xff]
    %v2056 = vld [vmem:[#allocation7 + $0x158] sm:$0xff]
    %v2057 = vld [vmem:[#allocation7 + $0x160] sm:$0xff]
    %v2058 = vld [vmem:[#allocation7 + $0x168] sm:$0xff]
    %v2059 = vld [vmem:[#allocation7 + $0x170] sm:$0xff]
    %v2060 = vld [vmem:[#allocation7 + $0x178] sm:$0xff]
    %v2061 = vld [vmem:[#allocation7 + $0x180] sm:$0xff]
    %v2062 = vld [vmem:[#allocation7 + $0x188] sm:$0xff]
    %v2063 = vld [vmem:[#allocation7 + $0x190] sm:$0xff]
    %v2064 = vld [vmem:[#allocation7 + $0x198] sm:$0xff]
    %v2065 = vld [vmem:[#allocation7 + $0x1a0] sm:$0xff]
    %v2066 = vld [vmem:[#allocation7 + $0x1a8] sm:$0xff]
    %v2067 = vld [vmem:[#allocation7 + $0x1b0] sm:$0xff]
    %v2068 = vld [vmem:[#allocation7 + $0x1b8] sm:$0xff]
    %v2069 = vld [vmem:[#allocation7 + $0x1c0] sm:$0xff]
    %v2070 = vld [vmem:[#allocation7 + $0x1c8] sm:$0xff]
    %v2071 = vld [vmem:[#allocation7 + $0x1d0] sm:$0xff]
    %v2072 = vld [vmem:[#allocation7 + $0x1d8] sm:$0xff]
    %v2073 = vld [vmem:[#allocation7 + $0x1e0] sm:$0xff]
    %v2074 = vld [vmem:[#allocation7 + $0x1e8] sm:$0xff]
    %v2075 = vld [vmem:[#allocation7 + $0x1f0] sm:$0xff]
    %v2076 = vld [vmem:[#allocation7 + $0x1f8] sm:$0xff]
    %2077 = vmatpush.msra.mxu0 %v2043
    %2078 = vmatpush.msra.mxu0 %v2041
    %2079 = vmatpush.msra.mxu0 %v2039
    %2080 = vmatpush.msra.mxu0 %v2037
    %2081 = vmatpush.msra.mxu0 %v2035
    %2082 = vmatpush.msra.mxu0 %v2033
    %2083 = vmatpush.msra.mxu0 %v2031
    %2084 = vmatpush.msra.mxu0 %v2029
    %2085 = vmatpush.msra.mxu0 %v2027
    %2086 = vmatpush.msra.mxu0 %v2025
    %2087 = vmatpush.msra.mxu0 %v2023
    %2088 = vmatpush.msra.mxu0 %v2021
    %2089 = vmatpush.msra.mxu0 %v2019
    %2090 = vmatpush.msra.mxu0 %v2017
    %2091 = vmatpush.msra.mxu0 %v2015
    %2092 = vmatpush.msra.mxu0 %v2013
    %2093 = vmatmul.f32.gmra.mxu0 %v2002
    %v2094 = vpop.f32.mrf.mxu0
    %v2095 = vadd.f32 0.0, %v2094
    %2096 = vdwg.mxu0
    %2097 = vmatpush.msra.mxu0 %v2044
    %2098 = vmatpush.msra.mxu0 %v2042
    %2099 = vmatpush.msra.mxu0 %v2040
    %2100 = vmatpush.msra.mxu0 %v2038
    %2101 = vmatpush.msra.mxu0 %v2036
    %2102 = vmatpush.msra.mxu0 %v2034
    %2103 = vmatpush.msra.mxu0 %v2032
    %2104 = vmatpush.msra.mxu0 %v2030
    %2105 = vmatpush.msra.mxu0 %v2028
    %2106 = vmatpush.msra.mxu0 %v2026
    %2107 = vmatpush.msra.mxu0 %v2024
    %2108 = vmatpush.msra.mxu0 %v2022
    %2109 = vmatpush.msra.mxu0 %v2020
    %2110 = vmatpush.msra.mxu0 %v2018
    %2111 = vmatpush.msra.mxu0 %v2016
    %2112 = vmatpush.msra.mxu0 %v2014
    %2113 = vmatmul.f32.gmra.mxu0 %v2002
    %v2114 = vpop.f32.mrf.mxu0
    %v2115 = vadd.f32 0.0, %v2114
    %2116 = vdwg.mxu0
    %2117 = vmatpush.msra.mxu0 %v2075
    %2118 = vmatpush.msra.mxu0 %v2073
    %2119 = vmatpush.msra.mxu0 %v2071
    %2120 = vmatpush.msra.mxu0 %v2069
    %2121 = vmatpush.msra.mxu0 %v2067
    %2122 = vmatpush.msra.mxu0 %v2065
    %2123 = vmatpush.msra.mxu0 %v2063
    %2124 = vmatpush.msra.mxu0 %v2061
    %2125 = vmatpush.msra.mxu0 %v2059
    %2126 = vmatpush.msra.mxu0 %v2057
    %2127 = vmatpush.msra.mxu0 %v2055
    %2128 = vmatpush.msra.mxu0 %v2053
    %2129 = vmatpush.msra.mxu0 %v2051
    %2130 = vmatpush.msra.mxu0 %v2049
    %2131 = vmatpush.msra.mxu0 %v2047
    %2132 = vmatpush.msra.mxu0 %v2045
    %2133 = vmatmul.f32.gmra.mxu0 %v2003
    %v2134 = vpop.f32.mrf.mxu0
    %v2135 = vadd.f32 0.0, %v2134
    %2136 = vdwg.mxu0
    %2137 = vmatpush.msra.mxu0 %v2076
    %2138 = vmatpush.msra.mxu0 %v2074
    %2139 = vmatpush.msra.mxu0 %v2072
    %2140 = vmatpush.msra.mxu0 %v2070
    %2141 = vmatpush.msra.mxu0 %v2068
    %2142 = vmatpush.msra.mxu0 %v2066
    %2143 = vmatpush.msra.mxu0 %v2064
    %2144 = vmatpush.msra.mxu0 %v2062
    %2145 = vmatpush.msra.mxu0 %v2060
    %2146 = vmatpush.msra.mxu0 %v2058
    %2147 = vmatpush.msra.mxu0 %v2056
    %2148 = vmatpush.msra.mxu0 %v2054
    %2149 = vmatpush.msra.mxu0 %v2052
    %2150 = vmatpush.msra.mxu0 %v2050
    %2151 = vmatpush.msra.mxu0 %v2048
    %2152 = vmatpush.msra.mxu0 %v2046
    %2153 = vmatmul.f32.gmra.mxu0 %v2003
    %v2154 = vpop.f32.mrf.mxu0
    %v2155 = vadd.f32 0.0, %v2154
    %2156 = vdwg.mxu0
    %v2157 = vadd.f32 %v2007, %v2095
    %v2158 = vadd.f32 %v2008, %v2115
    %v2159 = vadd.f32 %v2010, %v2135
    %v2160 = vadd.f32 %v2011, %v2155
    %v2161 = vxor.u32 %v2157, 2147483648
    %v2162 = vxor.u32 %v2158, 2147483648
    %v2163 = vxor.u32 %v2159, 2147483648
    %v2164 = vxor.u32 %v2160, 2147483648
    %v2165 = vmul.f32 %v2161, 1.442695
    %v2166 = vpow.pop %v2165
    %v2167 = vmul.f32 %v2162, 1.442695
    %v2168 = vpow.pop %v2167
    %v2169 = vmul.f32 %v2163, 1.442695
    %v2170 = vpow.pop %v2169
    %v2171 = vmul.f32 %v2164, 1.442695
    %v2172 = vpow.pop %v2171
    %v2173 = vadd.f32 %v2166, 1.0
    %v2174 = vadd.f32 %v2168, 1.0
    %v2175 = vadd.f32 %v2170, 1.0
    %v2176 = vadd.f32 %v2172, 1.0
    %v2177 = vrcp.pop %v2173
    %v2178 = vmul.f32 %v2173, %v2177
    %v2179 = vsub.f32 1.0, %v2178
    %v2180 = vmul.f32 %v2177, %v2179
    %v2181 = vadd.f32 %v2177, %v2180
    %vm2182 = vweird.f32 %v2173
    %vm2183 = vweird.f32 %v2177
    %vm2184 = vmor %vm2182, %vm2183
    %v2185 = vsel %vm2184, %v2177, %v2181
    %v2186 = vand.u32 2147483647, %v2173
    %vm2187 = vcmp.eq.f32.partialorder %v2186, 8.507059e+37
    %v2188 = vand.u32 %v2173, 2147483648
    %v2189 = vor.u32 1.1754944e-38, %v2188
    %v2190 = vsel %vm2187, %v2189, %v2185
    %v2191 = vmul.f32 1.0, %v2190
    %v2192 = vrcp.pop %v2174
    %v2193 = vmul.f32 %v2174, %v2192
    %v2194 = vsub.f32 1.0, %v2193
    %v2195 = vmul.f32 %v2192, %v2194
    %v2196 = vadd.f32 %v2192, %v2195
    %vm2197 = vweird.f32 %v2174
    %vm2198 = vweird.f32 %v2192
    %vm2199 = vmor %vm2197, %vm2198
    %v2200 = vsel %vm2199, %v2192, %v2196
    %v2201 = vand.u32 2147483647, %v2174
    %vm2202 = vcmp.eq.f32.partialorder %v2201, 8.507059e+37
    %v2203 = vand.u32 %v2174, 2147483648
    %v2204 = vor.u32 1.1754944e-38, %v2203
    %v2205 = vsel %vm2202, %v2204, %v2200
    %v2206 = vmul.f32 1.0, %v2205
    %v2207 = vrcp.pop %v2175
    %v2208 = vmul.f32 %v2175, %v2207
    %v2209 = vsub.f32 1.0, %v2208
    %v2210 = vmul.f32 %v2207, %v2209
    %v2211 = vadd.f32 %v2207, %v2210
    %vm2212 = vweird.f32 %v2175
    %vm2213 = vweird.f32 %v2207
    %vm2214 = vmor %vm2212, %vm2213
    %v2215 = vsel %vm2214, %v2207, %v2211
    %v2216 = vand.u32 2147483647, %v2175
    %vm2217 = vcmp.eq.f32.partialorder %v2216, 8.507059e+37
    %v2218 = vand.u32 %v2175, 2147483648
    %v2219 = vor.u32 1.1754944e-38, %v2218
    %v2220 = vsel %vm2217, %v2219, %v2215
    %v2221 = vmul.f32 1.0, %v2220
    %v2222 = vrcp.pop %v2176
    %v2223 = vmul.f32 %v2176, %v2222
    %v2224 = vsub.f32 1.0, %v2223
    %v2225 = vmul.f32 %v2222, %v2224
    %v2226 = vadd.f32 %v2222, %v2225
    %vm2227 = vweird.f32 %v2176
    %vm2228 = vweird.f32 %v2222
    %vm2229 = vmor %vm2227, %vm2228
    %v2230 = vsel %vm2229, %v2222, %v2226
    %v2231 = vand.u32 2147483647, %v2176
    %vm2232 = vcmp.eq.f32.partialorder %v2231, 8.507059e+37
    %v2233 = vand.u32 %v2176, 2147483648
    %v2234 = vor.u32 1.1754944e-38, %v2233
    %v2235 = vsel %vm2232, %v2234, %v2230
    %v2236 = vmul.f32 1.0, %v2235
    %v2237 = vmul.f32 %v2206, %v2002
    %v2238 = vmul.f32 %v2236, %v2003
    %v2239 = vld [vmem:[#allocation8] sm:$0xff]
    %v2240 = vld [vmem:[#allocation8 + $0x8] sm:$0xff]
    %v2241 = vld [vmem:[#allocation8 + $0x10] sm:$0xff]
    %v2242 = vld [vmem:[#allocation8 + $0x18] sm:$0xff]
    %v2243 = vld [vmem:[#allocation8 + $0x20] sm:$0xff]
    %v2244 = vld [vmem:[#allocation8 + $0x28] sm:$0xff]
    %v2245 = vld [vmem:[#allocation8 + $0x30] sm:$0xff]
    %v2246 = vld [vmem:[#allocation8 + $0x38] sm:$0xff]
    %v2247 = vld [vmem:[#allocation8 + $0x40] sm:$0xff]
    %v2248 = vld [vmem:[#allocation8 + $0x48] sm:$0xff]
    %v2249 = vld [vmem:[#allocation8 + $0x50] sm:$0xff]
    %v2250 = vld [vmem:[#allocation8 + $0x58] sm:$0xff]
    %v2251 = vld [vmem:[#allocation8 + $0x60] sm:$0xff]
    %v2252 = vld [vmem:[#allocation8 + $0x68] sm:$0xff]
    %v2253 = vld [vmem:[#allocation8 + $0x70] sm:$0xff]
    %v2254 = vld [vmem:[#allocation8 + $0x78] sm:$0xff]
    %v2255 = vld [vmem:[#allocation8 + $0x80] sm:$0xff]
    %v2256 = vld [vmem:[#allocation8 + $0x88] sm:$0xff]
    %v2257 = vld [vmem:[#allocation8 + $0x90] sm:$0xff]
    %v2258 = vld [vmem:[#allocation8 + $0x98] sm:$0xff]
    %v2259 = vld [vmem:[#allocation8 + $0xa0] sm:$0xff]
    %v2260 = vld [vmem:[#allocation8 + $0xa8] sm:$0xff]
    %v2261 = vld [vmem:[#allocation8 + $0xb0] sm:$0xff]
    %v2262 = vld [vmem:[#allocation8 + $0xb8] sm:$0xff]
    %v2263 = vld [vmem:[#allocation8 + $0xc0] sm:$0xff]
    %v2264 = vld [vmem:[#allocation8 + $0xc8] sm:$0xff]
    %v2265 = vld [vmem:[#allocation8 + $0xd0] sm:$0xff]
    %v2266 = vld [vmem:[#allocation8 + $0xd8] sm:$0xff]
    %v2267 = vld [vmem:[#allocation8 + $0xe0] sm:$0xff]
    %v2268 = vld [vmem:[#allocation8 + $0xe8] sm:$0xff]
    %v2269 = vld [vmem:[#allocation8 + $0xf0] sm:$0xff]
    %v2270 = vld [vmem:[#allocation8 + $0xf8] sm:$0xff]
    %2271 = vmatpush.msra.mxu0 %v2254
    %2272 = vmatpush.msra.mxu0 %v2253
    %2273 = vmatpush.msra.mxu0 %v2252
    %2274 = vmatpush.msra.mxu0 %v2251
    %2275 = vmatpush.msra.mxu0 %v2250
    %2276 = vmatpush.msra.mxu0 %v2249
    %2277 = vmatpush.msra.mxu0 %v2248
    %2278 = vmatpush.msra.mxu0 %v2247
    %2279 = vmatpush.msra.mxu0 %v2246
    %2280 = vmatpush.msra.mxu0 %v2245
    %2281 = vmatpush.msra.mxu0 %v2244
    %2282 = vmatpush.msra.mxu0 %v2243
    %2283 = vmatpush.msra.mxu0 %v2242
    %2284 = vmatpush.msra.mxu0 %v2241
    %2285 = vmatpush.msra.mxu0 %v2240
    %2286 = vmatpush.msra.mxu0 %v2239
    %2287 = vmatmul.f32.gmra.mxu0 %v2237
    %v2288 = vpop.f32.mrf.mxu0
    %v2289 = vadd.f32 0.0, %v2288
    %2290 = vdwg.mxu0
    %2291 = vmatpush.msra.mxu0 %v2270
    %2292 = vmatpush.msra.mxu0 %v2269
    %2293 = vmatpush.msra.mxu0 %v2268
    %2294 = vmatpush.msra.mxu0 %v2267
    %2295 = vmatpush.msra.mxu0 %v2266
    %2296 = vmatpush.msra.mxu0 %v2265
    %2297 = vmatpush.msra.mxu0 %v2264
    %2298 = vmatpush.msra.mxu0 %v2263
    %2299 = vmatpush.msra.mxu0 %v2262
    %2300 = vmatpush.msra.mxu0 %v2261
    %2301 = vmatpush.msra.mxu0 %v2260
    %2302 = vmatpush.msra.mxu0 %v2259
    %2303 = vmatpush.msra.mxu0 %v2258
    %2304 = vmatpush.msra.mxu0 %v2257
    %2305 = vmatpush.msra.mxu0 %v2256
    %2306 = vmatpush.msra.mxu0 %v2255
    %2307 = vmatmul.f32.gmra.mxu0 %v2238
    %v2308 = vpop.f32.mrf.mxu0
    %v2309 = vadd.f32 0.0, %v2308
    %2310 = vdwg.mxu0
    %v2311 = vadd.f32 %v2009, %v2289
    %v2312 = vadd.f32 %v2012, %v2309
    %v2313 = vtanh.pop %v2311
    %v2314 = vtanh.pop %v2312
    %v2315 = vsub.f32 1.0, %v2191
    %v2316 = vsub.f32 1.0, %v2221
    %v2317 = vmul.f32 %v2315, %v2002
    %v2318 = vmul.f32 %v2316, %v2003
    %v2319 = vmul.f32 %v2191, %v2313
    %v2320 = vmul.f32 %v2221, %v2314
    %v2321 = vadd.f32 %v2317, %v2319
    %v2322 = vadd.f32 %v2318, %v2320
    %s2323 = scalar_lea.vmem [#allocation10], 48
    %2324 = vst [vmem:[%s2323] sm:$0xff] %v2322
    %s2325 = scalar_lea.vmem [#allocation2], 336
    %v2326 = vld [vmem:[%s2325] sm:$0xff]
    %v2327 = vld [vmem:[%s2325 + $0x8] sm:$0xff]
    %v2328 = vld [vmem:[%s2325 + $0x10] sm:$0xff]
    %v2329 = vld [vmem:[%s2325 + $0x18] sm:$0xff]
    %v2330 = vld [vmem:[%s2325 + $0x20] sm:$0xff]
    %v2331 = vld [vmem:[%s2325 + $0x28] sm:$0xff]
    %v2332 = vld [vmem:[#allocation7] sm:$0xff]
    %v2333 = vld [vmem:[#allocation7 + $0x8] sm:$0xff]
    %v2334 = vld [vmem:[#allocation7 + $0x10] sm:$0xff]
    %v2335 = vld [vmem:[#allocation7 + $0x18] sm:$0xff]
    %v2336 = vld [vmem:[#allocation7 + $0x20] sm:$0xff]
    %v2337 = vld [vmem:[#allocation7 + $0x28] sm:$0xff]
    %v2338 = vld [vmem:[#allocation7 + $0x30] sm:$0xff]
    %v2339 = vld [vmem:[#allocation7 + $0x38] sm:$0xff]
    %v2340 = vld [vmem:[#allocation7 + $0x40] sm:$0xff]
    %v2341 = vld [vmem:[#allocation7 + $0x48] sm:$0xff]
    %v2342 = vld [vmem:[#allocation7 + $0x50] sm:$0xff]
    %v2343 = vld [vmem:[#allocation7 + $0x58] sm:$0xff]
    %v2344 = vld [vmem:[#allocation7 + $0x60] sm:$0xff]
    %v2345 = vld [vmem:[#allocation7 + $0x68] sm:$0xff]
    %v2346 = vld [vmem:[#allocation7 + $0x70] sm:$0xff]
    %v2347 = vld [vmem:[#allocation7 + $0x78] sm:$0xff]
    %v2348 = vld [vmem:[#allocation7 + $0x80] sm:$0xff]
    %v2349 = vld [vmem:[#allocation7 + $0x88] sm:$0xff]
    %v2350 = vld [vmem:[#allocation7 + $0x90] sm:$0xff]
    %v2351 = vld [vmem:[#allocation7 + $0x98] sm:$0xff]
    %v2352 = vld [vmem:[#allocation7 + $0xa0] sm:$0xff]
    %v2353 = vld [vmem:[#allocation7 + $0xa8] sm:$0xff]
    %v2354 = vld [vmem:[#allocation7 + $0xb0] sm:$0xff]
    %v2355 = vld [vmem:[#allocation7 + $0xb8] sm:$0xff]
    %v2356 = vld [vmem:[#allocation7 + $0xc0] sm:$0xff]
    %v2357 = vld [vmem:[#allocation7 + $0xc8] sm:$0xff]
    %v2358 = vld [vmem:[#allocation7 + $0xd0] sm:$0xff]
    %v2359 = vld [vmem:[#allocation7 + $0xd8] sm:$0xff]
    %v2360 = vld [vmem:[#allocation7 + $0xe0] sm:$0xff]
    %v2361 = vld [vmem:[#allocation7 + $0xe8] sm:$0xff]
    %v2362 = vld [vmem:[#allocation7 + $0xf0] sm:$0xff]
    %v2363 = vld [vmem:[#allocation7 + $0xf8] sm:$0xff]
    %v2364 = vld [vmem:[#allocation7 + $0x100] sm:$0xff]
    %v2365 = vld [vmem:[#allocation7 + $0x108] sm:$0xff]
    %v2366 = vld [vmem:[#allocation7 + $0x110] sm:$0xff]
    %v2367 = vld [vmem:[#allocation7 + $0x118] sm:$0xff]
    %v2368 = vld [vmem:[#allocation7 + $0x120] sm:$0xff]
    %v2369 = vld [vmem:[#allocation7 + $0x128] sm:$0xff]
    %v2370 = vld [vmem:[#allocation7 + $0x130] sm:$0xff]
    %v2371 = vld [vmem:[#allocation7 + $0x138] sm:$0xff]
    %v2372 = vld [vmem:[#allocation7 + $0x140] sm:$0xff]
    %v2373 = vld [vmem:[#allocation7 + $0x148] sm:$0xff]
    %v2374 = vld [vmem:[#allocation7 + $0x150] sm:$0xff]
    %v2375 = vld [vmem:[#allocation7 + $0x158] sm:$0xff]
    %v2376 = vld [vmem:[#allocation7 + $0x160] sm:$0xff]
    %v2377 = vld [vmem:[#allocation7 + $0x168] sm:$0xff]
    %v2378 = vld [vmem:[#allocation7 + $0x170] sm:$0xff]
    %v2379 = vld [vmem:[#allocation7 + $0x178] sm:$0xff]
    %v2380 = vld [vmem:[#allocation7 + $0x180] sm:$0xff]
    %v2381 = vld [vmem:[#allocation7 + $0x188] sm:$0xff]
    %v2382 = vld [vmem:[#allocation7 + $0x190] sm:$0xff]
    %v2383 = vld [vmem:[#allocation7 + $0x198] sm:$0xff]
    %v2384 = vld [vmem:[#allocation7 + $0x1a0] sm:$0xff]
    %v2385 = vld [vmem:[#allocation7 + $0x1a8] sm:$0xff]
    %v2386 = vld [vmem:[#allocation7 + $0x1b0] sm:$0xff]
    %v2387 = vld [vmem:[#allocation7 + $0x1b8] sm:$0xff]
    %v2388 = vld [vmem:[#allocation7 + $0x1c0] sm:$0xff]
    %v2389 = vld [vmem:[#allocation7 + $0x1c8] sm:$0xff]
    %v2390 = vld [vmem:[#allocation7 + $0x1d0] sm:$0xff]
    %v2391 = vld [vmem:[#allocation7 + $0x1d8] sm:$0xff]
    %v2392 = vld [vmem:[#allocation7 + $0x1e0] sm:$0xff]
    %v2393 = vld [vmem:[#allocation7 + $0x1e8] sm:$0xff]
    %v2394 = vld [vmem:[#allocation7 + $0x1f0] sm:$0xff]
    %v2395 = vld [vmem:[#allocation7 + $0x1f8] sm:$0xff]
    %2396 = vmatpush.msra.mxu0 %v2362
    %2397 = vmatpush.msra.mxu0 %v2360
    %2398 = vmatpush.msra.mxu0 %v2358
    %2399 = vmatpush.msra.mxu0 %v2356
    %2400 = vmatpush.msra.mxu0 %v2354
    %2401 = vmatpush.msra.mxu0 %v2352
    %2402 = vmatpush.msra.mxu0 %v2350
    %2403 = vmatpush.msra.mxu0 %v2348
    %2404 = vmatpush.msra.mxu0 %v2346
    %2405 = vmatpush.msra.mxu0 %v2344
    %2406 = vmatpush.msra.mxu0 %v2342
    %2407 = vmatpush.msra.mxu0 %v2340
    %2408 = vmatpush.msra.mxu0 %v2338
    %2409 = vmatpush.msra.mxu0 %v2336
    %2410 = vmatpush.msra.mxu0 %v2334
    %2411 = vmatpush.msra.mxu0 %v2332
    %2412 = vmatmul.f32.gmra.mxu0 %v2321
    %v2413 = vpop.f32.mrf.mxu0
    %v2414 = vadd.f32 0.0, %v2413
    %2415 = vdwg.mxu0
    %2416 = vmatpush.msra.mxu0 %v2363
    %2417 = vmatpush.msra.mxu0 %v2361
    %2418 = vmatpush.msra.mxu0 %v2359
    %2419 = vmatpush.msra.mxu0 %v2357
    %2420 = vmatpush.msra.mxu0 %v2355
    %2421 = vmatpush.msra.mxu0 %v2353
    %2422 = vmatpush.msra.mxu0 %v2351
    %2423 = vmatpush.msra.mxu0 %v2349
    %2424 = vmatpush.msra.mxu0 %v2347
    %2425 = vmatpush.msra.mxu0 %v2345
    %2426 = vmatpush.msra.mxu0 %v2343
    %2427 = vmatpush.msra.mxu0 %v2341
    %2428 = vmatpush.msra.mxu0 %v2339
    %2429 = vmatpush.msra.mxu0 %v2337
    %2430 = vmatpush.msra.mxu0 %v2335
    %2431 = vmatpush.msra.mxu0 %v2333
    %2432 = vmatmul.f32.gmra.mxu0 %v2321
    %v2433 = vpop.f32.mrf.mxu0
    %v2434 = vadd.f32 0.0, %v2433
    %2435 = vdwg.mxu0
    %2436 = vmatpush.msra.mxu0 %v2394
    %2437 = vmatpush.msra.mxu0 %v2392
    %2438 = vmatpush.msra.mxu0 %v2390
    %2439 = vmatpush.msra.mxu0 %v2388
    %2440 = vmatpush.msra.mxu0 %v2386
    %2441 = vmatpush.msra.mxu0 %v2384
    %2442 = vmatpush.msra.mxu0 %v2382
    %2443 = vmatpush.msra.mxu0 %v2380
    %2444 = vmatpush.msra.mxu0 %v2378
    %2445 = vmatpush.msra.mxu0 %v2376
    %2446 = vmatpush.msra.mxu0 %v2374
    %2447 = vmatpush.msra.mxu0 %v2372
    %2448 = vmatpush.msra.mxu0 %v2370
    %2449 = vmatpush.msra.mxu0 %v2368
    %2450 = vmatpush.msra.mxu0 %v2366
    %2451 = vmatpush.msra.mxu0 %v2364
    %2452 = vmatmul.f32.gmra.mxu0 %v2322
    %v2453 = vpop.f32.mrf.mxu0
    %v2454 = vadd.f32 0.0, %v2453
    %2455 = vdwg.mxu0
    %2456 = vmatpush.msra.mxu0 %v2395
    %2457 = vmatpush.msra.mxu0 %v2393
    %2458 = vmatpush.msra.mxu0 %v2391
    %2459 = vmatpush.msra.mxu0 %v2389
    %2460 = vmatpush.msra.mxu0 %v2387
    %2461 = vmatpush.msra.mxu0 %v2385
    %2462 = vmatpush.msra.mxu0 %v2383
    %2463 = vmatpush.msra.mxu0 %v2381
    %2464 = vmatpush.msra.mxu0 %v2379
    %2465 = vmatpush.msra.mxu0 %v2377
    %2466 = vmatpush.msra.mxu0 %v2375
    %2467 = vmatpush.msra.mxu0 %v2373
    %2468 = vmatpush.msra.mxu0 %v2371
    %2469 = vmatpush.msra.mxu0 %v2369
    %2470 = vmatpush.msra.mxu0 %v2367
    %2471 = vmatpush.msra.mxu0 %v2365
    %2472 = vmatmul.f32.gmra.mxu0 %v2322
    %v2473 = vpop.f32.mrf.mxu0
    %v2474 = vadd.f32 0.0, %v2473
    %2475 = vdwg.mxu0
    %v2476 = vadd.f32 %v2326, %v2414
    %v2477 = vadd.f32 %v2327, %v2434
    %v2478 = vadd.f32 %v2329, %v2454
    %v2479 = vadd.f32 %v2330, %v2474
    %v2480 = vxor.u32 %v2476, 2147483648
    %v2481 = vxor.u32 %v2477, 2147483648
    %v2482 = vxor.u32 %v2478, 2147483648
    %v2483 = vxor.u32 %v2479, 2147483648
    %v2484 = vmul.f32 %v2480, 1.442695
    %v2485 = vpow.pop %v2484
    %v2486 = vmul.f32 %v2481, 1.442695
    %v2487 = vpow.pop %v2486
    %v2488 = vmul.f32 %v2482, 1.442695
    %v2489 = vpow.pop %v2488
    %v2490 = vmul.f32 %v2483, 1.442695
    %v2491 = vpow.pop %v2490
    %v2492 = vadd.f32 %v2485, 1.0
    %v2493 = vadd.f32 %v2487, 1.0
    %v2494 = vadd.f32 %v2489, 1.0
    %v2495 = vadd.f32 %v2491, 1.0
    %v2496 = vrcp.pop %v2492
    %v2497 = vmul.f32 %v2492, %v2496
    %v2498 = vsub.f32 1.0, %v2497
    %v2499 = vmul.f32 %v2496, %v2498
    %v2500 = vadd.f32 %v2496, %v2499
    %vm2501 = vweird.f32 %v2492
    %vm2502 = vweird.f32 %v2496
    %vm2503 = vmor %vm2501, %vm2502
    %v2504 = vsel %vm2503, %v2496, %v2500
    %v2505 = vand.u32 2147483647, %v2492
    %vm2506 = vcmp.eq.f32.partialorder %v2505, 8.507059e+37
    %v2507 = vand.u32 %v2492, 2147483648
    %v2508 = vor.u32 1.1754944e-38, %v2507
    %v2509 = vsel %vm2506, %v2508, %v2504
    %v2510 = vmul.f32 1.0, %v2509
    %v2511 = vrcp.pop %v2493
    %v2512 = vmul.f32 %v2493, %v2511
    %v2513 = vsub.f32 1.0, %v2512
    %v2514 = vmul.f32 %v2511, %v2513
    %v2515 = vadd.f32 %v2511, %v2514
    %vm2516 = vweird.f32 %v2493
    %vm2517 = vweird.f32 %v2511
    %vm2518 = vmor %vm2516, %vm2517
    %v2519 = vsel %vm2518, %v2511, %v2515
    %v2520 = vand.u32 2147483647, %v2493
    %vm2521 = vcmp.eq.f32.partialorder %v2520, 8.507059e+37
    %v2522 = vand.u32 %v2493, 2147483648
    %v2523 = vor.u32 1.1754944e-38, %v2522
    %v2524 = vsel %vm2521, %v2523, %v2519
    %v2525 = vmul.f32 1.0, %v2524
    %v2526 = vrcp.pop %v2494
    %v2527 = vmul.f32 %v2494, %v2526
    %v2528 = vsub.f32 1.0, %v2527
    %v2529 = vmul.f32 %v2526, %v2528
    %v2530 = vadd.f32 %v2526, %v2529
    %vm2531 = vweird.f32 %v2494
    %vm2532 = vweird.f32 %v2526
    %vm2533 = vmor %vm2531, %vm2532
    %v2534 = vsel %vm2533, %v2526, %v2530
    %v2535 = vand.u32 2147483647, %v2494
    %vm2536 = vcmp.eq.f32.partialorder %v2535, 8.507059e+37
    %v2537 = vand.u32 %v2494, 2147483648
    %v2538 = vor.u32 1.1754944e-38, %v2537
    %v2539 = vsel %vm2536, %v2538, %v2534
    %v2540 = vmul.f32 1.0, %v2539
    %v2541 = vrcp.pop %v2495
    %v2542 = vmul.f32 %v2495, %v2541
    %v2543 = vsub.f32 1.0, %v2542
    %v2544 = vmul.f32 %v2541, %v2543
    %v2545 = vadd.f32 %v2541, %v2544
    %vm2546 = vweird.f32 %v2495
    %vm2547 = vweird.f32 %v2541
    %vm2548 = vmor %vm2546, %vm2547
    %v2549 = vsel %vm2548, %v2541, %v2545
    %v2550 = vand.u32 2147483647, %v2495
    %vm2551 = vcmp.eq.f32.partialorder %v2550, 8.507059e+37
    %v2552 = vand.u32 %v2495, 2147483648
    %v2553 = vor.u32 1.1754944e-38, %v2552
    %v2554 = vsel %vm2551, %v2553, %v2549
    %v2555 = vmul.f32 1.0, %v2554
    %v2556 = vmul.f32 %v2525, %v2321
    %v2557 = vmul.f32 %v2555, %v2322
    %v2558 = vld [vmem:[#allocation8] sm:$0xff]
    %v2559 = vld [vmem:[#allocation8 + $0x8] sm:$0xff]
    %v2560 = vld [vmem:[#allocation8 + $0x10] sm:$0xff]
    %v2561 = vld [vmem:[#allocation8 + $0x18] sm:$0xff]
    %v2562 = vld [vmem:[#allocation8 + $0x20] sm:$0xff]
    %v2563 = vld [vmem:[#allocation8 + $0x28] sm:$0xff]
    %v2564 = vld [vmem:[#allocation8 + $0x30] sm:$0xff]
    %v2565 = vld [vmem:[#allocation8 + $0x38] sm:$0xff]
    %v2566 = vld [vmem:[#allocation8 + $0x40] sm:$0xff]
    %v2567 = vld [vmem:[#allocation8 + $0x48] sm:$0xff]
    %v2568 = vld [vmem:[#allocation8 + $0x50] sm:$0xff]
    %v2569 = vld [vmem:[#allocation8 + $0x58] sm:$0xff]
    %v2570 = vld [vmem:[#allocation8 + $0x60] sm:$0xff]
    %v2571 = vld [vmem:[#allocation8 + $0x68] sm:$0xff]
    %v2572 = vld [vmem:[#allocation8 + $0x70] sm:$0xff]
    %v2573 = vld [vmem:[#allocation8 + $0x78] sm:$0xff]
    %v2574 = vld [vmem:[#allocation8 + $0x80] sm:$0xff]
    %v2575 = vld [vmem:[#allocation8 + $0x88] sm:$0xff]
    %v2576 = vld [vmem:[#allocation8 + $0x90] sm:$0xff]
    %v2577 = vld [vmem:[#allocation8 + $0x98] sm:$0xff]
    %v2578 = vld [vmem:[#allocation8 + $0xa0] sm:$0xff]
    %v2579 = vld [vmem:[#allocation8 + $0xa8] sm:$0xff]
    %v2580 = vld [vmem:[#allocation8 + $0xb0] sm:$0xff]
    %v2581 = vld [vmem:[#allocation8 + $0xb8] sm:$0xff]
    %v2582 = vld [vmem:[#allocation8 + $0xc0] sm:$0xff]
    %v2583 = vld [vmem:[#allocation8 + $0xc8] sm:$0xff]
    %v2584 = vld [vmem:[#allocation8 + $0xd0] sm:$0xff]
    %v2585 = vld [vmem:[#allocation8 + $0xd8] sm:$0xff]
    %v2586 = vld [vmem:[#allocation8 + $0xe0] sm:$0xff]
    %v2587 = vld [vmem:[#allocation8 + $0xe8] sm:$0xff]
    %v2588 = vld [vmem:[#allocation8 + $0xf0] sm:$0xff]
    %v2589 = vld [vmem:[#allocation8 + $0xf8] sm:$0xff]
    %2590 = vmatpush.msra.mxu0 %v2573
    %2591 = vmatpush.msra.mxu0 %v2572
    %2592 = vmatpush.msra.mxu0 %v2571
    %2593 = vmatpush.msra.mxu0 %v2570
    %2594 = vmatpush.msra.mxu0 %v2569
    %2595 = vmatpush.msra.mxu0 %v2568
    %2596 = vmatpush.msra.mxu0 %v2567
    %2597 = vmatpush.msra.mxu0 %v2566
    %2598 = vmatpush.msra.mxu0 %v2565
    %2599 = vmatpush.msra.mxu0 %v2564
    %2600 = vmatpush.msra.mxu0 %v2563
    %2601 = vmatpush.msra.mxu0 %v2562
    %2602 = vmatpush.msra.mxu0 %v2561
    %2603 = vmatpush.msra.mxu0 %v2560
    %2604 = vmatpush.msra.mxu0 %v2559
    %2605 = vmatpush.msra.mxu0 %v2558
    %2606 = vmatmul.f32.gmra.mxu0 %v2556
    %v2607 = vpop.f32.mrf.mxu0
    %v2608 = vadd.f32 0.0, %v2607
    %2609 = vdwg.mxu0
    %2610 = vmatpush.msra.mxu0 %v2589
    %2611 = vmatpush.msra.mxu0 %v2588
    %2612 = vmatpush.msra.mxu0 %v2587
    %2613 = vmatpush.msra.mxu0 %v2586
    %2614 = vmatpush.msra.mxu0 %v2585
    %2615 = vmatpush.msra.mxu0 %v2584
    %2616 = vmatpush.msra.mxu0 %v2583
    %2617 = vmatpush.msra.mxu0 %v2582
    %2618 = vmatpush.msra.mxu0 %v2581
    %2619 = vmatpush.msra.mxu0 %v2580
    %2620 = vmatpush.msra.mxu0 %v2579
    %2621 = vmatpush.msra.mxu0 %v2578
    %2622 = vmatpush.msra.mxu0 %v2577
    %2623 = vmatpush.msra.mxu0 %v2576
    %2624 = vmatpush.msra.mxu0 %v2575
    %2625 = vmatpush.msra.mxu0 %v2574
    %2626 = vmatmul.f32.gmra.mxu0 %v2557
    %v2627 = vpop.f32.mrf.mxu0
    %v2628 = vadd.f32 0.0, %v2627
    %2629 = vdwg.mxu0
    %v2630 = vadd.f32 %v2328, %v2608
    %v2631 = vadd.f32 %v2331, %v2628
    %v2632 = vtanh.pop %v2630
    %v2633 = vtanh.pop %v2631
    %v2634 = vsub.f32 1.0, %v2510
    %v2635 = vsub.f32 1.0, %v2540
    %v2636 = vmul.f32 %v2634, %v2321
    %v2637 = vmul.f32 %v2635, %v2322
    %v2638 = vmul.f32 %v2510, %v2632
    %v2639 = vmul.f32 %v2540, %v2633
    %v2640 = vadd.f32 %v2636, %v2638
    %v2641 = vadd.f32 %v2637, %v2639
    %s2642 = scalar_lea.vmem [#allocation10], 56
    %2643 = vst [vmem:[%s2642] sm:$0xff] %v2641
    %2644 = vst [vmem:[#allocation11] sm:$0xff] %v2640
    %2645 = vst [vmem:[#allocation11 + $0x8] sm:$0xff] %v2641
    // Predicated region
    $region38: #{tpu_custom_call.1} parent=1 // pred_check
      _
    $region39: #{tpu_custom_call.1} parent=1 // pred_check_branch
      %2647 = sbr.rel (0) target = $region41
    $region40: #{tpu_custom_call.1} parent=1 // pred_region
      %2649 = vsyncadd [#allocation4], 0
      %s2650 = sshll.u32 [#allocation10], 4
      %s2651 = int_to_ptr.vmem [resolvable:$true] %s2650
      %s2652 = sshll.u32 %s4, 4
      %s2653 = int_to_ptr.hbm [resolvable:$true] %s2652
      %2658 = dma.vmem_to_hbm [thread:$0]  %s2651, 1024, %s2653, [#allocation4], 128, 128, 8
    $region41: #{tpu_custom_call.1} parent=1 // pred_fallthru
      _
    // Predicated region
    $region42: #{tpu_custom_call.1} parent=1 // pred_check
      _
    $region43: #{tpu_custom_call.1} parent=1 // pred_check_branch
      %2660 = sbr.rel (0) target = $region45
    $region44: #{tpu_custom_call.1} parent=1 // pred_region
      %2662 = vsyncadd [#allocation12], 0
      %s2663 = sshll.u32 [#allocation11], 4
      %s2664 = int_to_ptr.vmem [resolvable:$true] %s2663
      %s2665 = sshll.u32 %s5, 4
      %s2666 = int_to_ptr.hbm [resolvable:$true] %s2665
      %2671 = dma.vmem_to_hbm [thread:$0]  %s2664, 256, %s2666, [#allocation12], 128, 128, 8
    $region45: #{tpu_custom_call.1} parent=1 // pred_fallthru
      _
    // Predicated region
    $region46: #{tpu_custom_call.1} parent=1 // pred_check
      _
    $region47: #{tpu_custom_call.1} parent=1 // pred_check_branch
      %2673 = sbr.rel (0) target = $region49
    $region48: #{tpu_custom_call.1} parent=1 // pred_region
      %2675 = dma.done [#allocation4], 1024
    $region49: #{tpu_custom_call.1} parent=1 // pred_fallthru
      _
    // Predicated region
    $region50: #{tpu_custom_call.1} parent=1 // pred_check
      _
    $region51: #{tpu_custom_call.1} parent=1 // pred_check_branch
      %2677 = sbr.rel (0) target = $region53
    $region52: #{tpu_custom_call.1} parent=1 // pred_region
      %2679 = dma.done [#allocation12], 256
    $region53: #{tpu_custom_call.1} parent=1 // pred_fallthru
      _
    %2680 = vsyncpa [#allocation3], 1
    %2681 = vsyncpa [#allocation6], 1
    %2682 = vsyncpa [#allocation9], 1
    %2683 = vsyncpa [#allocation4], 1
    %2684 = vsyncpa [#allocation12], 1

</llo_original>
